<compile_context>
chip_gen: v5e
topology: v5e:2x2
jax: 0.10.0
libtpu: 0.0.40
codegen_flags: <defaults>
</compile_context>

<pallas_src>
import numpy as np
import jax
import jax.numpy as jnp
from jax.experimental import pallas as pl
from jax.experimental.pallas import tpu as pltpu

IMG_EMBED_SHAPE = (32, 3, 3)
IMG_EMBED_SIZE = int(np.prod(IMG_EMBED_SHAPE))      # 288
Z_SIZE = 4
H_SIZES = (64, 64)
OUT_C, OUT_HW = 2, 28                               # DCNN output: (B, 2, 28, 28)
# (H_in, output_padding, Cin, Cout, has_bn) per ConvTranspose2d stage (k=4, s=2, p=1)
DCNN_LAYERS = ((3, 1, 32, 32, True), (7, 0, 32, 32, True), (14, 0, 32, 2, False))


# Packed 1-row vector layout: every entry starts at a 128-lane-aligned offset.
def _vec_layout(names_lens):
    offs, off = {}, 0
    for n, l in names_lens:
        offs[n] = (off, l)
        off += (-(-l // 128)) * 128
    return offs, off


VEC_OFFS, VEC_TOTAL = _vec_layout((
    ("b1", H_SIZES[0]), ("b2", H_SIZES[1]), ("b3", IMG_EMBED_SIZE),
    ("cb1", 7 * 32), ("cb2", 14 * 32), ("cb3", 28 * 2),
    ("ga1", 7 * 32), ("be1", 7 * 32), ("ga2", 14 * 32), ("be2", 14 * 32)))


# ----------------------------- Pallas kernel ------------------------------------
def decoder_kernel(z_ref, xt_ref, rep_ref, mask_ref, gath_ref,
                   w1_ref, w2_ref, w3_ref, vec_ref,
                   g1_ref, eh1_ref, g2_ref, eh2_ref, g3_ref, eh3_ref,
                   pr_ref, pb_ref, ssel_ref, o_ref):
    """Whole Decoder forward fused in one kernel; lane-merged 2-D tiles
    (rows=(b,h), lanes=(w,c)); heavy matmuls in bf16 with f32 accumulation."""
    bsz = z_ref.shape[0]

    def vec(name):
        off, ln = VEC_OFFS[name]
        return vec_ref[:, off:off + ln]

    def dot(a, b):
        return jnp.dot(a, b, preferred_element_type=jnp.float32)

    def lrelu(h):
        return jnp.where(h > 0, h, 0.01 * h)         # nn.LeakyReLU() default slope

    def deconv(x2, g_ref, eh_ref, bias, owc):
        # x2: (B*H, W*Cin) -> logits-layout (B*OH, OW*Cout).
        # One big lane-dense bf16 matmul (kh blocks concatenated along N), then
        # four tiny f32 row-scatter matmuls (eh) summed.
        r = dot(x2.astype(jnp.bfloat16), g_ref[...])  # (B*H, 4*OW*Cout), f32 acc
        acc = dot(eh_ref[0], r[:, 0:owc]) + bias
        for kh in range(1, 4):
            acc = acc + dot(eh_ref[kh], r[:, kh * owc:(kh + 1) * owc])
        return acc

    def lrelu_bn(h, pr, pb, gamma, beta, count):
        # train-mode BatchNorm over (b, oh, ow); channel stats via thin projections.
        h = lrelu(h)
        inv = 1.0 / count
        mean = dot(dot(jnp.sum(h, axis=0, keepdims=True), pr) * inv, pb)
        d = h - mean
        var = dot(dot(jnp.sum(d * d, axis=0, keepdims=True), pr) * inv, pb)
        return d * jax.lax.rsqrt(var + 1e-5) * gamma + beta

    # ---- MLP head (f32): z -> (B, 288), columns pre-permuted to (h, w, c) order ----
    h = lrelu(dot(z_ref[...], w1_ref[...]) + vec("b1"))
    h = lrelu(dot(h, w2_ref[...]) + vec("b2"))
    h3 = dot(h, w3_ref[...]) + vec("b3")                          # (B, 288)
    # (B, 288) -> (B*3, 96): replicate rows per h, mask that row's h-block, gather.
    x2 = dot(dot(rep_ref[...], h3) * mask_ref[...], gath_ref[...])

    # ---- DCNN: ConvT(32->32,op=1)+LReLU+BN, ConvT(32->32)+LReLU+BN, ConvT(32->2)
    h = deconv(x2, g1_ref, eh1_ref, vec("cb1"), 7 * 32)           # (B*7, 7*32)
    h = lrelu_bn(h, pr_ref[0:224, :], pb_ref[:, 0:224],
                 vec("ga1"), vec("be1"), bsz * 49)
    h = deconv(h, g2_ref, eh2_ref, vec("cb2"), 14 * 32)           # (B*14, 14*32)
    h = lrelu_bn(h, pr_ref[...], pb_ref[...],
                 vec("ga2"), vec("be2"), bsz * 196)
    logits = deconv(h, g3_ref, eh3_ref, vec("cb3"), 28 * 2)       # (B*28, 28*2)

    # ---- -BCEWithLogits(reduction='none').sum(dim=1) ----
    t = xt_ref[...]
    bce = (jnp.maximum(logits, 0.0) - logits * t
           + jnp.log(1.0 + jnp.exp(-jnp.abs(logits))))
    row = jnp.sum(bce, axis=1, keepdims=True)                     # (B*28, 1)
    o_ref[...] = -dot(ssel_ref[...], row)                         # (B, 1)


def _full_spec(shape):
    return pl.BlockSpec(shape, lambda i: (0,) * len(shape))


def decoder_forward(params, x, z):
    """params = prepare_decoder_params(...); x: (B, 2, 28, 28) NCHW; z: (B, 2*Z_SIZE)."""
    batch = x.shape[0]
    # target rearranged once into the kernel layout: rows=(b, oh), lanes=(ow, c)
    xt = jnp.transpose(x, (0, 2, 3, 1)).reshape(batch * OUT_HW, OUT_HW * OUT_C)
    args = (z, xt, params["rep"], params["mask"], params["gath"],
            params["w1"], params["w2"], params["w3"], params["vecs"],
            params["g1"], params["eh1"], params["g2"], params["eh2"],
            params["g3"], params["eh3"], params["pr"], params["pb"], params["ssel"])
    out = pl.pallas_call(
        decoder_kernel,
        out_shape=jax.ShapeDtypeStruct((batch, 1), jnp.float32),
        grid=(1,),
        in_specs=[_full_spec(a.shape) for a in args],
        out_specs=_full_spec((batch, 1)),
        compiler_params=pltpu.CompilerParams(
            dimension_semantics=("arbitrary",),
            vmem_limit_bytes=24 * 1024 * 1024),
    )(*args)
    return out.reshape(batch)


# -------------------------- parameter init / prebake -----------------------------
def init_raw_params(key):
    """PyTorch-style uniform fan-in init of the raw Decoder parameters."""
    ks = jax.random.split(key, 6)

    def linear(k, fan_in, fan_out):
        kw, kb = jax.random.split(k)
        bd = 1.0 / np.sqrt(fan_in)
        return (jax.random.uniform(kw, (fan_in, fan_out), jnp.float32, -bd, bd),
                jax.random.uniform(kb, (fan_out,), jnp.float32, -bd, bd))

    def conv_t(k, cin, cout):
        kw, kb = jax.random.split(k)
        bd = 1.0 / np.sqrt(cin * 16)
        return (jax.random.uniform(kw, (cin, cout, 4, 4), jnp.float32, -bd, bd),
                jax.random.uniform(kb, (cout,), jnp.float32, -bd, bd))

    w1, b1 = linear(ks[0], 2 * Z_SIZE, H_SIZES[0])
    w2, b2 = linear(ks[1], H_SIZES[0], H_SIZES[1])
    w3, b3 = linear(ks[2], H_SIZES[1], IMG_EMBED_SIZE)
    cw1, cb1 = conv_t(ks[3], 32, 32)
    cw2, cb2 = conv_t(ks[4], 32, 32)
    cw3, cb3 = conv_t(ks[5], 32, 2)
    bn = [(jnp.ones((32,), jnp.float32), jnp.zeros((32,), jnp.float32)) for _ in range(2)]
    return dict(w1=w1, b1=b1, w2=w2, b2=b2, w3=w3, b3=b3,
                cw1=cw1, cb1=cb1, cw2=cw2, cb2=cb2, cw3=cw3, cb3=cb3, bn=bn)


def prepare_decoder_params(raw, batch_size):
    """Prebake every constant matrix the fused kernel needs (runs once at setup)."""
    B = batch_size
    p = {}

    vecs = np.zeros((1, VEC_TOTAL), np.float32)

    def put(name, v):
        off, ln = VEC_OFFS[name]
        v = np.asarray(v, np.float32).reshape(-1)
        assert v.shape[0] == ln
        vecs[0, off:off + ln] = v

    # MLP: weights (in, out); biases packed; last-layer columns permuted from
    # .view(B,32,3,3) order (c,h,w) to (h,w,c).  Kept f32 (tiny; v5e accuracy).
    p["w1"] = jnp.asarray(raw["w1"])
    p["w2"] = jnp.asarray(raw["w2"])
    c0, hh0, ww0 = IMG_EMBED_SHAPE
    perm = np.array([c * (hh0 * ww0) + h * ww0 + w
                     for h in range(hh0) for w in range(ww0) for c in range(c0)])
    p["w3"] = jnp.asarray(np.asarray(raw["w3"])[:, perm])
    put("b1", raw["b1"])
    put("b2", raw["b2"])
    put("b3", np.asarray(raw["b3"])[perm])

    # (B, 288) -> (B*3, 96) relayout done with tiny matmuls inside the kernel
    blk = ww0 * c0                                   # 96 lanes (w, c) per h-row
    rep = np.zeros((B * hh0, B), np.float32)
    mask = np.zeros((B * hh0, hh0 * blk), np.float32)
    for b in range(B):
        for h in range(hh0):
            rep[b * hh0 + h, b] = 1.0
            mask[b * hh0 + h, h * blk:(h + 1) * blk] = 1.0
    p["rep"] = jnp.asarray(rep)
    p["mask"] = jnp.asarray(mask)
    p["gath"] = jnp.asarray(np.tile(np.eye(blk, dtype=np.float32), (hh0, 1)))

    # ConvTranspose2d stages (k=4, s=2, p=1)
    for idx, (H, op, cin, cout, has_bn) in enumerate(DCNN_LAYERS):
        name = str(idx + 1)
        w = np.asarray(raw["cw" + name])             # (Cin, Cout, 4, 4) PyTorch layout
        b = np.asarray(raw["cb" + name])             # (Cout,)
        Hp = 2 * H + 3 + op                          # zero-inserted + padded extent
        OH = 2 * H + op                              # output spatial extent

        # lane-axis (W) zero-insertion/padding: lane (w, ci) -> lane (2 + 2w, ci)
        ew = np.zeros((Hp, H), np.float32)
        for wi in range(H):
            ew[2 + 2 * wi, wi] = 1.0
        mw = np.kron(ew.T, np.eye(cin, dtype=np.float32))     # (H*cin, Hp*cin)

        # row-axis (H) zero-insertion/padding + kh shift, block-diagonal over batch
        eh = np.zeros((4, B * OH, B * H), np.float32)
        for kh in range(4):
            for bb in range(B):
                for oh in range(OH):
                    q = oh + kh
                    if q >= 2 and (q - 2) % 2 == 0 and (q - 2) // 2 < H:
                        eh[kh, bb * OH + oh, bb * H + (q - 2) // 2] = 1.0
        p["eh" + name] = jnp.asarray(eh)

        # kw shifts folded with the flipped weights (block-Toeplitz expansion)
        g = np.zeros((4, Hp * cin, OH * cout), np.float32)
        for kh in range(4):
            for kw in range(4):
                wsub = w[:, :, 3 - kh, 3 - kw]       # (Cin, Cout)
                for ow in range(OH):
                    wp = ow + kw
                    g[kh, wp * cin:(wp + 1) * cin, ow * cout:(ow + 1) * cout] += wsub
        # Fold lane zero-insertion (mw) into g, concat the 4 kh blocks along N,
        # store in bf16: one lane-dense (W*Cin, 4*OW*Cout) matmul per stage.
        gc = np.concatenate([mw @ g[kh] for kh in range(4)], axis=1)
        p["g" + name] = jnp.asarray(gc, dtype=jnp.bfloat16)

        put("cb" + name, np.tile(b, OH))
        if has_bn:
            gamma, beta = raw["bn"][idx]
            put("ga" + name, np.tile(np.asarray(gamma), OH))
            put("be" + name, np.tile(np.asarray(beta), OH))

    # BN channel reduce / broadcast projections at the stage-2 size; stage 1 uses
    # static slices of the same arrays ( kron(ones(7,1),eye) == first 224 rows ).
    p["pr"] = jnp.asarray(np.kron(np.ones((14, 1), np.float32),
                                  np.eye(32, dtype=np.float32)))   # (448, 32)
    p["pb"] = jnp.asarray(np.kron(np.ones((1, 14), np.float32),
                                  np.eye(32, dtype=np.float32)))   # (32, 448)

    # per-sample selector for the BCE sum
    ssel = np.zeros((B, B * OUT_HW), np.float32)
    for bb in range(B):
        ssel[bb, bb * OUT_HW:(bb + 1) * OUT_HW] = 1.0
    p["ssel"] = jnp.asarray(ssel)
    p["vecs"] = jnp.asarray(vecs)
    return p


# ----------------------- plain-JAX reference (validation only) -------------------
def _conv_transpose_ref(a, w, b, op):
    rhs = jnp.transpose(w, (1, 0, 2, 3))[:, :, ::-1, ::-1]       # (Cout, Cin, 4, 4) flipped
    out = jax.lax.conv_general_dilated(
        a, rhs, window_strides=(1, 1), padding=((2, 2 + op), (2, 2 + op)),
        lhs_dilation=(2, 2), rhs_dilation=(1, 1),
        dimension_numbers=("NCHW", "OIHW", "NCHW"),
        precision=jax.lax.Precision.HIGHEST)
    return out + b.reshape(1, -1, 1, 1)


def _bn_ref(a, gamma, beta):
    mean = jnp.mean(a, axis=(0, 2, 3), keepdims=True)
    var = jnp.mean((a - mean) ** 2, axis=(0, 2, 3), keepdims=True)
    return ((a - mean) / jnp.sqrt(var + 1e-5)) * gamma.reshape(1, -1, 1, 1) \
        + beta.reshape(1, -1, 1, 1)


def decoder_reference(raw, x, z):
    batch = x.shape[0]
    hp = jax.lax.Precision.HIGHEST
    lrelu = lambda v: jnp.where(v > 0, v, 0.01 * v)
    h = lrelu(jnp.dot(z, raw["w1"], precision=hp) + raw["b1"])
    h = lrelu(jnp.dot(h, raw["w2"], precision=hp) + raw["b2"])
    h = jnp.dot(h, raw["w3"], precision=hp) + raw["b3"]
    a = h.reshape(batch, *IMG_EMBED_SHAPE)                        # .view(B, 32, 3, 3)
    a = _bn_ref(lrelu(_conv_transpose_ref(a, raw["cw1"], raw["cb1"], 1)), *raw["bn"][0])
    a = _bn_ref(lrelu(_conv_transpose_ref(a, raw["cw2"], raw["cb2"], 0)), *raw["bn"][1])
    logits = _conv_transpose_ref(a, raw["cw3"], raw["cb3"], 0).reshape(batch, -1)
    t = x.reshape(batch, -1)
    bce = jnp.maximum(logits, 0.0) - logits * t + jnp.log(1.0 + jnp.exp(-jnp.abs(logits)))
    return -jnp.sum(bce, axis=1)


# ------------------------------------ main ---------------------------------------
if __name__ == "__main__":
    key = jax.random.PRNGKey(0)
    kp, kx, kz = jax.random.split(key, 3)
    B = 2
    raw = init_raw_params(kp)
    params = prepare_decoder_params(raw, B)

    x = jax.random.uniform(kx, (B, OUT_C, OUT_HW, OUT_HW), jnp.float32)   # target in [0,1]
    z = jax.random.normal(kz, (B, 2 * Z_SIZE), jnp.float32)

    fwd = jax.jit(decoder_forward)
    out = fwd(params, x, z)
    jax.block_until_ready(out)

    assert out.shape == (B,)
    assert bool(jnp.all(jnp.isfinite(out)))
    ref = decoder_reference(raw, x, z)
    np.testing.assert_allclose(np.asarray(out), np.asarray(ref), rtol=1e-2, atol=1.0)
    print("KERNEL_OK")
</pallas_src>

<mosaic_0001>
module attributes {stable_mosaic.version = 11 : i64} {
  func.func @decoder_kernel(%arg0: i32, %arg1: memref<2x8xf32, #tpu.memory_space<vmem>>, %arg2: memref<56x56xf32, #tpu.memory_space<vmem>>, %arg3: memref<6x2xf32, #tpu.memory_space<vmem>>, %arg4: memref<6x288xf32, #tpu.memory_space<vmem>>, %arg5: memref<288x96xf32, #tpu.memory_space<vmem>>, %arg6: memref<8x64xf32, #tpu.memory_space<vmem>>, %arg7: memref<64x64xf32, #tpu.memory_space<vmem>>, %arg8: memref<64x288xf32, #tpu.memory_space<vmem>>, %arg9: memref<1x3072xf32, #tpu.memory_space<vmem>>, %arg10: memref<96x896xbf16, #tpu.memory_space<vmem>>, %arg11: memref<4x14x6xf32, #tpu.memory_space<vmem>>, %arg12: memref<224x1792xbf16, #tpu.memory_space<vmem>>, %arg13: memref<4x28x14xf32, #tpu.memory_space<vmem>>, %arg14: memref<448x224xbf16, #tpu.memory_space<vmem>>, %arg15: memref<4x56x28xf32, #tpu.memory_space<vmem>>, %arg16: memref<448x32xf32, #tpu.memory_space<vmem>>, %arg17: memref<32x448xf32, #tpu.memory_space<vmem>>, %arg18: memref<2x56xf32, #tpu.memory_space<vmem>>, %arg19: memref<2x1xf32, #tpu.memory_space<vmem>>) attributes {dimension_semantics = [#tpu.dimension_semantics<arbitrary>], iteration_bounds = array<i64: 1>, scalar_prefetch = 0 : i64, scratch_operands = 0 : i64, tpu.core_type = #tpu.core_type<tc>, window_params = [{pipeline_mode = #tpu.pipeline_mode<synchronous>, transform_indices = @transform_0, window_bounds = array<i64: 2, 8>}, {pipeline_mode = #tpu.pipeline_mode<synchronous>, transform_indices = @transform_1, window_bounds = array<i64: 56, 56>}, {pipeline_mode = #tpu.pipeline_mode<synchronous>, transform_indices = @transform_2, window_bounds = array<i64: 6, 2>}, {pipeline_mode = #tpu.pipeline_mode<synchronous>, transform_indices = @transform_3, window_bounds = array<i64: 6, 288>}, {pipeline_mode = #tpu.pipeline_mode<synchronous>, transform_indices = @transform_4, window_bounds = array<i64: 288, 96>}, {pipeline_mode = #tpu.pipeline_mode<synchronous>, transform_indices = @transform_5, window_bounds = array<i64: 8, 64>}, {pipeline_mode = #tpu.pipeline_mode<synchronous>, transform_indices = @transform_6, window_bounds = array<i64: 64, 64>}, {pipeline_mode = #tpu.pipeline_mode<synchronous>, transform_indices = @transform_7, window_bounds = array<i64: 64, 288>}, {pipeline_mode = #tpu.pipeline_mode<synchronous>, transform_indices = @transform_8, window_bounds = array<i64: 1, 3072>}, {pipeline_mode = #tpu.pipeline_mode<synchronous>, transform_indices = @transform_9, window_bounds = array<i64: 96, 896>}, {pipeline_mode = #tpu.pipeline_mode<synchronous>, transform_indices = @transform_10, window_bounds = array<i64: 4, 14, 6>}, {pipeline_mode = #tpu.pipeline_mode<synchronous>, transform_indices = @transform_11, window_bounds = array<i64: 224, 1792>}, {pipeline_mode = #tpu.pipeline_mode<synchronous>, transform_indices = @transform_12, window_bounds = array<i64: 4, 28, 14>}, {pipeline_mode = #tpu.pipeline_mode<synchronous>, transform_indices = @transform_13, window_bounds = array<i64: 448, 224>}, {pipeline_mode = #tpu.pipeline_mode<synchronous>, transform_indices = @transform_14, window_bounds = array<i64: 4, 56, 28>}, {pipeline_mode = #tpu.pipeline_mode<synchronous>, transform_indices = @transform_15, window_bounds = array<i64: 448, 32>}, {pipeline_mode = #tpu.pipeline_mode<synchronous>, transform_indices = @transform_16, window_bounds = array<i64: 32, 448>}, {pipeline_mode = #tpu.pipeline_mode<synchronous>, transform_indices = @transform_17, window_bounds = array<i64: 2, 56>}, {pipeline_mode = #tpu.pipeline_mode<synchronous>, transform_indices = @transform_18, window_bounds = array<i64: 2, 1>}]} {
    %c0 = arith.constant 0 : index
    %c0_0 = arith.constant 0 : index
    %0 = vector.load %arg1[%c0, %c0_0] : memref<2x8xf32, #tpu.memory_space<vmem>>, vector<2x8xf32>
    %c0_1 = arith.constant 0 : index
    %c0_2 = arith.constant 0 : index
    %1 = vector.load %arg6[%c0_1, %c0_2] : memref<8x64xf32, #tpu.memory_space<vmem>>, vector<8x64xf32>
    %cst = arith.constant dense<0.000000e+00> : vector<2x64xf32>
    %2 = tpu.matmul %0, %1, %cst {dimension_numbers = #tpu.dot_dimension_numbers<[1], [0], [0], [1], [0, 0, 1, 1], [], []>} : vector<2x8xf32>, vector<8x64xf32>, vector<2x64xf32> -> vector<2x64xf32>
    %c0_3 = arith.constant 0 : index
    %c0_4 = arith.constant 0 : index
    %3 = vector.load %arg9[%c0_3, %c0_4] : memref<1x3072xf32, #tpu.memory_space<vmem>>, vector<1x64xf32>
    %4 = vector.broadcast %3 : vector<1x64xf32> to vector<2x64xf32>
    %5 = arith.addf %2, %4 : vector<2x64xf32>
    %cst_5 = arith.constant 0.000000e+00 : f32
    %6 = vector.broadcast %cst_5 : f32 to vector<2x64xf32>
    %7 = arith.cmpf ogt, %5, %6 : vector<2x64xf32>
    %cst_6 = arith.constant 0.00999999977 : f32
    %8 = vector.broadcast %cst_6 : f32 to vector<2x64xf32>
    %9 = arith.mulf %8, %5 : vector<2x64xf32>
    %10 = arith.select %7, %5, %9 : vector<2x64xi1>, vector<2x64xf32>
    %c0_7 = arith.constant 0 : index
    %c0_8 = arith.constant 0 : index
    %11 = vector.load %arg7[%c0_7, %c0_8] : memref<64x64xf32, #tpu.memory_space<vmem>>, vector<64x64xf32>
    %cst_9 = arith.constant dense<0.000000e+00> : vector<2x64xf32>
    %12 = tpu.matmul %10, %11, %cst_9 {dimension_numbers = #tpu.dot_dimension_numbers<[1], [0], [0], [1], [0, 0, 1, 1], [], []>} : vector<2x64xf32>, vector<64x64xf32>, vector<2x64xf32> -> vector<2x64xf32>
    %c0_10 = arith.constant 0 : index
    %c128 = arith.constant 128 : index
    %13 = vector.load %arg9[%c0_10, %c128] : memref<1x3072xf32, #tpu.memory_space<vmem>>, vector<1x64xf32>
    %14 = vector.broadcast %13 : vector<1x64xf32> to vector<2x64xf32>
    %15 = arith.addf %12, %14 : vector<2x64xf32>
    %cst_11 = arith.constant 0.000000e+00 : f32
    %16 = vector.broadcast %cst_11 : f32 to vector<2x64xf32>
    %17 = arith.cmpf ogt, %15, %16 : vector<2x64xf32>
    %cst_12 = arith.constant 0.00999999977 : f32
    %18 = vector.broadcast %cst_12 : f32 to vector<2x64xf32>
    %19 = arith.mulf %18, %15 : vector<2x64xf32>
    %20 = arith.select %17, %15, %19 : vector<2x64xi1>, vector<2x64xf32>
    %c0_13 = arith.constant 0 : index
    %c0_14 = arith.constant 0 : index
    %21 = vector.load %arg8[%c0_13, %c0_14] : memref<64x288xf32, #tpu.memory_space<vmem>>, vector<64x288xf32>
    %cst_15 = arith.constant dense<0.000000e+00> : vector<2x288xf32>
    %22 = tpu.matmul %20, %21, %cst_15 {dimension_numbers = #tpu.dot_dimension_numbers<[1], [0], [0], [1], [0, 0, 1, 1], [], []>} : vector<2x64xf32>, vector<64x288xf32>, vector<2x288xf32> -> vector<2x288xf32>
    %c0_16 = arith.constant 0 : index
    %c256 = arith.constant 256 : index
    %23 = vector.load %arg9[%c0_16, %c256] : memref<1x3072xf32, #tpu.memory_space<vmem>>, vector<1x288xf32>
    %24 = vector.broadcast %23 : vector<1x288xf32> to vector<2x288xf32>
    %25 = arith.addf %22, %24 : vector<2x288xf32>
    %c0_17 = arith.constant 0 : index
    %c0_18 = arith.constant 0 : index
    %26 = vector.load %arg3[%c0_17, %c0_18] : memref<6x2xf32, #tpu.memory_space<vmem>>, vector<6x2xf32>
    %cst_19 = arith.constant dense<0.000000e+00> : vector<6x288xf32>
    %27 = tpu.matmul %26, %25, %cst_19 {dimension_numbers = #tpu.dot_dimension_numbers<[1], [0], [0], [1], [0, 0, 1, 1], [], []>} : vector<6x2xf32>, vector<2x288xf32>, vector<6x288xf32> -> vector<6x288xf32>
    %c0_20 = arith.constant 0 : index
    %c0_21 = arith.constant 0 : index
    %28 = vector.load %arg4[%c0_20, %c0_21] : memref<6x288xf32, #tpu.memory_space<vmem>>, vector<6x288xf32>
    %29 = arith.mulf %27, %28 : vector<6x288xf32>
    %c0_22 = arith.constant 0 : index
    %c0_23 = arith.constant 0 : index
    %30 = vector.load %arg5[%c0_22, %c0_23] : memref<288x96xf32, #tpu.memory_space<vmem>>, vector<288x96xf32>
    %cst_24 = arith.constant dense<0.000000e+00> : vector<6x96xf32>
    %31 = tpu.matmul %29, %30, %cst_24 {dimension_numbers = #tpu.dot_dimension_numbers<[1], [0], [0], [1], [0, 0, 1, 1], [], []>} : vector<6x288xf32>, vector<288x96xf32>, vector<6x96xf32> -> vector<6x96xf32>
    %c0_25 = arith.constant 0 : index
    %c640 = arith.constant 640 : index
    %32 = vector.load %arg9[%c0_25, %c640] : memref<1x3072xf32, #tpu.memory_space<vmem>>, vector<1x224xf32>
    %33 = arith.truncf %31 : vector<6x96xf32> to vector<6x96xbf16>
    %c0_26 = arith.constant 0 : index
    %c0_27 = arith.constant 0 : index
    %34 = vector.load %arg10[%c0_26, %c0_27] : memref<96x896xbf16, #tpu.memory_space<vmem>>, vector<96x896xbf16>
    %cst_28 = arith.constant dense<0.000000e+00> : vector<6x896xf32>
    %35 = tpu.matmul %33, %34, %cst_28 {dimension_numbers = #tpu.dot_dimension_numbers<[1], [0], [0], [1], [0, 0, 1, 1], [], []>} : vector<6x96xbf16>, vector<96x896xbf16>, vector<6x896xf32> -> vector<6x896xf32>
    %c0_29 = arith.constant 0 : index
    %c0_30 = arith.constant 0 : index
    %c0_31 = arith.constant 0 : index
    %36 = vector.load %arg11[%c0_29, %c0_30, %c0_31] : memref<4x14x6xf32, #tpu.memory_space<vmem>>, vector<1x14x6xf32>
    %37 = vector.shape_cast %36 : vector<1x14x6xf32> to vector<14x6xf32>
    %38 = vector.extract_strided_slice %35 {offsets = [0, 0], sizes = [6, 224], strides = [1, 1]} : vector<6x896xf32> to vector<6x224xf32>
    %cst_32 = arith.constant dense<0.000000e+00> : vector<14x224xf32>
    %39 = tpu.matmul %37, %38, %cst_32 {dimension_numbers = #tpu.dot_dimension_numbers<[1], [0], [0], [1], [0, 0, 1, 1], [], []>} : vector<14x6xf32>, vector<6x224xf32>, vector<14x224xf32> -> vector<14x224xf32>
    %40 = vector.broadcast %32 : vector<1x224xf32> to vector<14x224xf32>
    %41 = arith.addf %39, %40 : vector<14x224xf32>
    %c1 = arith.constant 1 : index
    %c0_33 = arith.constant 0 : index
    %c0_34 = arith.constant 0 : index
    %42 = vector.load %arg11[%c1, %c0_33, %c0_34] : memref<4x14x6xf32, #tpu.memory_space<vmem>>, vector<1x14x6xf32>
    %43 = vector.shape_cast %42 : vector<1x14x6xf32> to vector<14x6xf32>
    %44 = vector.extract_strided_slice %35 {offsets = [0, 224], sizes = [6, 224], strides = [1, 1]} : vector<6x896xf32> to vector<6x224xf32>
    %cst_35 = arith.constant dense<0.000000e+00> : vector<14x224xf32>
    %45 = tpu.matmul %43, %44, %cst_35 {dimension_numbers = #tpu.dot_dimension_numbers<[1], [0], [0], [1], [0, 0, 1, 1], [], []>} : vector<14x6xf32>, vector<6x224xf32>, vector<14x224xf32> -> vector<14x224xf32>
    %46 = arith.addf %41, %45 : vector<14x224xf32>
    %c2 = arith.constant 2 : index
    %c0_36 = arith.constant 0 : index
    %c0_37 = arith.constant 0 : index
    %47 = vector.load %arg11[%c2, %c0_36, %c0_37] : memref<4x14x6xf32, #tpu.memory_space<vmem>>, vector<1x14x6xf32>
    %48 = vector.shape_cast %47 : vector<1x14x6xf32> to vector<14x6xf32>
    %49 = vector.extract_strided_slice %35 {offsets = [0, 448], sizes = [6, 224], strides = [1, 1]} : vector<6x896xf32> to vector<6x224xf32>
    %cst_38 = arith.constant dense<0.000000e+00> : vector<14x224xf32>
    %50 = tpu.matmul %48, %49, %cst_38 {dimension_numbers = #tpu.dot_dimension_numbers<[1], [0], [0], [1], [0, 0, 1, 1], [], []>} : vector<14x6xf32>, vector<6x224xf32>, vector<14x224xf32> -> vector<14x224xf32>
    %51 = arith.addf %46, %50 : vector<14x224xf32>
    %c3 = arith.constant 3 : index
    %c0_39 = arith.constant 0 : index
    %c0_40 = arith.constant 0 : index
    %52 = vector.load %arg11[%c3, %c0_39, %c0_40] : memref<4x14x6xf32, #tpu.memory_space<vmem>>, vector<1x14x6xf32>
    %53 = vector.shape_cast %52 : vector<1x14x6xf32> to vector<14x6xf32>
    %54 = vector.extract_strided_slice %35 {offsets = [0, 672], sizes = [6, 224], strides = [1, 1]} : vector<6x896xf32> to vector<6x224xf32>
    %cst_41 = arith.constant dense<0.000000e+00> : vector<14x224xf32>
    %55 = tpu.matmul %53, %54, %cst_41 {dimension_numbers = #tpu.dot_dimension_numbers<[1], [0], [0], [1], [0, 0, 1, 1], [], []>} : vector<14x6xf32>, vector<6x224xf32>, vector<14x224xf32> -> vector<14x224xf32>
    %56 = arith.addf %51, %55 : vector<14x224xf32>
    %c0_42 = arith.constant 0 : index
    %c0_43 = arith.constant 0 : index
    %57 = vector.load %arg16[%c0_42, %c0_43] : memref<448x32xf32, #tpu.memory_space<vmem>>, vector<224x32xf32>
    %c0_44 = arith.constant 0 : index
    %c0_45 = arith.constant 0 : index
    %58 = vector.load %arg17[%c0_44, %c0_45] : memref<32x448xf32, #tpu.memory_space<vmem>>, vector<32x224xf32>
    %c0_46 = arith.constant 0 : index
    %c1536 = arith.constant 1536 : index
    %59 = vector.load %arg9[%c0_46, %c1536] : memref<1x3072xf32, #tpu.memory_space<vmem>>, vector<1x224xf32>
    %c0_47 = arith.constant 0 : index
    %c1792 = arith.constant 1792 : index
    %60 = vector.load %arg9[%c0_47, %c1792] : memref<1x3072xf32, #tpu.memory_space<vmem>>, vector<1x224xf32>
    %cst_48 = arith.constant 0.000000e+00 : f32
    %61 = vector.broadcast %cst_48 : f32 to vector<14x224xf32>
    %62 = arith.cmpf ogt, %56, %61 : vector<14x224xf32>
    %cst_49 = arith.constant 0.00999999977 : f32
    %63 = vector.broadcast %cst_49 : f32 to vector<14x224xf32>
    %64 = arith.mulf %63, %56 : vector<14x224xf32>
    %65 = arith.select %62, %56, %64 : vector<14x224xi1>, vector<14x224xf32>
    %cst_50 = arith.constant dense<0.000000e+00> : vector<224xf32>
    %66 = vector.multi_reduction <add>, %65, %cst_50 [0] : vector<14x224xf32> to vector<224xf32>
    %67 = vector.shape_cast %66 : vector<224xf32> to vector<1x224xf32>
    %cst_51 = arith.constant dense<0.000000e+00> : vector<1x32xf32>
    %68 = tpu.matmul %67, %57, %cst_51 {dimension_numbers = #tpu.dot_dimension_numbers<[1], [0], [0], [1], [0, 0, 1, 1], [], []>} : vector<1x224xf32>, vector<224x32xf32>, vector<1x32xf32> -> vector<1x32xf32>
    %cst_52 = arith.constant 0.0102040814 : f32
    %69 = vector.broadcast %cst_52 : f32 to vector<1x32xf32>
    %70 = arith.mulf %68, %69 : vector<1x32xf32>
    %cst_53 = arith.constant dense<0.000000e+00> : vector<1x224xf32>
    %71 = tpu.matmul %70, %58, %cst_53 {dimension_numbers = #tpu.dot_dimension_numbers<[1], [0], [0], [1], [0, 0, 1, 1], [], []>} : vector<1x32xf32>, vector<32x224xf32>, vector<1x224xf32> -> vector<1x224xf32>
    %72 = vector.broadcast %71 : vector<1x224xf32> to vector<14x224xf32>
    %73 = arith.subf %65, %72 : vector<14x224xf32>
    %74 = arith.mulf %73, %73 : vector<14x224xf32>
    %cst_54 = arith.constant dense<0.000000e+00> : vector<224xf32>
    %75 = vector.multi_reduction <add>, %74, %cst_54 [0] : vector<14x224xf32> to vector<224xf32>
    %76 = vector.shape_cast %75 : vector<224xf32> to vector<1x224xf32>
    %cst_55 = arith.constant dense<0.000000e+00> : vector<1x32xf32>
    %77 = tpu.matmul %76, %57, %cst_55 {dimension_numbers = #tpu.dot_dimension_numbers<[1], [0], [0], [1], [0, 0, 1, 1], [], []>} : vector<1x224xf32>, vector<224x32xf32>, vector<1x32xf32> -> vector<1x32xf32>
    %cst_56 = arith.constant 0.0102040814 : f32
    %78 = vector.broadcast %cst_56 : f32 to vector<1x32xf32>
    %79 = arith.mulf %77, %78 : vector<1x32xf32>
    %cst_57 = arith.constant dense<0.000000e+00> : vector<1x224xf32>
    %80 = tpu.matmul %79, %58, %cst_57 {dimension_numbers = #tpu.dot_dimension_numbers<[1], [0], [0], [1], [0, 0, 1, 1], [], []>} : vector<1x32xf32>, vector<32x224xf32>, vector<1x224xf32> -> vector<1x224xf32>
    %cst_58 = arith.constant 9.99999974E-6 : f32
    %81 = vector.broadcast %cst_58 : f32 to vector<1x224xf32>
    %82 = arith.addf %80, %81 : vector<1x224xf32>
    %83 = math.rsqrt %82 : vector<1x224xf32>
    %84 = vector.broadcast %83 : vector<1x224xf32> to vector<14x224xf32>
    %85 = arith.mulf %73, %84 : vector<14x224xf32>
    %86 = vector.broadcast %59 : vector<1x224xf32> to vector<14x224xf32>
    %87 = arith.mulf %85, %86 : vector<14x224xf32>
    %88 = vector.broadcast %60 : vector<1x224xf32> to vector<14x224xf32>
    %89 = arith.addf %87, %88 : vector<14x224xf32>
    %c0_59 = arith.constant 0 : index
    %c896 = arith.constant 896 : index
    %90 = vector.load %arg9[%c0_59, %c896] : memref<1x3072xf32, #tpu.memory_space<vmem>>, vector<1x448xf32>
    %91 = arith.truncf %89 : vector<14x224xf32> to vector<14x224xbf16>
    %c0_60 = arith.constant 0 : index
    %c0_61 = arith.constant 0 : index
    %92 = vector.load %arg12[%c0_60, %c0_61] : memref<224x1792xbf16, #tpu.memory_space<vmem>>, vector<224x1792xbf16>
    %cst_62 = arith.constant dense<0.000000e+00> : vector<14x1792xf32>
    %93 = tpu.matmul %91, %92, %cst_62 {dimension_numbers = #tpu.dot_dimension_numbers<[1], [0], [0], [1], [0, 0, 1, 1], [], []>} : vector<14x224xbf16>, vector<224x1792xbf16>, vector<14x1792xf32> -> vector<14x1792xf32>
    %c0_63 = arith.constant 0 : index
    %c0_64 = arith.constant 0 : index
    %c0_65 = arith.constant 0 : index
    %94 = vector.load %arg13[%c0_63, %c0_64, %c0_65] : memref<4x28x14xf32, #tpu.memory_space<vmem>>, vector<1x28x14xf32>
    %95 = vector.shape_cast %94 : vector<1x28x14xf32> to vector<28x14xf32>
    %96 = vector.extract_strided_slice %93 {offsets = [0, 0], sizes = [14, 448], strides = [1, 1]} : vector<14x1792xf32> to vector<14x448xf32>
    %cst_66 = arith.constant dense<0.000000e+00> : vector<28x448xf32>
    %97 = tpu.matmul %95, %96, %cst_66 {dimension_numbers = #tpu.dot_dimension_numbers<[1], [0], [0], [1], [0, 0, 1, 1], [], []>} : vector<28x14xf32>, vector<14x448xf32>, vector<28x448xf32> -> vector<28x448xf32>
    %98 = vector.broadcast %90 : vector<1x448xf32> to vector<28x448xf32>
    %99 = arith.addf %97, %98 : vector<28x448xf32>
    %c1_67 = arith.constant 1 : index
    %c0_68 = arith.constant 0 : index
    %c0_69 = arith.constant 0 : index
    %100 = vector.load %arg13[%c1_67, %c0_68, %c0_69] : memref<4x28x14xf32, #tpu.memory_space<vmem>>, vector<1x28x14xf32>
    %101 = vector.shape_cast %100 : vector<1x28x14xf32> to vector<28x14xf32>
    %102 = vector.extract_strided_slice %93 {offsets = [0, 448], sizes = [14, 448], strides = [1, 1]} : vector<14x1792xf32> to vector<14x448xf32>
    %cst_70 = arith.constant dense<0.000000e+00> : vector<28x448xf32>
    %103 = tpu.matmul %101, %102, %cst_70 {dimension_numbers = #tpu.dot_dimension_numbers<[1], [0], [0], [1], [0, 0, 1, 1], [], []>} : vector<28x14xf32>, vector<14x448xf32>, vector<28x448xf32> -> vector<28x448xf32>
    %104 = arith.addf %99, %103 : vector<28x448xf32>
    %c2_71 = arith.constant 2 : index
    %c0_72 = arith.constant 0 : index
    %c0_73 = arith.constant 0 : index
    %105 = vector.load %arg13[%c2_71, %c0_72, %c0_73] : memref<4x28x14xf32, #tpu.memory_space<vmem>>, vector<1x28x14xf32>
    %106 = vector.shape_cast %105 : vector<1x28x14xf32> to vector<28x14xf32>
    %107 = vector.extract_strided_slice %93 {offsets = [0, 896], sizes = [14, 448], strides = [1, 1]} : vector<14x1792xf32> to vector<14x448xf32>
    %cst_74 = arith.constant dense<0.000000e+00> : vector<28x448xf32>
    %108 = tpu.matmul %106, %107, %cst_74 {dimension_numbers = #tpu.dot_dimension_numbers<[1], [0], [0], [1], [0, 0, 1, 1], [], []>} : vector<28x14xf32>, vector<14x448xf32>, vector<28x448xf32> -> vector<28x448xf32>
    %109 = arith.addf %104, %108 : vector<28x448xf32>
    %c3_75 = arith.constant 3 : index
    %c0_76 = arith.constant 0 : index
    %c0_77 = arith.constant 0 : index
    %110 = vector.load %arg13[%c3_75, %c0_76, %c0_77] : memref<4x28x14xf32, #tpu.memory_space<vmem>>, vector<1x28x14xf32>
    %111 = vector.shape_cast %110 : vector<1x28x14xf32> to vector<28x14xf32>
    %112 = vector.extract_strided_slice %93 {offsets = [0, 1344], sizes = [14, 448], strides = [1, 1]} : vector<14x1792xf32> to vector<14x448xf32>
    %cst_78 = arith.constant dense<0.000000e+00> : vector<28x448xf32>
    %113 = tpu.matmul %111, %112, %cst_78 {dimension_numbers = #tpu.dot_dimension_numbers<[1], [0], [0], [1], [0, 0, 1, 1], [], []>} : vector<28x14xf32>, vector<14x448xf32>, vector<28x448xf32> -> vector<28x448xf32>
    %114 = arith.addf %109, %113 : vector<28x448xf32>
    %c0_79 = arith.constant 0 : index
    %c0_80 = arith.constant 0 : index
    %115 = vector.load %arg16[%c0_79, %c0_80] : memref<448x32xf32, #tpu.memory_space<vmem>>, vector<448x32xf32>
    %c0_81 = arith.constant 0 : index
    %c0_82 = arith.constant 0 : index
    %116 = vector.load %arg17[%c0_81, %c0_82] : memref<32x448xf32, #tpu.memory_space<vmem>>, vector<32x448xf32>
    %c0_83 = arith.constant 0 : index
    %c2048 = arith.constant 2048 : index
    %117 = vector.load %arg9[%c0_83, %c2048] : memref<1x3072xf32, #tpu.memory_space<vmem>>, vector<1x448xf32>
    %c0_84 = arith.constant 0 : index
    %c2560 = arith.constant 2560 : index
    %118 = vector.load %arg9[%c0_84, %c2560] : memref<1x3072xf32, #tpu.memory_space<vmem>>, vector<1x448xf32>
    %cst_85 = arith.constant 0.000000e+00 : f32
    %119 = vector.broadcast %cst_85 : f32 to vector<28x448xf32>
    %120 = arith.cmpf ogt, %114, %119 : vector<28x448xf32>
    %cst_86 = arith.constant 0.00999999977 : f32
    %121 = vector.broadcast %cst_86 : f32 to vector<28x448xf32>
    %122 = arith.mulf %121, %114 : vector<28x448xf32>
    %123 = arith.select %120, %114, %122 : vector<28x448xi1>, vector<28x448xf32>
    %cst_87 = arith.constant dense<0.000000e+00> : vector<448xf32>
    %124 = vector.multi_reduction <add>, %123, %cst_87 [0] : vector<28x448xf32> to vector<448xf32>
    %125 = vector.shape_cast %124 : vector<448xf32> to vector<1x448xf32>
    %cst_88 = arith.constant dense<0.000000e+00> : vector<1x32xf32>
    %126 = tpu.matmul %125, %115, %cst_88 {dimension_numbers = #tpu.dot_dimension_numbers<[1], [0], [0], [1], [0, 0, 1, 1], [], []>} : vector<1x448xf32>, vector<448x32xf32>, vector<1x32xf32> -> vector<1x32xf32>
    %cst_89 = arith.constant 0.00255102036 : f32
    %127 = vector.broadcast %cst_89 : f32 to vector<1x32xf32>
    %128 = arith.mulf %126, %127 : vector<1x32xf32>
    %cst_90 = arith.constant dense<0.000000e+00> : vector<1x448xf32>
    %129 = tpu.matmul %128, %116, %cst_90 {dimension_numbers = #tpu.dot_dimension_numbers<[1], [0], [0], [1], [0, 0, 1, 1], [], []>} : vector<1x32xf32>, vector<32x448xf32>, vector<1x448xf32> -> vector<1x448xf32>
    %130 = vector.broadcast %129 : vector<1x448xf32> to vector<28x448xf32>
    %131 = arith.subf %123, %130 : vector<28x448xf32>
    %132 = arith.mulf %131, %131 : vector<28x448xf32>
    %cst_91 = arith.constant dense<0.000000e+00> : vector<448xf32>
    %133 = vector.multi_reduction <add>, %132, %cst_91 [0] : vector<28x448xf32> to vector<448xf32>
    %134 = vector.shape_cast %133 : vector<448xf32> to vector<1x448xf32>
    %cst_92 = arith.constant dense<0.000000e+00> : vector<1x32xf32>
    %135 = tpu.matmul %134, %115, %cst_92 {dimension_numbers = #tpu.dot_dimension_numbers<[1], [0], [0], [1], [0, 0, 1, 1], [], []>} : vector<1x448xf32>, vector<448x32xf32>, vector<1x32xf32> -> vector<1x32xf32>
    %cst_93 = arith.constant 0.00255102036 : f32
    %136 = vector.broadcast %cst_93 : f32 to vector<1x32xf32>
    %137 = arith.mulf %135, %136 : vector<1x32xf32>
    %cst_94 = arith.constant dense<0.000000e+00> : vector<1x448xf32>
    %138 = tpu.matmul %137, %116, %cst_94 {dimension_numbers = #tpu.dot_dimension_numbers<[1], [0], [0], [1], [0, 0, 1, 1], [], []>} : vector<1x32xf32>, vector<32x448xf32>, vector<1x448xf32> -> vector<1x448xf32>
    %cst_95 = arith.constant 9.99999974E-6 : f32
    %139 = vector.broadcast %cst_95 : f32 to vector<1x448xf32>
    %140 = arith.addf %138, %139 : vector<1x448xf32>
    %141 = math.rsqrt %140 : vector<1x448xf32>
    %142 = vector.broadcast %141 : vector<1x448xf32> to vector<28x448xf32>
    %143 = arith.mulf %131, %142 : vector<28x448xf32>
    %144 = vector.broadcast %117 : vector<1x448xf32> to vector<28x448xf32>
    %145 = arith.mulf %143, %144 : vector<28x448xf32>
    %146 = vector.broadcast %118 : vector<1x448xf32> to vector<28x448xf32>
    %147 = arith.addf %145, %146 : vector<28x448xf32>
    %c0_96 = arith.constant 0 : index
    %c1408 = arith.constant 1408 : index
    %148 = vector.load %arg9[%c0_96, %c1408] : memref<1x3072xf32, #tpu.memory_space<vmem>>, vector<1x56xf32>
    %149 = arith.truncf %147 : vector<28x448xf32> to vector<28x448xbf16>
    %c0_97 = arith.constant 0 : index
    %c0_98 = arith.constant 0 : index
    %150 = vector.load %arg14[%c0_97, %c0_98] : memref<448x224xbf16, #tpu.memory_space<vmem>>, vector<448x224xbf16>
    %cst_99 = arith.constant dense<0.000000e+00> : vector<28x224xf32>
    %151 = tpu.matmul %149, %150, %cst_99 {dimension_numbers = #tpu.dot_dimension_numbers<[1], [0], [0], [1], [0, 0, 1, 1], [], []>} : vector<28x448xbf16>, vector<448x224xbf16>, vector<28x224xf32> -> vector<28x224xf32>
    %c0_100 = arith.constant 0 : index
    %c0_101 = arith.constant 0 : index
    %c0_102 = arith.constant 0 : index
    %152 = vector.load %arg15[%c0_100, %c0_101, %c0_102] : memref<4x56x28xf32, #tpu.memory_space<vmem>>, vector<1x56x28xf32>
    %153 = vector.shape_cast %152 : vector<1x56x28xf32> to vector<56x28xf32>
    %154 = vector.extract_strided_slice %151 {offsets = [0, 0], sizes = [28, 56], strides = [1, 1]} : vector<28x224xf32> to vector<28x56xf32>
    %cst_103 = arith.constant dense<0.000000e+00> : vector<56x56xf32>
    %155 = tpu.matmul %153, %154, %cst_103 {dimension_numbers = #tpu.dot_dimension_numbers<[1], [0], [0], [1], [0, 0, 1, 1], [], []>} : vector<56x28xf32>, vector<28x56xf32>, vector<56x56xf32> -> vector<56x56xf32>
    %156 = vector.broadcast %148 : vector<1x56xf32> to vector<56x56xf32>
    %157 = arith.addf %155, %156 : vector<56x56xf32>
    %c1_104 = arith.constant 1 : index
    %c0_105 = arith.constant 0 : index
    %c0_106 = arith.constant 0 : index
    %158 = vector.load %arg15[%c1_104, %c0_105, %c0_106] : memref<4x56x28xf32, #tpu.memory_space<vmem>>, vector<1x56x28xf32>
    %159 = vector.shape_cast %158 : vector<1x56x28xf32> to vector<56x28xf32>
    %160 = vector.extract_strided_slice %151 {offsets = [0, 56], sizes = [28, 56], strides = [1, 1]} : vector<28x224xf32> to vector<28x56xf32>
    %cst_107 = arith.constant dense<0.000000e+00> : vector<56x56xf32>
    %161 = tpu.matmul %159, %160, %cst_107 {dimension_numbers = #tpu.dot_dimension_numbers<[1], [0], [0], [1], [0, 0, 1, 1], [], []>} : vector<56x28xf32>, vector<28x56xf32>, vector<56x56xf32> -> vector<56x56xf32>
    %162 = arith.addf %157, %161 : vector<56x56xf32>
    %c2_108 = arith.constant 2 : index
    %c0_109 = arith.constant 0 : index
    %c0_110 = arith.constant 0 : index
    %163 = vector.load %arg15[%c2_108, %c0_109, %c0_110] : memref<4x56x28xf32, #tpu.memory_space<vmem>>, vector<1x56x28xf32>
    %164 = vector.shape_cast %163 : vector<1x56x28xf32> to vector<56x28xf32>
    %165 = vector.extract_strided_slice %151 {offsets = [0, 112], sizes = [28, 56], strides = [1, 1]} : vector<28x224xf32> to vector<28x56xf32>
    %cst_111 = arith.constant dense<0.000000e+00> : vector<56x56xf32>
    %166 = tpu.matmul %164, %165, %cst_111 {dimension_numbers = #tpu.dot_dimension_numbers<[1], [0], [0], [1], [0, 0, 1, 1], [], []>} : vector<56x28xf32>, vector<28x56xf32>, vector<56x56xf32> -> vector<56x56xf32>
    %167 = arith.addf %162, %166 : vector<56x56xf32>
    %c3_112 = arith.constant 3 : index
    %c0_113 = arith.constant 0 : index
    %c0_114 = arith.constant 0 : index
    %168 = vector.load %arg15[%c3_112, %c0_113, %c0_114] : memref<4x56x28xf32, #tpu.memory_space<vmem>>, vector<1x56x28xf32>
    %169 = vector.shape_cast %168 : vector<1x56x28xf32> to vector<56x28xf32>
    %170 = vector.extract_strided_slice %151 {offsets = [0, 168], sizes = [28, 56], strides = [1, 1]} : vector<28x224xf32> to vector<28x56xf32>
    %cst_115 = arith.constant dense<0.000000e+00> : vector<56x56xf32>
    %171 = tpu.matmul %169, %170, %cst_115 {dimension_numbers = #tpu.dot_dimension_numbers<[1], [0], [0], [1], [0, 0, 1, 1], [], []>} : vector<56x28xf32>, vector<28x56xf32>, vector<56x56xf32> -> vector<56x56xf32>
    %172 = arith.addf %167, %171 : vector<56x56xf32>
    %c0_116 = arith.constant 0 : index
    %c0_117 = arith.constant 0 : index
    %173 = vector.load %arg2[%c0_116, %c0_117] : memref<56x56xf32, #tpu.memory_space<vmem>>, vector<56x56xf32>
    %cst_118 = arith.constant 0.000000e+00 : f32
    %174 = vector.broadcast %cst_118 : f32 to vector<56x56xf32>
    %175 = arith.maximumf %172, %174 : vector<56x56xf32>
    %176 = arith.mulf %172, %173 : vector<56x56xf32>
    %177 = arith.subf %175, %176 : vector<56x56xf32>
    %178 = math.absf %172 : vector<56x56xf32>
    %cst_119 = arith.constant 0.000000e+00 : f32
    %179 = vector.broadcast %cst_119 : f32 to vector<56x56xf32>
    %180 = arith.subf %179, %178 : vector<56x56xf32>
    %181 = math.exp %180 : vector<56x56xf32>
    %cst_120 = arith.constant 1.000000e+00 : f32
    %182 = vector.broadcast %cst_120 : f32 to vector<56x56xf32>
    %183 = arith.addf %182, %181 : vector<56x56xf32>
    %184 = math.log %183 : vector<56x56xf32>
    %185 = arith.addf %177, %184 : vector<56x56xf32>
    %cst_121 = arith.constant dense<0.000000e+00> : vector<56xf32>
    %186 = vector.multi_reduction <add>, %185, %cst_121 [1] : vector<56x56xf32> to vector<56xf32>
    %187 = vector.shape_cast %186 : vector<56xf32> to vector<56x1xf32>
    %c0_122 = arith.constant 0 : index
    %c0_123 = arith.constant 0 : index
    %188 = vector.load %arg18[%c0_122, %c0_123] : memref<2x56xf32, #tpu.memory_space<vmem>>, vector<2x56xf32>
    %cst_124 = arith.constant dense<0.000000e+00> : vector<2x1xf32>
    %189 = tpu.matmul %188, %187, %cst_124 {dimension_numbers = #tpu.dot_dimension_numbers<[1], [0], [0], [1], [0, 0, 1, 1], [], []>} : vector<2x56xf32>, vector<56x1xf32>, vector<2x1xf32> -> vector<2x1xf32>
    %cst_125 = arith.constant 0.000000e+00 : f32
    %190 = vector.broadcast %cst_125 : f32 to vector<2x1xf32>
    %191 = arith.subf %190, %189 : vector<2x1xf32>
    %c0_126 = arith.constant 0 : index
    %c0_127 = arith.constant 0 : index
    %192 = vector.load %arg19[%c0_126, %c0_127] : memref<2x1xf32, #tpu.memory_space<vmem>>, vector<2x1xf32>
    tpu.vector_store %arg19[%c0_126, %c0_127], %191 {strides = array<i32>} : memref<2x1xf32, #tpu.memory_space<vmem>>, vector<2x1xf32>,
    return
  }
  func.func @transform_0(%arg0: i32) -> (i32, i32) {
    %c0_i32 = arith.constant 0 : i32
    %c0_i32_0 = arith.constant 0 : i32
    %c0_i32_1 = arith.constant 0 : i32
    return %c0_i32, %c0_i32_0 : i32, i32
  }
  func.func @transform_1(%arg0: i32) -> (i32, i32) {
    %c0_i32 = arith.constant 0 : i32
    %c0_i32_0 = arith.constant 0 : i32
    %c0_i32_1 = arith.constant 0 : i32
    return %c0_i32, %c0_i32_0 : i32, i32
  }
  func.func @transform_2(%arg0: i32) -> (i32, i32) {
    %c0_i32 = arith.constant 0 : i32
    %c0_i32_0 = arith.constant 0 : i32
    %c0_i32_1 = arith.constant 0 : i32
    return %c0_i32, %c0_i32_0 : i32, i32
  }
  func.func @transform_3(%arg0: i32) -> (i32, i32) {
    %c0_i32 = arith.constant 0 : i32
    %c0_i32_0 = arith.constant 0 : i32
    %c0_i32_1 = arith.constant 0 : i32
    return %c0_i32, %c0_i32_0 : i32, i32
  }
  func.func @transform_4(%arg0: i32) -> (i32, i32) {
    %c0_i32 = arith.constant 0 : i32
    %c0_i32_0 = arith.constant 0 : i32
    %c0_i32_1 = arith.constant 0 : i32
    return %c0_i32, %c0_i32_0 : i32, i32
  }
  func.func @transform_5(%arg0: i32) -> (i32, i32) {
    %c0_i32 = arith.constant 0 : i32
    %c0_i32_0 = arith.constant 0 : i32
    %c0_i32_1 = arith.constant 0 : i32
    return %c0_i32, %c0_i32_0 : i32, i32
  }
  func.func @transform_6(%arg0: i32) -> (i32, i32) {
    %c0_i32 = arith.constant 0 : i32
    %c0_i32_0 = arith.constant 0 : i32
    %c0_i32_1 = arith.constant 0 : i32
    return %c0_i32, %c0_i32_0 : i32, i32
  }
  func.func @transform_7(%arg0: i32) -> (i32, i32) {
    %c0_i32 = arith.constant 0 : i32
    %c0_i32_0 = arith.constant 0 : i32
    %c0_i32_1 = arith.constant 0 : i32
    return %c0_i32, %c0_i32_0 : i32, i32
  }
  func.func @transform_8(%arg0: i32) -> (i32, i32) {
    %c0_i32 = arith.constant 0 : i32
    %c0_i32_0 = arith.constant 0 : i32
    %c0_i32_1 = arith.constant 0 : i32
    return %c0_i32, %c0_i32_0 : i32, i32
  }
  func.func @transform_9(%arg0: i32) -> (i32, i32) {
    %c0_i32 = arith.constant 0 : i32
    %c0_i32_0 = arith.constant 0 : i32
    %c0_i32_1 = arith.constant 0 : i32
    return %c0_i32, %c0_i32_0 : i32, i32
  }
  func.func @transform_10(%arg0: i32) -> (i32, i32, i32) {
    %c0_i32 = arith.constant 0 : i32
    %c0_i32_0 = arith.constant 0 : i32
    %c0_i32_1 = arith.constant 0 : i32
    %c0_i32_2 = arith.constant 0 : i32
    return %c0_i32, %c0_i32_0, %c0_i32_1 : i32, i32, i32
  }
  func.func @transform_11(%arg0: i32) -> (i32, i32) {
    %c0_i32 = arith.constant 0 : i32
    %c0_i32_0 = arith.constant 0 : i32
    %c0_i32_1 = arith.constant 0 : i32
    return %c0_i32, %c0_i32_0 : i32, i32
  }
  func.func @transform_12(%arg0: i32) -> (i32, i32, i32) {
    %c0_i32 = arith.constant 0 : i32
    %c0_i32_0 = arith.constant 0 : i32
    %c0_i32_1 = arith.constant 0 : i32
    %c0_i32_2 = arith.constant 0 : i32
    return %c0_i32, %c0_i32_0, %c0_i32_1 : i32, i32, i32
  }
  func.func @transform_13(%arg0: i32) -> (i32, i32) {
    %c0_i32 = arith.constant 0 : i32
    %c0_i32_0 = arith.constant 0 : i32
    %c0_i32_1 = arith.constant 0 : i32
    return %c0_i32, %c0_i32_0 : i32, i32
  }
  func.func @transform_14(%arg0: i32) -> (i32, i32, i32) {
    %c0_i32 = arith.constant 0 : i32
    %c0_i32_0 = arith.constant 0 : i32
    %c0_i32_1 = arith.constant 0 : i32
    %c0_i32_2 = arith.constant 0 : i32
    return %c0_i32, %c0_i32_0, %c0_i32_1 : i32, i32, i32
  }
  func.func @transform_15(%arg0: i32) -> (i32, i32) {
    %c0_i32 = arith.constant 0 : i32
    %c0_i32_0 = arith.constant 0 : i32
    %c0_i32_1 = arith.constant 0 : i32
    return %c0_i32, %c0_i32_0 : i32, i32
  }
  func.func @transform_16(%arg0: i32) -> (i32, i32) {
    %c0_i32 = arith.constant 0 : i32
    %c0_i32_0 = arith.constant 0 : i32
    %c0_i32_1 = arith.constant 0 : i32
    return %c0_i32, %c0_i32_0 : i32, i32
  }
  func.func @transform_17(%arg0: i32) -> (i32, i32) {
    %c0_i32 = arith.constant 0 : i32
    %c0_i32_0 = arith.constant 0 : i32
    %c0_i32_1 = arith.constant 0 : i32
    return %c0_i32, %c0_i32_0 : i32, i32
  }
  func.func @transform_18(%arg0: i32) -> (i32, i32) {
    %c0_i32 = arith.constant 0 : i32
    %c0_i32_0 = arith.constant 0 : i32
    %c0_i32_1 = arith.constant 0 : i32
    return %c0_i32, %c0_i32_0 : i32, i32
  }
}

</mosaic_0001>

<llo_original>
// kernel: decoder_forward.1
$region0: #{decoder_forward.1}
  #allocation0 [shape = 'u32[]', space=smem, size = 0x4, offset = 0x4, fixed_abs, tag = 'smem constant byte address 0x4 - core index']
  #allocation1 [shape = 'u32[72,128]{1,0:T(1,128)}', space=vmem, size = 0x9000, scoped, tag = 'internal scratch']
  %s0 = inlined_call_operand.vmem [shape: f32[2,8], index: 0, kind: input, shape index: {}]
  %s1 = inlined_call_operand.vmem [shape: f32[56,56], index: 1, kind: input, shape index: {}]
  %s2 = inlined_call_operand.vmem [shape: f32[6,2], index: 2, kind: input, shape index: {}]
  %s3 = inlined_call_operand.vmem [shape: f32[6,288], index: 3, kind: input, shape index: {}]
  %s4 = inlined_call_operand.vmem [shape: f32[288,96], index: 4, kind: input, shape index: {}]
  %s5 = inlined_call_operand.vmem [shape: f32[8,64], index: 5, kind: input, shape index: {}]
  %s6 = inlined_call_operand.vmem [shape: f32[64,64], index: 6, kind: input, shape index: {}]
  %s7 = inlined_call_operand.hbm [shape: f32[64,288], index: 7, kind: input, shape index: {}]
  %s8 = inlined_call_operand.hbm [shape: f32[1,3072], index: 8, kind: input, shape index: {}]
  %s9 = inlined_call_operand.vmem [shape: bf16[96,896], index: 9, kind: input, shape index: {}]
  %s10 = inlined_call_operand.vmem [shape: f32[4,14,6], index: 10, kind: input, shape index: {}]
  %s11 = inlined_call_operand.hbm [shape: bf16[224,1792], index: 11, kind: input, shape index: {}]
  %s12 = inlined_call_operand.vmem [shape: f32[4,28,14], index: 12, kind: input, shape index: {}]
  %s13 = inlined_call_operand.vmem [shape: bf16[448,224], index: 13, kind: input, shape index: {}]
  %s14 = inlined_call_operand.vmem [shape: f32[4,56,28], index: 14, kind: input, shape index: {}]
  %s15 = inlined_call_operand.vmem [shape: f32[448,32], index: 15, kind: input, shape index: {}]
  %s16 = inlined_call_operand.vmem [shape: f32[32,448], index: 16, kind: input, shape index: {}]
  %s17 = inlined_call_operand.vmem [shape: f32[2,56], index: 17, kind: input, shape index: {}]
  %s18 = inlined_call_operand.vmem [shape: f32[2,1], index: 18, kind: output, shape index: {}]
  %s19 = sld [smem:[#allocation0]]
  $region94: #{decoder_forward.1} parent=0
    _
  %s21 = ssub.s32 1, %s19
  %s22 = scalar_select 0, %s21, %s19
  $region1: #{decoder_forward.1} parent=0
    #allocation2 [shape = 'u8[98304]{0}', space=vmem, size = 0x18000, scoped, tag = 'input window, operand 7, single buffered']
    #allocation3 [shape = 's32[1]{0}', space=sflag, size = 0x4, scoped, tag = 'scoped memory for decoder_forward.1']
    #allocation4 [shape = 'u8[12288]{0}', space=vmem, size = 0x3000, scoped, tag = 'input window, operand 8, single buffered']
    #allocation5 [shape = 's32[1]{0}', space=sflag, size = 0x4, scoped, tag = 'scoped memory for decoder_forward.1']
    #allocation6 [shape = 'u8[802816]{0}', space=vmem, size = 0xc4000, scoped, tag = 'input window, operand 11, single buffered']
    %23 = vsyncpa [#allocation3], 0
    %24 = vsyncpa [#allocation5], 0
    // Predicated region
    $region2: #{decoder_forward.1} parent=1 // pred_check
      _
    $region3: #{decoder_forward.1} parent=1 // pred_check_branch
      %26 = sbr.rel (0) target = $region5
    $region4: #{decoder_forward.1} parent=1 // pred_region
      _
    $region5: #{decoder_forward.1} parent=1 // pred_fallthru
      _
    // Predicated region
    $region6: #{decoder_forward.1} parent=1 // pred_check
      _
    $region7: #{decoder_forward.1} parent=1 // pred_check_branch
      %28 = sbr.rel (0) target = $region9
    $region8: #{decoder_forward.1} parent=1 // pred_region
      _
    $region9: #{decoder_forward.1} parent=1 // pred_fallthru
      _
    // Predicated region
    $region10: #{decoder_forward.1} parent=1 // pred_check
      _
    $region11: #{decoder_forward.1} parent=1 // pred_check_branch
      %30 = sbr.rel (0) target = $region13
    $region12: #{decoder_forward.1} parent=1 // pred_region
      _
    $region13: #{decoder_forward.1} parent=1 // pred_fallthru
      _
    // Predicated region
    $region14: #{decoder_forward.1} parent=1 // pred_check
      _
    $region15: #{decoder_forward.1} parent=1 // pred_check_branch
      %32 = sbr.rel (0) target = $region17
    $region16: #{decoder_forward.1} parent=1 // pred_region
      _
    $region17: #{decoder_forward.1} parent=1 // pred_fallthru
      _
    // Predicated region
    $region18: #{decoder_forward.1} parent=1 // pred_check
      _
    $region19: #{decoder_forward.1} parent=1 // pred_check_branch
      %34 = sbr.rel (0) target = $region21
    $region20: #{decoder_forward.1} parent=1 // pred_region
      _
    $region21: #{decoder_forward.1} parent=1 // pred_fallthru
      _
    // Predicated region
    $region22: #{decoder_forward.1} parent=1 // pred_check
      _
    $region23: #{decoder_forward.1} parent=1 // pred_check_branch
      %36 = sbr.rel (0) target = $region25
    $region24: #{decoder_forward.1} parent=1 // pred_region
      _
    $region25: #{decoder_forward.1} parent=1 // pred_fallthru
      _
    // Predicated region
    $region26: #{decoder_forward.1} parent=1 // pred_check
      _
    $region27: #{decoder_forward.1} parent=1 // pred_check_branch
      %38 = sbr.rel (0) target = $region29
    $region28: #{decoder_forward.1} parent=1 // pred_region
      _
    $region29: #{decoder_forward.1} parent=1 // pred_fallthru
      _
    // Predicated region
    $region30: #{decoder_forward.1} parent=1 // pred_check
      _
    $region31: #{decoder_forward.1} parent=1 // pred_check_branch
      %40 = sbr.rel (0) target = $region33
    $region32: #{decoder_forward.1} parent=1 // pred_region
      %42 = vsyncadd [#allocation3], 0
      %s43 = sshll.u32 %s7, 4
      %s44 = int_to_ptr.hbm [resolvable:$true] %s43
      %s45 = sshll.u32 [#allocation2], 4
      %s46 = int_to_ptr.vmem [resolvable:$true] %s45
      %51 = dma.hbm_to_vmem [thread:$0]  %s44, 3072, %s46, [#allocation3], 384, 384, 24
    $region33: #{decoder_forward.1} parent=1 // pred_fallthru
      _
    // Predicated region
    $region34: #{decoder_forward.1} parent=1 // pred_check
      _
    $region35: #{decoder_forward.1} parent=1 // pred_check_branch
      %53 = sbr.rel (0) target = $region37
    $region36: #{decoder_forward.1} parent=1 // pred_region
      %55 = vsyncadd [#allocation5], 0
      %s57 = sshll.u32 %s8, 4
      %s58 = int_to_ptr.hbm [resolvable:$true] %s57
      %s59 = sshll.u32 [#allocation4], 4
      %s60 = int_to_ptr.vmem [resolvable:$true] %s59
      %62 = dma.hbm_to_vmem [thread:$0]  %s58, 384, %s60, [#allocation5]
    $region37: #{decoder_forward.1} parent=1 // pred_fallthru
      _
    // Predicated region
    $region38: #{decoder_forward.1} parent=1 // pred_check
      _
    $region39: #{decoder_forward.1} parent=1 // pred_check_branch
      %64 = sbr.rel (0) target = $region41
    $region40: #{decoder_forward.1} parent=1 // pred_region
      _
    $region41: #{decoder_forward.1} parent=1 // pred_fallthru
      _
    // Predicated region
    $region42: #{decoder_forward.1} parent=1 // pred_check
      _
    $region43: #{decoder_forward.1} parent=1 // pred_check_branch
      %66 = sbr.rel (0) target = $region45
    $region44: #{decoder_forward.1} parent=1 // pred_region
      _
    $region45: #{decoder_forward.1} parent=1 // pred_fallthru
      _
    // Predicated region
    $region46: #{decoder_forward.1} parent=1 // pred_check
      _
    $region47: #{decoder_forward.1} parent=1 // pred_check_branch
      %68 = sbr.rel (0) target = $region49
    $region48: #{decoder_forward.1} parent=1 // pred_region
      %70 = vsyncadd [#allocation5], 0
      %s71 = sshll.u32 %s11, 4
      %s72 = int_to_ptr.hbm [resolvable:$true] %s71
      %s73 = sshll.u32 [#allocation6], 4
      %s74 = int_to_ptr.vmem [resolvable:$true] %s73
      %79 = dma.hbm_to_vmem [thread:$0]  %s72, 25088, %s74, [#allocation5], 896, 896, 56
    $region49: #{decoder_forward.1} parent=1 // pred_fallthru
      _
    // Predicated region
    $region50: #{decoder_forward.1} parent=1 // pred_check
      _
    $region51: #{decoder_forward.1} parent=1 // pred_check_branch
      %81 = sbr.rel (0) target = $region53
    $region52: #{decoder_forward.1} parent=1 // pred_region
      _
    $region53: #{decoder_forward.1} parent=1 // pred_fallthru
      _
    // Predicated region
    $region54: #{decoder_forward.1} parent=1 // pred_check
      _
    $region55: #{decoder_forward.1} parent=1 // pred_check_branch
      %83 = sbr.rel (0) target = $region57
    $region56: #{decoder_forward.1} parent=1 // pred_region
      _
    $region57: #{decoder_forward.1} parent=1 // pred_fallthru
      _
    // Predicated region
    $region58: #{decoder_forward.1} parent=1 // pred_check
      _
    $region59: #{decoder_forward.1} parent=1 // pred_check_branch
      %85 = sbr.rel (0) target = $region61
    $region60: #{decoder_forward.1} parent=1 // pred_region
      _
    $region61: #{decoder_forward.1} parent=1 // pred_fallthru
      _
    // Predicated region
    $region62: #{decoder_forward.1} parent=1 // pred_check
      _
    $region63: #{decoder_forward.1} parent=1 // pred_check_branch
      %87 = sbr.rel (0) target = $region65
    $region64: #{decoder_forward.1} parent=1 // pred_region
      _
    $region65: #{decoder_forward.1} parent=1 // pred_fallthru
      _
    // Predicated region
    $region66: #{decoder_forward.1} parent=1 // pred_check
      _
    $region67: #{decoder_forward.1} parent=1 // pred_check_branch
      %89 = sbr.rel (0) target = $region69
    $region68: #{decoder_forward.1} parent=1 // pred_region
      _
    $region69: #{decoder_forward.1} parent=1 // pred_fallthru
      _
    // Predicated region
    $region70: #{decoder_forward.1} parent=1 // pred_check
      _
    $region71: #{decoder_forward.1} parent=1 // pred_check_branch
      %91 = sbr.rel (0) target = $region73
    $region72: #{decoder_forward.1} parent=1 // pred_region
      _
    $region73: #{decoder_forward.1} parent=1 // pred_fallthru
      _
    // Predicated region
    $region74: #{decoder_forward.1} parent=1 // pred_check
      _
    $region75: #{decoder_forward.1} parent=1 // pred_check_branch
      %93 = sbr.rel (0) target = $region77
    $region76: #{decoder_forward.1} parent=1 // pred_region
      %95 = dma.done [#allocation3], 3072
    $region77: #{decoder_forward.1} parent=1 // pred_fallthru
      _
    // Predicated region
    $region78: #{decoder_forward.1} parent=1 // pred_check
      _
    $region79: #{decoder_forward.1} parent=1 // pred_check_branch
      %97 = sbr.rel (0) target = $region81
    $region80: #{decoder_forward.1} parent=1 // pred_region
      %99 = dma.done [#allocation5], 384
    $region81: #{decoder_forward.1} parent=1 // pred_fallthru
      _
    // Predicated region
    $region82: #{decoder_forward.1} parent=1 // pred_check
      _
    $region83: #{decoder_forward.1} parent=1 // pred_check_branch
      %101 = sbr.rel (0) target = $region85
    $region84: #{decoder_forward.1} parent=1 // pred_region
      %103 = dma.done [#allocation5], 25088
    $region85: #{decoder_forward.1} parent=1 // pred_fallthru
      _
    %v105 = vld [vmem:[%s0] sm:$0x3]
    %v106 = vld [vmem:[%s5] sm:$0xff]
    %v107 = vld [vmem:[#allocation4] sm:$0x1]
    %v109 = vperm.slane %v107, 0
    %vm111 = vcmask 64512
    %v113 = vsel %vm111, %v105, 0
    %115 = vmatpush.msra.mxu0 0.0
    %116 = vmatpush.msra.mxu0 0.0
    %117 = vmatpush.msra.mxu0 0.0
    %118 = vmatpush.msra.mxu0 0.0
    %119 = vmatpush.msra.mxu0 0.0
    %120 = vmatpush.msra.mxu0 0.0
    %121 = vmatpush.msra.mxu0 0.0
    %122 = vmatpush.msra.mxu0 0.0
    %123 = vmatpush.msra.mxu0 0.0
    %124 = vmatpush.msra.mxu0 0.0
    %125 = vmatpush.msra.mxu0 0.0
    %126 = vmatpush.msra.mxu0 0.0
    %127 = vmatpush.msra.mxu0 0.0
    %128 = vmatpush.msra.mxu0 0.0
    %129 = vmatpush.msra.mxu0 0.0
    %130 = vmatpush.msra.mxu0 %v106
    %131 = vmatmul.f32.gmra.mxu0 %v113
    %v132 = vpop.f32.mrf.mxu0
    %v133 = vadd.f32 %v109, %v132
    %134 = vdwg.mxu0
    %vm135 = vcmp.gt.f32.partialorder %v133, 0.0
    %v136 = vmul.f32 %v133, 0.01
    %v137 = vsel %vm135, %v133, %v136
    %v138 = vld [vmem:[%s6] sm:$0xff]
    %v139 = vld [vmem:[%s6 + $0x8] sm:$0xff]
    %v140 = vld [vmem:[%s6 + $0x10] sm:$0xff]
    %v141 = vld [vmem:[%s6 + $0x18] sm:$0xff]
    %v142 = vld [vmem:[%s6 + $0x20] sm:$0xff]
    %v143 = vld [vmem:[%s6 + $0x28] sm:$0xff]
    %v144 = vld [vmem:[%s6 + $0x30] sm:$0xff]
    %v145 = vld [vmem:[%s6 + $0x38] sm:$0xff]
    %v146 = vld [vmem:[#allocation4 + $0x1] sm:$0x1]
    %v148 = vperm.slane %v146, 0
    %vm150 = vcmask 523264
    %v152 = vsel %vm150, %v137, 0
    %154 = vmatpush.msra.mxu0 0.0
    %155 = vmatpush.msra.mxu0 0.0
    %156 = vmatpush.msra.mxu0 0.0
    %157 = vmatpush.msra.mxu0 0.0
    %158 = vmatpush.msra.mxu0 0.0
    %159 = vmatpush.msra.mxu0 0.0
    %160 = vmatpush.msra.mxu0 0.0
    %161 = vmatpush.msra.mxu0 0.0
    %162 = vmatpush.msra.mxu0 %v145
    %163 = vmatpush.msra.mxu0 %v144
    %164 = vmatpush.msra.mxu0 %v143
    %165 = vmatpush.msra.mxu0 %v142
    %166 = vmatpush.msra.mxu0 %v141
    %167 = vmatpush.msra.mxu0 %v140
    %168 = vmatpush.msra.mxu0 %v139
    %169 = vmatpush.msra.mxu0 %v138
    %170 = vmatmul.f32.gmra.mxu0 %v152
    %v171 = vpop.f32.mrf.mxu0
    %v172 = vadd.f32 %v148, %v171
    %173 = vdwg.mxu0
    %vm174 = vcmp.gt.f32.partialorder %v172, 0.0
    %v175 = vmul.f32 %v172, 0.01
    %v176 = vsel %vm174, %v172, %v175
    %v177 = vld [vmem:[#allocation2] sm:$0xff]
    %v178 = vld [vmem:[#allocation2 + $0x8] sm:$0xff]
    %v179 = vld [vmem:[#allocation2 + $0x10] sm:$0xff]
    %v180 = vld [vmem:[#allocation2 + $0x18] sm:$0xff]
    %v181 = vld [vmem:[#allocation2 + $0x20] sm:$0xff]
    %v182 = vld [vmem:[#allocation2 + $0x28] sm:$0xff]
    %v183 = vld [vmem:[#allocation2 + $0x30] sm:$0xff]
    %v184 = vld [vmem:[#allocation2 + $0x38] sm:$0xff]
    %v185 = vld [vmem:[#allocation2 + $0x40] sm:$0xff]
    %v186 = vld [vmem:[#allocation2 + $0x48] sm:$0xff]
    %v187 = vld [vmem:[#allocation2 + $0x50] sm:$0xff]
    %v188 = vld [vmem:[#allocation2 + $0x58] sm:$0xff]
    %v189 = vld [vmem:[#allocation2 + $0x60] sm:$0xff]
    %v190 = vld [vmem:[#allocation2 + $0x68] sm:$0xff]
    %v191 = vld [vmem:[#allocation2 + $0x70] sm:$0xff]
    %v192 = vld [vmem:[#allocation2 + $0x78] sm:$0xff]
    %v193 = vld [vmem:[#allocation2 + $0x80] sm:$0xff]
    %v194 = vld [vmem:[#allocation2 + $0x88] sm:$0xff]
    %v195 = vld [vmem:[#allocation2 + $0x90] sm:$0xff]
    %v196 = vld [vmem:[#allocation2 + $0x98] sm:$0xff]
    %v197 = vld [vmem:[#allocation2 + $0xa0] sm:$0xff]
    %v198 = vld [vmem:[#allocation2 + $0xa8] sm:$0xff]
    %v199 = vld [vmem:[#allocation2 + $0xb0] sm:$0xff]
    %v200 = vld [vmem:[#allocation2 + $0xb8] sm:$0xff]
    %v201 = vld [vmem:[#allocation4 + $0x2] sm:$0x7]
    %v203 = vperm.slane %v201, 0
    %v204 = vperm.slane %v201, 1
    %v205 = vperm.slane %v201, 2
    %v210 = vsel %vm150, %v176, 0
    %212 = vmatpush.msra.mxu0 0.0
    %213 = vmatpush.msra.mxu0 0.0
    %214 = vmatpush.msra.mxu0 0.0
    %215 = vmatpush.msra.mxu0 0.0
    %216 = vmatpush.msra.mxu0 0.0
    %217 = vmatpush.msra.mxu0 0.0
    %218 = vmatpush.msra.mxu0 0.0
    %219 = vmatpush.msra.mxu0 0.0
    %220 = vmatpush.msra.mxu0 %v198
    %221 = vmatpush.msra.mxu0 %v195
    %222 = vmatpush.msra.mxu0 %v192
    %223 = vmatpush.msra.mxu0 %v189
    %224 = vmatpush.msra.mxu0 %v186
    %225 = vmatpush.msra.mxu0 %v183
    %226 = vmatpush.msra.mxu0 %v180
    %227 = vmatpush.msra.mxu0 %v177
    %228 = vmatmul.f32.gmra.mxu0 %v210
    %v229 = vpop.f32.mrf.mxu0
    %v230 = vadd.f32 %v203, %v229
    %231 = vdwg.mxu0
    %232 = vmatpush.msra.mxu0 0.0
    %233 = vmatpush.msra.mxu0 0.0
    %234 = vmatpush.msra.mxu0 0.0
    %235 = vmatpush.msra.mxu0 0.0
    %236 = vmatpush.msra.mxu0 0.0
    %237 = vmatpush.msra.mxu0 0.0
    %238 = vmatpush.msra.mxu0 0.0
    %239 = vmatpush.msra.mxu0 0.0
    %240 = vmatpush.msra.mxu0 %v199
    %241 = vmatpush.msra.mxu0 %v196
    %242 = vmatpush.msra.mxu0 %v193
    %243 = vmatpush.msra.mxu0 %v190
    %244 = vmatpush.msra.mxu0 %v187
    %245 = vmatpush.msra.mxu0 %v184
    %246 = vmatpush.msra.mxu0 %v181
    %247 = vmatpush.msra.mxu0 %v178
    %248 = vmatmul.f32.gmra.mxu0 %v210
    %v249 = vpop.f32.mrf.mxu0
    %v250 = vadd.f32 %v204, %v249
    %251 = vdwg.mxu0
    %252 = vmatpush.msra.mxu0 0.0
    %253 = vmatpush.msra.mxu0 0.0
    %254 = vmatpush.msra.mxu0 0.0
    %255 = vmatpush.msra.mxu0 0.0
    %256 = vmatpush.msra.mxu0 0.0
    %257 = vmatpush.msra.mxu0 0.0
    %258 = vmatpush.msra.mxu0 0.0
    %259 = vmatpush.msra.mxu0 0.0
    %260 = vmatpush.msra.mxu0 %v200
    %261 = vmatpush.msra.mxu0 %v197
    %262 = vmatpush.msra.mxu0 %v194
    %263 = vmatpush.msra.mxu0 %v191
    %264 = vmatpush.msra.mxu0 %v188
    %265 = vmatpush.msra.mxu0 %v185
    %266 = vmatpush.msra.mxu0 %v182
    %267 = vmatpush.msra.mxu0 %v179
    %268 = vmatmul.f32.gmra.mxu0 %v210
    %v269 = vpop.f32.mrf.mxu0
    %v270 = vadd.f32 %v205, %v269
    %271 = vdwg.mxu0
    %v272 = vld [vmem:[%s2] sm:$0x3f]
    %vm273 = vcmask 15360
    %v275 = vsel %vm273, %v272, 0
    %vm277 = vcmask 1041408
    %v279 = vsel %vm277, %v230, 0
    %v282 = vsel %vm277, %v250, 0
    %v285 = vsel %vm277, %v270, 0
    %287 = vmatpush.msra.mxu0 0.0
    %288 = vmatpush.msra.mxu0 0.0
    %289 = vmatpush.msra.mxu0 0.0
    %290 = vmatpush.msra.mxu0 0.0
    %291 = vmatpush.msra.mxu0 0.0
    %292 = vmatpush.msra.mxu0 0.0
    %293 = vmatpush.msra.mxu0 0.0
    %294 = vmatpush.msra.mxu0 0.0
    %295 = vmatpush.msra.mxu0 0.0
    %296 = vmatpush.msra.mxu0 0.0
    %297 = vmatpush.msra.mxu0 0.0
    %298 = vmatpush.msra.mxu0 0.0
    %299 = vmatpush.msra.mxu0 0.0
    %300 = vmatpush.msra.mxu0 0.0
    %301 = vmatpush.msra.mxu0 0.0
    %302 = vmatpush.msra.mxu0 %v279
    %303 = vmatmul.f32.gmra.mxu0 %v275
    %v304 = vpop.f32.mrf.mxu0
    %v305 = vadd.f32 0.0, %v304
    %306 = vdwg.mxu0
    %307 = vmatpush.msra.mxu0 0.0
    %308 = vmatpush.msra.mxu0 0.0
    %309 = vmatpush.msra.mxu0 0.0
    %310 = vmatpush.msra.mxu0 0.0
    %311 = vmatpush.msra.mxu0 0.0
    %312 = vmatpush.msra.mxu0 0.0
    %313 = vmatpush.msra.mxu0 0.0
    %314 = vmatpush.msra.mxu0 0.0
    %315 = vmatpush.msra.mxu0 0.0
    %316 = vmatpush.msra.mxu0 0.0
    %317 = vmatpush.msra.mxu0 0.0
    %318 = vmatpush.msra.mxu0 0.0
    %319 = vmatpush.msra.mxu0 0.0
    %320 = vmatpush.msra.mxu0 0.0
    %321 = vmatpush.msra.mxu0 0.0
    %322 = vmatpush.msra.mxu0 %v282
    %323 = vmatmul.f32.gmra.mxu0 %v275
    %v324 = vpop.f32.mrf.mxu0
    %v325 = vadd.f32 0.0, %v324
    %326 = vdwg.mxu0
    %327 = vmatpush.msra.mxu0 0.0
    %328 = vmatpush.msra.mxu0 0.0
    %329 = vmatpush.msra.mxu0 0.0
    %330 = vmatpush.msra.mxu0 0.0
    %331 = vmatpush.msra.mxu0 0.0
    %332 = vmatpush.msra.mxu0 0.0
    %333 = vmatpush.msra.mxu0 0.0
    %334 = vmatpush.msra.mxu0 0.0
    %335 = vmatpush.msra.mxu0 0.0
    %336 = vmatpush.msra.mxu0 0.0
    %337 = vmatpush.msra.mxu0 0.0
    %338 = vmatpush.msra.mxu0 0.0
    %339 = vmatpush.msra.mxu0 0.0
    %340 = vmatpush.msra.mxu0 0.0
    %341 = vmatpush.msra.mxu0 0.0
    %342 = vmatpush.msra.mxu0 %v285
    %343 = vmatmul.f32.gmra.mxu0 %v275
    %v344 = vpop.f32.mrf.mxu0
    %v345 = vadd.f32 0.0, %v344
    %346 = vdwg.mxu0
    %v347 = vld [vmem:[%s3] sm:$0x3f]
    %v348 = vld [vmem:[%s3 + $0x8] sm:$0x3f]
    %v349 = vld [vmem:[%s3 + $0x10] sm:$0x3f]
    %v350 = vmul.f32 %v305, %v347
    %v351 = vmul.f32 %v325, %v348
    %v352 = vmul.f32 %v345, %v349
    %v353 = vld [vmem:[%s4] sm:$0xff]
    %v354 = vld [vmem:[%s4 + $0x8] sm:$0xff]
    %v355 = vld [vmem:[%s4 + $0x10] sm:$0xff]
    %v356 = vld [vmem:[%s4 + $0x18] sm:$0xff]
    %v357 = vld [vmem:[%s4 + $0x20] sm:$0xff]
    %v358 = vld [vmem:[%s4 + $0x28] sm:$0xff]
    %v359 = vld [vmem:[%s4 + $0x30] sm:$0xff]
    %v360 = vld [vmem:[%s4 + $0x38] sm:$0xff]
    %v361 = vld [vmem:[%s4 + $0x40] sm:$0xff]
    %v362 = vld [vmem:[%s4 + $0x48] sm:$0xff]
    %v363 = vld [vmem:[%s4 + $0x50] sm:$0xff]
    %v364 = vld [vmem:[%s4 + $0x58] sm:$0xff]
    %v365 = vld [vmem:[%s4 + $0x60] sm:$0xff]
    %v366 = vld [vmem:[%s4 + $0x68] sm:$0xff]
    %v367 = vld [vmem:[%s4 + $0x70] sm:$0xff]
    %v368 = vld [vmem:[%s4 + $0x78] sm:$0xff]
    %v369 = vld [vmem:[%s4 + $0x80] sm:$0xff]
    %v370 = vld [vmem:[%s4 + $0x88] sm:$0xff]
    %v371 = vld [vmem:[%s4 + $0x90] sm:$0xff]
    %v372 = vld [vmem:[%s4 + $0x98] sm:$0xff]
    %v373 = vld [vmem:[%s4 + $0xa0] sm:$0xff]
    %v374 = vld [vmem:[%s4 + $0xa8] sm:$0xff]
    %v375 = vld [vmem:[%s4 + $0xb0] sm:$0xff]
    %v376 = vld [vmem:[%s4 + $0xb8] sm:$0xff]
    %v377 = vld [vmem:[%s4 + $0xc0] sm:$0xff]
    %v378 = vld [vmem:[%s4 + $0xc8] sm:$0xff]
    %v379 = vld [vmem:[%s4 + $0xd0] sm:$0xff]
    %v380 = vld [vmem:[%s4 + $0xd8] sm:$0xff]
    %v381 = vld [vmem:[%s4 + $0xe0] sm:$0xff]
    %v382 = vld [vmem:[%s4 + $0xe8] sm:$0xff]
    %v383 = vld [vmem:[%s4 + $0xf0] sm:$0xff]
    %v384 = vld [vmem:[%s4 + $0xf8] sm:$0xff]
    %v385 = vld [vmem:[%s4 + $0x100] sm:$0xff]
    %v386 = vld [vmem:[%s4 + $0x108] sm:$0xff]
    %v387 = vld [vmem:[%s4 + $0x110] sm:$0xff]
    %v388 = vld [vmem:[%s4 + $0x118] sm:$0xff]
    %vm389 = vcmask 261120
    %v391 = vsel %vm389, %v352, 0
    %393 = vmatpush.msra.mxu0 %v368
    %394 = vmatpush.msra.mxu0 %v367
    %395 = vmatpush.msra.mxu0 %v366
    %396 = vmatpush.msra.mxu0 %v365
    %397 = vmatpush.msra.mxu0 %v364
    %398 = vmatpush.msra.mxu0 %v363
    %399 = vmatpush.msra.mxu0 %v362
    %400 = vmatpush.msra.mxu0 %v361
    %401 = vmatpush.msra.mxu0 %v360
    %402 = vmatpush.msra.mxu0 %v359
    %403 = vmatpush.msra.mxu0 %v358
    %404 = vmatpush.msra.mxu0 %v357
    %405 = vmatpush.msra.mxu0 %v356
    %406 = vmatpush.msra.mxu0 %v355
    %407 = vmatpush.msra.mxu0 %v354
    %408 = vmatpush.msra.mxu0 %v353
    %409 = vmatmul.f32.gmra.mxu0 %v350
    %v410 = vpop.f32.mrf.mxu0
    %v411 = vadd.f32 0.0, %v410
    %412 = vdwg.mxu0
    %413 = vmatpush.msra.mxu0 %v384
    %414 = vmatpush.msra.mxu0 %v383
    %415 = vmatpush.msra.mxu0 %v382
    %416 = vmatpush.msra.mxu0 %v381
    %417 = vmatpush.msra.mxu0 %v380
    %418 = vmatpush.msra.mxu0 %v379
    %419 = vmatpush.msra.mxu0 %v378
    %420 = vmatpush.msra.mxu0 %v377
    %421 = vmatpush.msra.mxu0 %v376
    %422 = vmatpush.msra.mxu0 %v375
    %423 = vmatpush.msra.mxu0 %v374
    %424 = vmatpush.msra.mxu0 %v373
    %425 = vmatpush.msra.mxu0 %v372
    %426 = vmatpush.msra.mxu0 %v371
    %427 = vmatpush.msra.mxu0 %v370
    %428 = vmatpush.msra.mxu0 %v369
    %429 = vmatmul.f32.gmra.mxu0 %v351
    %v430 = vpop.f32.mrf.mxu0
    %v431 = vadd.f32 %v411, %v430
    %432 = vdwg.mxu0
    %433 = vmatpush.msra.mxu0 0.0
    %434 = vmatpush.msra.mxu0 0.0
    %435 = vmatpush.msra.mxu0 0.0
    %436 = vmatpush.msra.mxu0 0.0
    %437 = vmatpush.msra.mxu0 0.0
    %438 = vmatpush.msra.mxu0 0.0
    %439 = vmatpush.msra.mxu0 0.0
    %440 = vmatpush.msra.mxu0 0.0
    %441 = vmatpush.msra.mxu0 0.0
    %442 = vmatpush.msra.mxu0 0.0
    %443 = vmatpush.msra.mxu0 0.0
    %444 = vmatpush.msra.mxu0 0.0
    %445 = vmatpush.msra.mxu0 %v388
    %446 = vmatpush.msra.mxu0 %v387
    %447 = vmatpush.msra.mxu0 %v386
    %448 = vmatpush.msra.mxu0 %v385
    %449 = vmatmul.f32.gmra.mxu0 %v391
    %v450 = vpop.f32.mrf.mxu0
    %v451 = vadd.f32 %v431, %v450
    %452 = vdwg.mxu0
    %v453 = vld [vmem:[#allocation4 + $0x5] sm:$0x3]
    %v454 = vpack.c.bf16 %v451, %v451
    %v455 = vld [vmem:[%s9] sm:$0xff]
    %v456 = vld [vmem:[%s9 + $0x8] sm:$0xff]
    %v457 = vld [vmem:[%s9 + $0x10] sm:$0xff]
    %v458 = vld [vmem:[%s9 + $0x18] sm:$0xf]
    %v459 = vld [vmem:[%s9 + $0x1c] sm:$0xff]
    %v460 = vld [vmem:[%s9 + $0x24] sm:$0xff]
    %v461 = vld [vmem:[%s9 + $0x2c] sm:$0xff]
    %v462 = vld [vmem:[%s9 + $0x34] sm:$0xf]
    %v463 = vld [vmem:[%s9 + $0x38] sm:$0xff]
    %v464 = vld [vmem:[%s9 + $0x40] sm:$0xff]
    %v465 = vld [vmem:[%s9 + $0x48] sm:$0xff]
    %v466 = vld [vmem:[%s9 + $0x50] sm:$0xf]
    %v467 = vld [vmem:[%s9 + $0x54] sm:$0xff]
    %v468 = vld [vmem:[%s9 + $0x5c] sm:$0xff]
    %v469 = vld [vmem:[%s9 + $0x64] sm:$0xff]
    %v470 = vld [vmem:[%s9 + $0x6c] sm:$0xf]
    %v471 = vld [vmem:[%s9 + $0x70] sm:$0xff]
    %v472 = vld [vmem:[%s9 + $0x78] sm:$0xff]
    %v473 = vld [vmem:[%s9 + $0x80] sm:$0xff]
    %v474 = vld [vmem:[%s9 + $0x88] sm:$0xf]
    %v475 = vld [vmem:[%s9 + $0x8c] sm:$0xff]
    %v476 = vld [vmem:[%s9 + $0x94] sm:$0xff]
    %v477 = vld [vmem:[%s9 + $0x9c] sm:$0xff]
    %v478 = vld [vmem:[%s9 + $0xa4] sm:$0xf]
    %v479 = vld [vmem:[%s9 + $0xa8] sm:$0xff]
    %v480 = vld [vmem:[%s9 + $0xb0] sm:$0xff]
    %v481 = vld [vmem:[%s9 + $0xb8] sm:$0xff]
    %v482 = vld [vmem:[%s9 + $0xc0] sm:$0xf]
    %v483 = vld [vmem:[%s9 + $0xc4] sm:$0xff]
    %v484 = vld [vmem:[%s9 + $0xcc] sm:$0xff]
    %v485 = vld [vmem:[%s9 + $0xd4] sm:$0xff]
    %v486 = vld [vmem:[%s9 + $0xdc] sm:$0xf]
    %v487 = vld [vmem:[%s9 + $0xe0] sm:$0xff]
    %v488 = vld [vmem:[%s9 + $0xe8] sm:$0xff]
    %v489 = vld [vmem:[%s9 + $0xf0] sm:$0xff]
    %v490 = vld [vmem:[%s9 + $0xf8] sm:$0xf]
    %v491 = vld [vmem:[%s9 + $0xfc] sm:$0xff]
    %v492 = vld [vmem:[%s9 + $0x104] sm:$0xff]
    %v493 = vld [vmem:[%s9 + $0x10c] sm:$0xff]
    %v494 = vld [vmem:[%s9 + $0x114] sm:$0xf]
    %v495 = vld [vmem:[%s9 + $0x118] sm:$0xff]
    %v496 = vld [vmem:[%s9 + $0x120] sm:$0xff]
    %v497 = vld [vmem:[%s9 + $0x128] sm:$0xff]
    %v498 = vld [vmem:[%s9 + $0x130] sm:$0xf]
    %v499 = vld [vmem:[%s9 + $0x134] sm:$0xff]
    %v500 = vld [vmem:[%s9 + $0x13c] sm:$0xff]
    %v501 = vld [vmem:[%s9 + $0x144] sm:$0xff]
    %v502 = vld [vmem:[%s9 + $0x14c] sm:$0xf]
    %v551 = vunpack.c.l.b16 %v455
    %v552 = vunpack.c.h.b16 %v455
    %v553 = vunpack.c.l.b16 %v456
    %v554 = vunpack.c.h.b16 %v456
    %v555 = vunpack.c.l.b16 %v457
    %v556 = vunpack.c.h.b16 %v457
    %v557 = vunpack.c.l.b16 %v458
    %v558 = vunpack.c.l.b16 %v459
    %v559 = vunpack.c.h.b16 %v459
    %v560 = vunpack.c.l.b16 %v460
    %v561 = vunpack.c.h.b16 %v460
    %v562 = vunpack.c.l.b16 %v461
    %v563 = vunpack.c.h.b16 %v461
    %v564 = vunpack.c.l.b16 %v462
    %v565 = vunpack.c.l.b16 %v463
    %v566 = vunpack.c.h.b16 %v463
    %v567 = vunpack.c.l.b16 %v464
    %v568 = vunpack.c.h.b16 %v464
    %v569 = vunpack.c.l.b16 %v465
    %v570 = vunpack.c.h.b16 %v465
    %v571 = vunpack.c.l.b16 %v466
    %v572 = vunpack.c.l.b16 %v467
    %v573 = vunpack.c.h.b16 %v467
    %v574 = vunpack.c.l.b16 %v468
    %v575 = vunpack.c.h.b16 %v468
    %v576 = vunpack.c.l.b16 %v469
    %v577 = vunpack.c.h.b16 %v469
    %v578 = vunpack.c.l.b16 %v470
    %v579 = vunpack.c.l.b16 %v471
    %v580 = vunpack.c.h.b16 %v471
    %v581 = vunpack.c.l.b16 %v472
    %v582 = vunpack.c.h.b16 %v472
    %v583 = vunpack.c.l.b16 %v473
    %v584 = vunpack.c.h.b16 %v473
    %v585 = vunpack.c.l.b16 %v474
    %v586 = vunpack.c.l.b16 %v475
    %v587 = vunpack.c.h.b16 %v475
    %v588 = vunpack.c.l.b16 %v476
    %v589 = vunpack.c.h.b16 %v476
    %v590 = vunpack.c.l.b16 %v477
    %v591 = vunpack.c.h.b16 %v477
    %v592 = vunpack.c.l.b16 %v478
    %v593 = vunpack.c.l.b16 %v479
    %v594 = vunpack.c.h.b16 %v479
    %v595 = vunpack.c.l.b16 %v480
    %v596 = vunpack.c.h.b16 %v480
    %v597 = vunpack.c.l.b16 %v481
    %v598 = vunpack.c.h.b16 %v481
    %v599 = vunpack.c.l.b16 %v482
    %v600 = vunpack.c.l.b16 %v483
    %v601 = vunpack.c.h.b16 %v483
    %v602 = vunpack.c.l.b16 %v484
    %v603 = vunpack.c.h.b16 %v484
    %v604 = vunpack.c.l.b16 %v485
    %v605 = vunpack.c.h.b16 %v485
    %v606 = vunpack.c.l.b16 %v486
    %v607 = vunpack.c.l.b16 %v487
    %v608 = vunpack.c.h.b16 %v487
    %v609 = vunpack.c.l.b16 %v488
    %v610 = vunpack.c.h.b16 %v488
    %v611 = vunpack.c.l.b16 %v489
    %v612 = vunpack.c.h.b16 %v489
    %v613 = vunpack.c.l.b16 %v490
    %v614 = vunpack.c.l.b16 %v491
    %v615 = vunpack.c.h.b16 %v491
    %v616 = vunpack.c.l.b16 %v492
    %v617 = vunpack.c.h.b16 %v492
    %v618 = vunpack.c.l.b16 %v493
    %v619 = vunpack.c.h.b16 %v493
    %v620 = vunpack.c.l.b16 %v494
    %v621 = vunpack.c.l.b16 %v495
    %v622 = vunpack.c.h.b16 %v495
    %v623 = vunpack.c.l.b16 %v496
    %v624 = vunpack.c.h.b16 %v496
    %v625 = vunpack.c.l.b16 %v497
    %v626 = vunpack.c.h.b16 %v497
    %v627 = vunpack.c.l.b16 %v498
    %v628 = vunpack.c.l.b16 %v499
    %v629 = vunpack.c.h.b16 %v499
    %v630 = vunpack.c.l.b16 %v500
    %v631 = vunpack.c.h.b16 %v500
    %v632 = vunpack.c.l.b16 %v501
    %v633 = vunpack.c.h.b16 %v501
    %v634 = vunpack.c.l.b16 %v502
    %v635 = vpack.c.b16 %v558, %v551
    %v636 = vpack.c.b16 %v559, %v552
    %v637 = vpack.c.b16 %v560, %v553
    %v638 = vpack.c.b16 %v561, %v554
    %v639 = vpack.c.b16 %v562, %v555
    %v640 = vpack.c.b16 %v563, %v556
    %v641 = vpack.c.b16 %v564, %v557
    %v642 = vpack.c.b16 %v572, %v565
    %v643 = vpack.c.b16 %v573, %v566
    %v644 = vpack.c.b16 %v574, %v567
    %v645 = vpack.c.b16 %v575, %v568
    %v646 = vpack.c.b16 %v576, %v569
    %v647 = vpack.c.b16 %v577, %v570
    %v648 = vpack.c.b16 %v578, %v571
    %v649 = vpack.c.b16 %v586, %v579
    %v650 = vpack.c.b16 %v587, %v580
    %v651 = vpack.c.b16 %v588, %v581
    %v652 = vpack.c.b16 %v589, %v582
    %v653 = vpack.c.b16 %v590, %v583
    %v654 = vpack.c.b16 %v591, %v584
    %v655 = vpack.c.b16 %v592, %v585
    %v656 = vpack.c.b16 %v600, %v593
    %v657 = vpack.c.b16 %v601, %v594
    %v658 = vpack.c.b16 %v602, %v595
    %v659 = vpack.c.b16 %v603, %v596
    %v660 = vpack.c.b16 %v604, %v597
    %v661 = vpack.c.b16 %v605, %v598
    %v662 = vpack.c.b16 %v606, %v599
    %v663 = vpack.c.b16 %v614, %v607
    %v664 = vpack.c.b16 %v615, %v608
    %v665 = vpack.c.b16 %v616, %v609
    %v666 = vpack.c.b16 %v617, %v610
    %v667 = vpack.c.b16 %v618, %v611
    %v668 = vpack.c.b16 %v619, %v612
    %v669 = vpack.c.b16 %v620, %v613
    %v670 = vpack.c.b16 %v628, %v621
    %v671 = vpack.c.b16 %v629, %v622
    %v672 = vpack.c.b16 %v630, %v623
    %v673 = vpack.c.b16 %v631, %v624
    %v674 = vpack.c.b16 %v632, %v625
    %v675 = vpack.c.b16 %v633, %v626
    %v676 = vpack.c.b16 %v634, %v627
    %vm719 = vcmask 785408
    %v721 = vsel %vm719, %v454, 0
    %723 = vmatpush.bf16.msra.mxu0 0
    %724 = vmatpush.bf16.msra.mxu0 0
    %725 = vmatpush.bf16.msra.mxu0 %v670
    %726 = vmatpush.bf16.msra.mxu0 %v663
    %727 = vmatpush.bf16.msra.mxu0 %v656
    %728 = vmatpush.bf16.msra.mxu0 %v649
    %729 = vmatpush.bf16.msra.mxu0 %v642
    %730 = vmatpush.bf16.msra.mxu0 %v635
    %731 = vmatmul.bf16.gmra.mxu0 %v721
    %v732 = vpop.f32.mrf.mxu0
    %v733 = vadd.f32 0.0, %v732
    %v734 = vpop.f32.mrf.mxu0
    %735 = vdwg.mxu0
    %736 = vmatpush.bf16.msra.mxu0 0
    %737 = vmatpush.bf16.msra.mxu0 0
    %738 = vmatpush.bf16.msra.mxu0 %v671
    %739 = vmatpush.bf16.msra.mxu0 %v664
    %740 = vmatpush.bf16.msra.mxu0 %v657
    %741 = vmatpush.bf16.msra.mxu0 %v650
    %742 = vmatpush.bf16.msra.mxu0 %v643
    %743 = vmatpush.bf16.msra.mxu0 %v636
    %744 = vmatmul.bf16.gmra.mxu0 %v721
    %v745 = vpop.f32.mrf.mxu0
    %v746 = vadd.f32 0.0, %v745
    %v747 = vpop.f32.mrf.mxu0
    %748 = vdwg.mxu0
    %749 = vmatpush.bf16.msra.mxu0 0
    %750 = vmatpush.bf16.msra.mxu0 0
    %751 = vmatpush.bf16.msra.mxu0 %v672
    %752 = vmatpush.bf16.msra.mxu0 %v665
    %753 = vmatpush.bf16.msra.mxu0 %v658
    %754 = vmatpush.bf16.msra.mxu0 %v651
    %755 = vmatpush.bf16.msra.mxu0 %v644
    %756 = vmatpush.bf16.msra.mxu0 %v637
    %757 = vmatmul.bf16.gmra.mxu0 %v721
    %v758 = vpop.f32.mrf.mxu0
    %v759 = vadd.f32 0.0, %v758
    %v760 = vpop.f32.mrf.mxu0
    %761 = vdwg.mxu0
    %762 = vmatpush.bf16.msra.mxu0 0
    %763 = vmatpush.bf16.msra.mxu0 0
    %764 = vmatpush.bf16.msra.mxu0 %v673
    %765 = vmatpush.bf16.msra.mxu0 %v666
    %766 = vmatpush.bf16.msra.mxu0 %v659
    %767 = vmatpush.bf16.msra.mxu0 %v652
    %768 = vmatpush.bf16.msra.mxu0 %v645
    %769 = vmatpush.bf16.msra.mxu0 %v638
    %770 = vmatmul.bf16.gmra.mxu0 %v721
    %v771 = vpop.f32.mrf.mxu0
    %v772 = vadd.f32 0.0, %v771
    %v773 = vpop.f32.mrf.mxu0
    %774 = vdwg.mxu0
    %775 = vmatpush.bf16.msra.mxu0 0
    %776 = vmatpush.bf16.msra.mxu0 0
    %777 = vmatpush.bf16.msra.mxu0 %v674
    %778 = vmatpush.bf16.msra.mxu0 %v667
    %779 = vmatpush.bf16.msra.mxu0 %v660
    %780 = vmatpush.bf16.msra.mxu0 %v653
    %781 = vmatpush.bf16.msra.mxu0 %v646
    %782 = vmatpush.bf16.msra.mxu0 %v639
    %783 = vmatmul.bf16.gmra.mxu0 %v721
    %v784 = vpop.f32.mrf.mxu0
    %v785 = vadd.f32 0.0, %v784
    %v786 = vpop.f32.mrf.mxu0
    %787 = vdwg.mxu0
    %788 = vmatpush.bf16.msra.mxu0 0
    %789 = vmatpush.bf16.msra.mxu0 0
    %790 = vmatpush.bf16.msra.mxu0 %v675
    %791 = vmatpush.bf16.msra.mxu0 %v668
    %792 = vmatpush.bf16.msra.mxu0 %v661
    %793 = vmatpush.bf16.msra.mxu0 %v654
    %794 = vmatpush.bf16.msra.mxu0 %v647
    %795 = vmatpush.bf16.msra.mxu0 %v640
    %796 = vmatmul.bf16.gmra.mxu0 %v721
    %v797 = vpop.f32.mrf.mxu0
    %v798 = vadd.f32 0.0, %v797
    %v799 = vpop.f32.mrf.mxu0
    %800 = vdwg.mxu0
    %801 = vmatpush.bf16.msra.mxu0 0
    %802 = vmatpush.bf16.msra.mxu0 0
    %803 = vmatpush.bf16.msra.mxu0 %v676
    %804 = vmatpush.bf16.msra.mxu0 %v669
    %805 = vmatpush.bf16.msra.mxu0 %v662
    %806 = vmatpush.bf16.msra.mxu0 %v655
    %807 = vmatpush.bf16.msra.mxu0 %v648
    %808 = vmatpush.bf16.msra.mxu0 %v641
    %809 = vmatmul.bf16.gmra.mxu0 %v721
    %v810 = vpop.f32.mrf.mxu0
    %v811 = vadd.f32 0.0, %v810
    %v812 = vpop.f32.mrf.mxu0
    %813 = vdwg.mxu0
    %v814 = vld [vmem:[%s10] sm:$0xff]
    %v815 = vld [vmem:[%s10 + $0x8] sm:$0x3f]
    %v817 = vperm.slane %v453, 0
    %v818 = vperm.slane %v453, 1
    %vm821 = vcmask 48128
    %v823 = vsel %vm821, %v814, 0
    %v826 = vsel %vm821, %v815, 0
    %vm828 = vcmask 1045504
    %v830 = vsel %vm828, %v733, 0
    %v833 = vsel %vm828, %v746, 0
    %835 = vmatpush.msra.mxu0 0.0
    %836 = vmatpush.msra.mxu0 0.0
    %837 = vmatpush.msra.mxu0 0.0
    %838 = vmatpush.msra.mxu0 0.0
    %839 = vmatpush.msra.mxu0 0.0
    %840 = vmatpush.msra.mxu0 0.0
    %841 = vmatpush.msra.mxu0 0.0
    %842 = vmatpush.msra.mxu0 0.0
    %843 = vmatpush.msra.mxu0 0.0
    %844 = vmatpush.msra.mxu0 0.0
    %845 = vmatpush.msra.mxu0 0.0
    %846 = vmatpush.msra.mxu0 0.0
    %847 = vmatpush.msra.mxu0 0.0
    %848 = vmatpush.msra.mxu0 0.0
    %849 = vmatpush.msra.mxu0 0.0
    %850 = vmatpush.msra.mxu0 %v830
    %851 = vmatmul.f32.gmra.mxu0 %v823
    %v852 = vpop.f32.mrf.mxu0
    %v853 = vadd.f32 %v817, %v852
    %854 = vmatmul.f32.gmra.mxu0 %v826
    %v855 = vpop.f32.mrf.mxu0
    %v856 = vadd.f32 %v817, %v855
    %857 = vdwg.mxu0
    %858 = vmatpush.msra.mxu0 0.0
    %859 = vmatpush.msra.mxu0 0.0
    %860 = vmatpush.msra.mxu0 0.0
    %861 = vmatpush.msra.mxu0 0.0
    %862 = vmatpush.msra.mxu0 0.0
    %863 = vmatpush.msra.mxu0 0.0
    %864 = vmatpush.msra.mxu0 0.0
    %865 = vmatpush.msra.mxu0 0.0
    %866 = vmatpush.msra.mxu0 0.0
    %867 = vmatpush.msra.mxu0 0.0
    %868 = vmatpush.msra.mxu0 0.0
    %869 = vmatpush.msra.mxu0 0.0
    %870 = vmatpush.msra.mxu0 0.0
    %871 = vmatpush.msra.mxu0 0.0
    %872 = vmatpush.msra.mxu0 0.0
    %873 = vmatpush.msra.mxu0 %v833
    %874 = vmatmul.f32.gmra.mxu0 %v823
    %v875 = vpop.f32.mrf.mxu0
    %v876 = vadd.f32 %v818, %v875
    %877 = vmatmul.f32.gmra.mxu0 %v826
    %v878 = vpop.f32.mrf.mxu0
    %v879 = vadd.f32 %v818, %v878
    %880 = vdwg.mxu0
    %s881 = scalar_lea.vmem %s10, 16
    %v882 = vld [vmem:[%s881] sm:$0xff]
    %v883 = vld [vmem:[%s881 + $0x8] sm:$0x3f]
    %886 = vrot.lane.b32.xlu0 %v746, 32
    %v887 = vpop.permute.xlu0 %886
    %888 = vrot.lane.b32.xlu0 %v759, 32
    %v889 = vpop.permute.xlu0 %888
    %890 = vrot.lane.b32.xlu0 %v772, 32
    %v891 = vpop.permute.xlu0 %890
    %v892 = vsel %vm389, %v887, %v889
    %v893 = vsel %vm389, %v889, %v891
    %v895 = vsel %vm821, %v882, 0
    %v898 = vsel %vm821, %v883, 0
    %v900 = vsel %vm828, %v892, 0
    %v902 = vsel %vm828, %v893, 0
    %904 = vmatpush.msra.mxu0 0.0
    %905 = vmatpush.msra.mxu0 0.0
    %906 = vmatpush.msra.mxu0 0.0
    %907 = vmatpush.msra.mxu0 0.0
    %908 = vmatpush.msra.mxu0 0.0
    %909 = vmatpush.msra.mxu0 0.0
    %910 = vmatpush.msra.mxu0 0.0
    %911 = vmatpush.msra.mxu0 0.0
    %912 = vmatpush.msra.mxu0 0.0
    %913 = vmatpush.msra.mxu0 0.0
    %914 = vmatpush.msra.mxu0 0.0
    %915 = vmatpush.msra.mxu0 0.0
    %916 = vmatpush.msra.mxu0 0.0
    %917 = vmatpush.msra.mxu0 0.0
    %918 = vmatpush.msra.mxu0 0.0
    %919 = vmatpush.msra.mxu0 %v900
    %920 = vmatmul.f32.gmra.mxu0 %v895
    %v921 = vpop.f32.mrf.mxu0
    %v922 = vadd.f32 0.0, %v921
    %923 = vmatmul.f32.gmra.mxu0 %v898
    %v924 = vpop.f32.mrf.mxu0
    %v925 = vadd.f32 0.0, %v924
    %926 = vdwg.mxu0
    %927 = vmatpush.msra.mxu0 0.0
    %928 = vmatpush.msra.mxu0 0.0
    %929 = vmatpush.msra.mxu0 0.0
    %930 = vmatpush.msra.mxu0 0.0
    %931 = vmatpush.msra.mxu0 0.0
    %932 = vmatpush.msra.mxu0 0.0
    %933 = vmatpush.msra.mxu0 0.0
    %934 = vmatpush.msra.mxu0 0.0
    %935 = vmatpush.msra.mxu0 0.0
    %936 = vmatpush.msra.mxu0 0.0
    %937 = vmatpush.msra.mxu0 0.0
    %938 = vmatpush.msra.mxu0 0.0
    %939 = vmatpush.msra.mxu0 0.0
    %940 = vmatpush.msra.mxu0 0.0
    %941 = vmatpush.msra.mxu0 0.0
    %942 = vmatpush.msra.mxu0 %v902
    %943 = vmatmul.f32.gmra.mxu0 %v895
    %v944 = vpop.f32.mrf.mxu0
    %v945 = vadd.f32 0.0, %v944
    %946 = vmatmul.f32.gmra.mxu0 %v898
    %v947 = vpop.f32.mrf.mxu0
    %v948 = vadd.f32 0.0, %v947
    %949 = vdwg.mxu0
    %v950 = vadd.f32 %v853, %v922
    %v951 = vadd.f32 %v876, %v945
    %v952 = vadd.f32 %v856, %v925
    %v953 = vadd.f32 %v879, %v948
    %s954 = scalar_lea.vmem %s10, 32
    %v955 = vld [vmem:[%s954] sm:$0xff]
    %v956 = vld [vmem:[%s954 + $0x8] sm:$0x3f]
    %959 = vrot.lane.b32.xlu0 %v772, 64
    %v960 = vpop.permute.xlu0 %959
    %961 = vrot.lane.b32.xlu0 %v785, 64
    %v962 = vpop.permute.xlu0 %961
    %963 = vrot.lane.b32.xlu0 %v798, 64
    %v964 = vpop.permute.xlu0 %963
    %v965 = vsel %vm150, %v960, %v962
    %v966 = vsel %vm150, %v962, %v964
    %v968 = vsel %vm821, %v955, 0
    %v971 = vsel %vm821, %v956, 0
    %v973 = vsel %vm828, %v965, 0
    %v975 = vsel %vm828, %v966, 0
    %977 = vmatpush.msra.mxu0 0.0
    %978 = vmatpush.msra.mxu0 0.0
    %979 = vmatpush.msra.mxu0 0.0
    %980 = vmatpush.msra.mxu0 0.0
    %981 = vmatpush.msra.mxu0 0.0
    %982 = vmatpush.msra.mxu0 0.0
    %983 = vmatpush.msra.mxu0 0.0
    %984 = vmatpush.msra.mxu0 0.0
    %985 = vmatpush.msra.mxu0 0.0
    %986 = vmatpush.msra.mxu0 0.0
    %987 = vmatpush.msra.mxu0 0.0
    %988 = vmatpush.msra.mxu0 0.0
    %989 = vmatpush.msra.mxu0 0.0
    %990 = vmatpush.msra.mxu0 0.0
    %991 = vmatpush.msra.mxu0 0.0
    %992 = vmatpush.msra.mxu0 %v973
    %993 = vmatmul.f32.gmra.mxu0 %v968
    %v994 = vpop.f32.mrf.mxu0
    %v995 = vadd.f32 0.0, %v994
    %996 = vmatmul.f32.gmra.mxu0 %v971
    %v997 = vpop.f32.mrf.mxu0
    %v998 = vadd.f32 0.0, %v997
    %999 = vdwg.mxu0
    %1000 = vmatpush.msra.mxu0 0.0
    %1001 = vmatpush.msra.mxu0 0.0
    %1002 = vmatpush.msra.mxu0 0.0
    %1003 = vmatpush.msra.mxu0 0.0
    %1004 = vmatpush.msra.mxu0 0.0
    %1005 = vmatpush.msra.mxu0 0.0
    %1006 = vmatpush.msra.mxu0 0.0
    %1007 = vmatpush.msra.mxu0 0.0
    %1008 = vmatpush.msra.mxu0 0.0
    %1009 = vmatpush.msra.mxu0 0.0
    %1010 = vmatpush.msra.mxu0 0.0
    %1011 = vmatpush.msra.mxu0 0.0
    %1012 = vmatpush.msra.mxu0 0.0
    %1013 = vmatpush.msra.mxu0 0.0
    %1014 = vmatpush.msra.mxu0 0.0
    %1015 = vmatpush.msra.mxu0 %v975
    %1016 = vmatmul.f32.gmra.mxu0 %v968
    %v1017 = vpop.f32.mrf.mxu0
    %v1018 = vadd.f32 0.0, %v1017
    %1019 = vmatmul.f32.gmra.mxu0 %v971
    %v1020 = vpop.f32.mrf.mxu0
    %v1021 = vadd.f32 0.0, %v1020
    %1022 = vdwg.mxu0
    %v1023 = vadd.f32 %v950, %v995
    %v1024 = vadd.f32 %v951, %v1018
    %v1025 = vadd.f32 %v952, %v998
    %v1026 = vadd.f32 %v953, %v1021
    %s1027 = scalar_lea.vmem %s10, 48
    %v1028 = vld [vmem:[%s1027] sm:$0xff]
    %v1029 = vld [vmem:[%s1027 + $0x8] sm:$0x3f]
    %1031 = vrot.lane.b32.xlu0 %v798, 96
    %v1032 = vpop.permute.xlu0 %1031
    %1033 = vrot.lane.b32.xlu0 %v811, 96
    %v1034 = vpop.permute.xlu0 %1033
    %v1035 = vsel %vm719, %v1032, %v1034
    %v1037 = vsel %vm821, %v1028, 0
    %v1040 = vsel %vm821, %v1029, 0
    %v1042 = vsel %vm828, %v1035, 0
    %v1044 = vsel %vm828, %v1034, 0
    %1046 = vmatpush.msra.mxu0 0.0
    %1047 = vmatpush.msra.mxu0 0.0
    %1048 = vmatpush.msra.mxu0 0.0
    %1049 = vmatpush.msra.mxu0 0.0
    %1050 = vmatpush.msra.mxu0 0.0
    %1051 = vmatpush.msra.mxu0 0.0
    %1052 = vmatpush.msra.mxu0 0.0
    %1053 = vmatpush.msra.mxu0 0.0
    %1054 = vmatpush.msra.mxu0 0.0
    %1055 = vmatpush.msra.mxu0 0.0
    %1056 = vmatpush.msra.mxu0 0.0
    %1057 = vmatpush.msra.mxu0 0.0
    %1058 = vmatpush.msra.mxu0 0.0
    %1059 = vmatpush.msra.mxu0 0.0
    %1060 = vmatpush.msra.mxu0 0.0
    %1061 = vmatpush.msra.mxu0 %v1042
    %1062 = vmatmul.f32.gmra.mxu0 %v1037
    %v1063 = vpop.f32.mrf.mxu0
    %v1064 = vadd.f32 0.0, %v1063
    %1065 = vmatmul.f32.gmra.mxu0 %v1040
    %v1066 = vpop.f32.mrf.mxu0
    %v1067 = vadd.f32 0.0, %v1066
    %1068 = vdwg.mxu0
    %1069 = vmatpush.msra.mxu0 0.0
    %1070 = vmatpush.msra.mxu0 0.0
    %1071 = vmatpush.msra.mxu0 0.0
    %1072 = vmatpush.msra.mxu0 0.0
    %1073 = vmatpush.msra.mxu0 0.0
    %1074 = vmatpush.msra.mxu0 0.0
    %1075 = vmatpush.msra.mxu0 0.0
    %1076 = vmatpush.msra.mxu0 0.0
    %1077 = vmatpush.msra.mxu0 0.0
    %1078 = vmatpush.msra.mxu0 0.0
    %1079 = vmatpush.msra.mxu0 0.0
    %1080 = vmatpush.msra.mxu0 0.0
    %1081 = vmatpush.msra.mxu0 0.0
    %1082 = vmatpush.msra.mxu0 0.0
    %1083 = vmatpush.msra.mxu0 0.0
    %1084 = vmatpush.msra.mxu0 %v1044
    %1085 = vmatmul.f32.gmra.mxu0 %v1037
    %v1086 = vpop.f32.mrf.mxu0
    %v1087 = vadd.f32 0.0, %v1086
    %1088 = vmatmul.f32.gmra.mxu0 %v1040
    %v1089 = vpop.f32.mrf.mxu0
    %v1090 = vadd.f32 0.0, %v1089
    %1091 = vdwg.mxu0
    %v1092 = vadd.f32 %v1023, %v1064
    %v1093 = vadd.f32 %v1024, %v1087
    %v1094 = vadd.f32 %v1025, %v1067
    %v1095 = vadd.f32 %v1026, %v1090
    %v1096 = vld [vmem:[%s15] sm:$0xff]
    %v1097 = vld [vmem:[%s15 + $0x8] sm:$0xff]
    %v1098 = vld [vmem:[%s15 + $0x10] sm:$0xff]
    %v1099 = vld [vmem:[%s15 + $0x18] sm:$0xff]
    %v1100 = vld [vmem:[%s15 + $0x20] sm:$0xff]
    %v1101 = vld [vmem:[%s15 + $0x28] sm:$0xff]
    %v1102 = vld [vmem:[%s15 + $0x30] sm:$0xff]
    %v1103 = vld [vmem:[%s15 + $0x38] sm:$0xff]
    %v1104 = vld [vmem:[%s15 + $0x40] sm:$0xff]
    %v1105 = vld [vmem:[%s15 + $0x48] sm:$0xff]
    %v1106 = vld [vmem:[%s15 + $0x50] sm:$0xff]
    %v1107 = vld [vmem:[%s15 + $0x58] sm:$0xff]
    %v1108 = vld [vmem:[%s15 + $0x60] sm:$0xff]
    %v1109 = vld [vmem:[%s15 + $0x68] sm:$0xff]
    %v1110 = vld [vmem:[%s15 + $0x70] sm:$0xff]
    %v1111 = vld [vmem:[%s15 + $0x78] sm:$0xff]
    %v1112 = vld [vmem:[%s15 + $0x80] sm:$0xff]
    %v1113 = vld [vmem:[%s15 + $0x88] sm:$0xff]
    %v1114 = vld [vmem:[%s15 + $0x90] sm:$0xff]
    %v1115 = vld [vmem:[%s15 + $0x98] sm:$0xff]
    %v1116 = vld [vmem:[%s15 + $0xa0] sm:$0xff]
    %v1117 = vld [vmem:[%s15 + $0xa8] sm:$0xff]
    %v1118 = vld [vmem:[%s15 + $0xb0] sm:$0xff]
    %v1119 = vld [vmem:[%s15 + $0xb8] sm:$0xff]
    %v1120 = vld [vmem:[%s15 + $0xc0] sm:$0xff]
    %v1121 = vld [vmem:[%s15 + $0xc8] sm:$0xff]
    %v1122 = vld [vmem:[%s15 + $0xd0] sm:$0xff]
    %v1123 = vld [vmem:[%s15 + $0xd8] sm:$0xff]
    %v1124 = vld [vmem:[%s16] sm:$0xff]
    %v1125 = vld [vmem:[%s16 + $0x8] sm:$0xff]
    %v1126 = vld [vmem:[%s16 + $0x20] sm:$0xff]
    %v1127 = vld [vmem:[%s16 + $0x28] sm:$0xff]
    %v1128 = vld [vmem:[%s16 + $0x40] sm:$0xff]
    %v1129 = vld [vmem:[%s16 + $0x48] sm:$0xff]
    %v1130 = vld [vmem:[%s16 + $0x60] sm:$0xff]
    %v1131 = vld [vmem:[%s16 + $0x68] sm:$0xff]
    %v1132 = vld [vmem:[#allocation4 + $0xc] sm:$0x3]
    %v1133 = vld [vmem:[#allocation4 + $0xe] sm:$0x3]
    %vm1134 = vcmp.gt.f32.partialorder %v1092, 0.0
    %vm1135 = vcmp.gt.f32.partialorder %v1093, 0.0
    %vm1136 = vcmp.gt.f32.partialorder %v1094, 0.0
    %vm1137 = vcmp.gt.f32.partialorder %v1095, 0.0
    %v1138 = vmul.f32 %v1092, 0.01
    %v1139 = vmul.f32 %v1093, 0.01
    %v1140 = vmul.f32 %v1094, 0.01
    %v1141 = vmul.f32 %v1095, 0.01
    %v1142 = vsel %vm1134, %v1092, %v1138
    %v1143 = vsel %vm1135, %v1093, %v1139
    %v1144 = vsel %vm1136, %v1094, %v1140
    %v1145 = vsel %vm1137, %v1095, %v1141
    %v1146 = vsel %vm828, %v1144, 0.0
    %v1147 = vadd.f32 %v1142, %v1146
    %v1148 = vrot.slane %v1147, 4
    %v1149 = vadd.f32 %v1147, %v1148
    %v1150 = vrot.slane %v1149, 2
    %v1151 = vadd.f32 %v1149, %v1150
    %v1152 = vrot.slane %v1151, 1
    %v1153 = vadd.f32 %v1151, %v1152
    %v1154 = vsel %vm719, %v1143, 0.0
    %vm1155 = vcmask 783360
    %v1156 = vsel %vm1155, %v1145, 0.0
    %v1157 = vadd.f32 %v1154, %v1156
    %v1158 = vrot.slane %v1157, 4
    %v1159 = vadd.f32 %v1157, %v1158
    %v1160 = vrot.slane %v1159, 2
    %v1161 = vadd.f32 %v1159, %v1160
    %v1162 = vrot.slane %v1161, 1
    %v1163 = vadd.f32 %v1161, %v1162
    %v1165 = vsel %vm719, %v1163, 0
    %1167 = vmatpush.msra.mxu0 %v1111
    %1168 = vmatpush.msra.mxu0 %v1110
    %1169 = vmatpush.msra.mxu0 %v1109
    %1170 = vmatpush.msra.mxu0 %v1108
    %1171 = vmatpush.msra.mxu0 %v1107
    %1172 = vmatpush.msra.mxu0 %v1106
    %1173 = vmatpush.msra.mxu0 %v1105
    %1174 = vmatpush.msra.mxu0 %v1104
    %1175 = vmatpush.msra.mxu0 %v1103
    %1176 = vmatpush.msra.mxu0 %v1102
    %1177 = vmatpush.msra.mxu0 %v1101
    %1178 = vmatpush.msra.mxu0 %v1100
    %1179 = vmatpush.msra.mxu0 %v1099
    %1180 = vmatpush.msra.mxu0 %v1098
    %1181 = vmatpush.msra.mxu0 %v1097
    %1182 = vmatpush.msra.mxu0 %v1096
    %1183 = vmatmul.f32.gmra.mxu0 %v1153
    %v1184 = vpop.f32.mrf.mxu0
    %v1185 = vadd.f32 0.0, %v1184
    %1186 = vdwg.mxu0
    %1187 = vmatpush.msra.mxu0 0.0
    %1188 = vmatpush.msra.mxu0 0.0
    %1189 = vmatpush.msra.mxu0 0.0
    %1190 = vmatpush.msra.mxu0 0.0
    %1191 = vmatpush.msra.mxu0 %v1123
    %1192 = vmatpush.msra.mxu0 %v1122
    %1193 = vmatpush.msra.mxu0 %v1121
    %1194 = vmatpush.msra.mxu0 %v1120
    %1195 = vmatpush.msra.mxu0 %v1119
    %1196 = vmatpush.msra.mxu0 %v1118
    %1197 = vmatpush.msra.mxu0 %v1117
    %1198 = vmatpush.msra.mxu0 %v1116
    %1199 = vmatpush.msra.mxu0 %v1115
    %1200 = vmatpush.msra.mxu0 %v1114
    %1201 = vmatpush.msra.mxu0 %v1113
    %1202 = vmatpush.msra.mxu0 %v1112
    %1203 = vmatmul.f32.gmra.mxu0 %v1165
    %v1204 = vpop.f32.mrf.mxu0
    %v1205 = vadd.f32 %v1185, %v1204
    %1206 = vdwg.mxu0
    %v1207 = vmul.f32 %v1205, 0.010204081
    %v1209 = vsel %vm389, %v1207, 0
    %1211 = vmatpush.msra.mxu0 0.0
    %1212 = vmatpush.msra.mxu0 0.0
    %1213 = vmatpush.msra.mxu0 0.0
    %1214 = vmatpush.msra.mxu0 0.0
    %1215 = vmatpush.msra.mxu0 0.0
    %1216 = vmatpush.msra.mxu0 0.0
    %1217 = vmatpush.msra.mxu0 0.0
    %1218 = vmatpush.msra.mxu0 0.0
    %1219 = vmatpush.msra.mxu0 0.0
    %1220 = vmatpush.msra.mxu0 0.0
    %1221 = vmatpush.msra.mxu0 0.0
    %1222 = vmatpush.msra.mxu0 0.0
    %1223 = vmatpush.msra.mxu0 %v1130
    %1224 = vmatpush.msra.mxu0 %v1128
    %1225 = vmatpush.msra.mxu0 %v1126
    %1226 = vmatpush.msra.mxu0 %v1124
    %1227 = vmatmul.f32.gmra.mxu0 %v1209
    %v1228 = vpop.f32.mrf.mxu0
    %v1229 = vadd.f32 0.0, %v1228
    %1230 = vdwg.mxu0
    %1231 = vmatpush.msra.mxu0 0.0
    %1232 = vmatpush.msra.mxu0 0.0
    %1233 = vmatpush.msra.mxu0 0.0
    %1234 = vmatpush.msra.mxu0 0.0
    %1235 = vmatpush.msra.mxu0 0.0
    %1236 = vmatpush.msra.mxu0 0.0
    %1237 = vmatpush.msra.mxu0 0.0
    %1238 = vmatpush.msra.mxu0 0.0
    %1239 = vmatpush.msra.mxu0 0.0
    %1240 = vmatpush.msra.mxu0 0.0
    %1241 = vmatpush.msra.mxu0 0.0
    %1242 = vmatpush.msra.mxu0 0.0
    %1243 = vmatpush.msra.mxu0 %v1131
    %1244 = vmatpush.msra.mxu0 %v1129
    %1245 = vmatpush.msra.mxu0 %v1127
    %1246 = vmatpush.msra.mxu0 %v1125
    %1247 = vmatmul.f32.gmra.mxu0 %v1209
    %v1248 = vpop.f32.mrf.mxu0
    %v1249 = vadd.f32 0.0, %v1248
    %1250 = vdwg.mxu0
    %v1251 = vperm.slane %v1229, 0
    %v1252 = vperm.slane %v1249, 0
    %v1253 = vsub.f32 %v1142, %v1251
    %v1254 = vsub.f32 %v1143, %v1252
    %v1255 = vsub.f32 %v1144, %v1251
    %v1256 = vsub.f32 %v1145, %v1252
    %v1257 = vmul.f32 %v1253, %v1253
    %v1258 = vmul.f32 %v1254, %v1254
    %v1259 = vmul.f32 %v1255, %v1255
    %v1260 = vmul.f32 %v1256, %v1256
    %v1261 = vsel %vm828, %v1259, 0.0
    %v1262 = vadd.f32 %v1257, %v1261
    %v1263 = vrot.slane %v1262, 4
    %v1264 = vadd.f32 %v1262, %v1263
    %v1265 = vrot.slane %v1264, 2
    %v1266 = vadd.f32 %v1264, %v1265
    %v1267 = vrot.slane %v1266, 1
    %v1268 = vadd.f32 %v1266, %v1267
    %v1269 = vsel %vm719, %v1258, 0.0
    %v1270 = vsel %vm1155, %v1260, 0.0
    %v1271 = vadd.f32 %v1269, %v1270
    %v1272 = vrot.slane %v1271, 4
    %v1273 = vadd.f32 %v1271, %v1272
    %v1274 = vrot.slane %v1273, 2
    %v1275 = vadd.f32 %v1273, %v1274
    %v1276 = vrot.slane %v1275, 1
    %v1277 = vadd.f32 %v1275, %v1276
    %v1279 = vsel %vm719, %v1277, 0
    %1281 = vmatpush.msra.mxu0 %v1111
    %1282 = vmatpush.msra.mxu0 %v1110
    %1283 = vmatpush.msra.mxu0 %v1109
    %1284 = vmatpush.msra.mxu0 %v1108
    %1285 = vmatpush.msra.mxu0 %v1107
    %1286 = vmatpush.msra.mxu0 %v1106
    %1287 = vmatpush.msra.mxu0 %v1105
    %1288 = vmatpush.msra.mxu0 %v1104
    %1289 = vmatpush.msra.mxu0 %v1103
    %1290 = vmatpush.msra.mxu0 %v1102
    %1291 = vmatpush.msra.mxu0 %v1101
    %1292 = vmatpush.msra.mxu0 %v1100
    %1293 = vmatpush.msra.mxu0 %v1099
    %1294 = vmatpush.msra.mxu0 %v1098
    %1295 = vmatpush.msra.mxu0 %v1097
    %1296 = vmatpush.msra.mxu0 %v1096
    %1297 = vmatmul.f32.gmra.mxu0 %v1268
    %v1298 = vpop.f32.mrf.mxu0
    %v1299 = vadd.f32 0.0, %v1298
    %1300 = vdwg.mxu0
    %1301 = vmatpush.msra.mxu0 0.0
    %1302 = vmatpush.msra.mxu0 0.0
    %1303 = vmatpush.msra.mxu0 0.0
    %1304 = vmatpush.msra.mxu0 0.0
    %1305 = vmatpush.msra.mxu0 %v1123
    %1306 = vmatpush.msra.mxu0 %v1122
    %1307 = vmatpush.msra.mxu0 %v1121
    %1308 = vmatpush.msra.mxu0 %v1120
    %1309 = vmatpush.msra.mxu0 %v1119
    %1310 = vmatpush.msra.mxu0 %v1118
    %1311 = vmatpush.msra.mxu0 %v1117
    %1312 = vmatpush.msra.mxu0 %v1116
    %1313 = vmatpush.msra.mxu0 %v1115
    %1314 = vmatpush.msra.mxu0 %v1114
    %1315 = vmatpush.msra.mxu0 %v1113
    %1316 = vmatpush.msra.mxu0 %v1112
    %1317 = vmatmul.f32.gmra.mxu0 %v1279
    %v1318 = vpop.f32.mrf.mxu0
    %v1319 = vadd.f32 %v1299, %v1318
    %1320 = vdwg.mxu0
    %v1321 = vmul.f32 %v1319, 0.010204081
    %v1323 = vsel %vm389, %v1321, 0
    %1325 = vmatpush.msra.mxu0 0.0
    %1326 = vmatpush.msra.mxu0 0.0
    %1327 = vmatpush.msra.mxu0 0.0
    %1328 = vmatpush.msra.mxu0 0.0
    %1329 = vmatpush.msra.mxu0 0.0
    %1330 = vmatpush.msra.mxu0 0.0
    %1331 = vmatpush.msra.mxu0 0.0
    %1332 = vmatpush.msra.mxu0 0.0
    %1333 = vmatpush.msra.mxu0 0.0
    %1334 = vmatpush.msra.mxu0 0.0
    %1335 = vmatpush.msra.mxu0 0.0
    %1336 = vmatpush.msra.mxu0 0.0
    %1337 = vmatpush.msra.mxu0 %v1130
    %1338 = vmatpush.msra.mxu0 %v1128
    %1339 = vmatpush.msra.mxu0 %v1126
    %1340 = vmatpush.msra.mxu0 %v1124
    %1341 = vmatmul.f32.gmra.mxu0 %v1323
    %v1342 = vpop.f32.mrf.mxu0
    %v1343 = vadd.f32 1e-05, %v1342
    %1344 = vdwg.mxu0
    %1345 = vmatpush.msra.mxu0 0.0
    %1346 = vmatpush.msra.mxu0 0.0
    %1347 = vmatpush.msra.mxu0 0.0
    %1348 = vmatpush.msra.mxu0 0.0
    %1349 = vmatpush.msra.mxu0 0.0
    %1350 = vmatpush.msra.mxu0 0.0
    %1351 = vmatpush.msra.mxu0 0.0
    %1352 = vmatpush.msra.mxu0 0.0
    %1353 = vmatpush.msra.mxu0 0.0
    %1354 = vmatpush.msra.mxu0 0.0
    %1355 = vmatpush.msra.mxu0 0.0
    %1356 = vmatpush.msra.mxu0 0.0
    %1357 = vmatpush.msra.mxu0 %v1131
    %1358 = vmatpush.msra.mxu0 %v1129
    %1359 = vmatpush.msra.mxu0 %v1127
    %1360 = vmatpush.msra.mxu0 %v1125
    %1361 = vmatmul.f32.gmra.mxu0 %v1323
    %v1362 = vpop.f32.mrf.mxu0
    %v1363 = vadd.f32 1e-05, %v1362
    %1364 = vdwg.mxu0
    %v1365 = vrsqrt.pop %v1343
    %v1366 = vmul.f32 %v1365, %v1343
    %v1367 = vmul.f32 %v1366, %v1365
    %v1368 = vmul.f32 0.5, %v1367
    %v1369 = vsub.f32 1.5, %v1368
    %v1370 = vmul.f32 %v1365, %v1369
    %vm1371 = vweird.f32 %v1343
    %vm1372 = vweird.f32 %v1365
    %vm1373 = vmor %vm1371, %vm1372
    %v1374 = vsel %vm1373, %v1365, %v1370
    %v1375 = vrsqrt.pop %v1363
    %v1376 = vmul.f32 %v1375, %v1363
    %v1377 = vmul.f32 %v1376, %v1375
    %v1378 = vmul.f32 0.5, %v1377
    %v1379 = vsub.f32 1.5, %v1378
    %v1380 = vmul.f32 %v1375, %v1379
    %vm1381 = vweird.f32 %v1363
    %vm1382 = vweird.f32 %v1375
    %vm1383 = vmor %vm1381, %vm1382
    %v1384 = vsel %vm1383, %v1375, %v1380
    %v1385 = vperm.slane %v1374, 0
    %v1386 = vperm.slane %v1384, 0
    %v1387 = vmul.f32 %v1253, %v1385
    %v1388 = vmul.f32 %v1254, %v1386
    %v1389 = vmul.f32 %v1255, %v1385
    %v1390 = vmul.f32 %v1256, %v1386
    %v1392 = vperm.slane %v1132, 0
    %v1393 = vperm.slane %v1132, 1
    %v1396 = vmul.f32 %v1387, %v1392
    %v1397 = vmul.f32 %v1388, %v1393
    %v1398 = vmul.f32 %v1389, %v1392
    %v1399 = vmul.f32 %v1390, %v1393
    %v1401 = vperm.slane %v1133, 0
    %v1402 = vperm.slane %v1133, 1
    %v1405 = vadd.f32 %v1396, %v1401
    %v1406 = vadd.f32 %v1397, %v1402
    %v1407 = vadd.f32 %v1398, %v1401
    %v1408 = vadd.f32 %v1399, %v1402
    %v1409 = vld [vmem:[#allocation4 + $0x7] sm:$0xf]
    %v1410 = vpack.c.bf16 %v1407, %v1405
    %v1411 = vpack.c.bf16 %v1408, %v1406
    %v1412 = vld [vmem:[#allocation6] sm:$0xff]
    %v1413 = vld [vmem:[#allocation6 + $0x8] sm:$0xff]
    %v1414 = vld [vmem:[#allocation6 + $0x10] sm:$0xff]
    %v1415 = vld [vmem:[#allocation6 + $0x18] sm:$0xff]
    %v1416 = vld [vmem:[#allocation6 + $0x20] sm:$0xff]
    %v1417 = vld [vmem:[#allocation6 + $0x28] sm:$0xff]
    %v1418 = vld [vmem:[#allocation6 + $0x30] sm:$0xff]
    %v1419 = vld [vmem:[#allocation6 + $0x38] sm:$0xff]
    %v1420 = vld [vmem:[#allocation6 + $0x40] sm:$0xff]
    %v1421 = vld [vmem:[#allocation6 + $0x48] sm:$0xff]
    %v1422 = vld [vmem:[#allocation6 + $0x50] sm:$0xff]
    %v1423 = vld [vmem:[#allocation6 + $0x58] sm:$0xff]
    %v1424 = vld [vmem:[#allocation6 + $0x60] sm:$0xff]
    %v1425 = vld [vmem:[#allocation6 + $0x68] sm:$0xff]
    %v1426 = vld [vmem:[#allocation6 + $0x70] sm:$0xff]
    %v1427 = vld [vmem:[#allocation6 + $0x78] sm:$0xff]
    %v1428 = vld [vmem:[#allocation6 + $0x80] sm:$0xff]
    %v1429 = vld [vmem:[#allocation6 + $0x88] sm:$0xff]
    %v1430 = vld [vmem:[#allocation6 + $0x90] sm:$0xff]
    %v1431 = vld [vmem:[#allocation6 + $0x98] sm:$0xff]
    %v1432 = vld [vmem:[#allocation6 + $0xa0] sm:$0xff]
    %v1433 = vld [vmem:[#allocation6 + $0xa8] sm:$0xff]
    %v1434 = vld [vmem:[#allocation6 + $0xb0] sm:$0xff]
    %v1435 = vld [vmem:[#allocation6 + $0xb8] sm:$0xff]
    %v1436 = vld [vmem:[#allocation6 + $0xc0] sm:$0xff]
    %v1437 = vld [vmem:[#allocation6 + $0xc8] sm:$0xff]
    %v1438 = vld [vmem:[#allocation6 + $0xd0] sm:$0xff]
    %v1439 = vld [vmem:[#allocation6 + $0xd8] sm:$0xff]
    %v1440 = vld [vmem:[#allocation6 + $0xe0] sm:$0xff]
    %v1441 = vld [vmem:[#allocation6 + $0xe8] sm:$0xff]
    %v1442 = vld [vmem:[#allocation6 + $0xf0] sm:$0xff]
    %v1443 = vld [vmem:[#allocation6 + $0xf8] sm:$0xff]
    %v1444 = vld [vmem:[#allocation6 + $0x100] sm:$0xff]
    %v1445 = vld [vmem:[#allocation6 + $0x108] sm:$0xff]
    %v1446 = vld [vmem:[#allocation6 + $0x110] sm:$0xff]
    %v1447 = vld [vmem:[#allocation6 + $0x118] sm:$0xff]
    %v1448 = vld [vmem:[#allocation6 + $0x120] sm:$0xff]
    %v1449 = vld [vmem:[#allocation6 + $0x128] sm:$0xff]
    %v1450 = vld [vmem:[#allocation6 + $0x130] sm:$0xff]
    %v1451 = vld [vmem:[#allocation6 + $0x138] sm:$0xff]
    %v1452 = vld [vmem:[#allocation6 + $0x140] sm:$0xff]
    %v1453 = vld [vmem:[#allocation6 + $0x148] sm:$0xff]
    %v1454 = vld [vmem:[#allocation6 + $0x150] sm:$0xff]
    %v1455 = vld [vmem:[#allocation6 + $0x158] sm:$0xff]
    %v1456 = vld [vmem:[#allocation6 + $0x160] sm:$0xff]
    %v1457 = vld [vmem:[#allocation6 + $0x168] sm:$0xff]
    %v1458 = vld [vmem:[#allocation6 + $0x170] sm:$0xff]
    %v1459 = vld [vmem:[#allocation6 + $0x178] sm:$0xff]
    %v1460 = vld [vmem:[#allocation6 + $0x180] sm:$0xff]
    %v1461 = vld [vmem:[#allocation6 + $0x188] sm:$0xff]
    %v1462 = vld [vmem:[#allocation6 + $0x190] sm:$0xff]
    %v1463 = vld [vmem:[#allocation6 + $0x198] sm:$0xff]
    %v1464 = vld [vmem:[#allocation6 + $0x1a0] sm:$0xff]
    %v1465 = vld [vmem:[#allocation6 + $0x1a8] sm:$0xff]
    %v1466 = vld [vmem:[#allocation6 + $0x1b0] sm:$0xff]
    %v1467 = vld [vmem:[#allocation6 + $0x1b8] sm:$0xff]
    %v1468 = vld [vmem:[#allocation6 + $0x1c0] sm:$0xff]
    %v1469 = vld [vmem:[#allocation6 + $0x1c8] sm:$0xff]
    %v1470 = vld [vmem:[#allocation6 + $0x1d0] sm:$0xff]
    %v1471 = vld [vmem:[#allocation6 + $0x1d8] sm:$0xff]
    %v1472 = vld [vmem:[#allocation6 + $0x1e0] sm:$0xff]
    %v1473 = vld [vmem:[#allocation6 + $0x1e8] sm:$0xff]
    %v1474 = vld [vmem:[#allocation6 + $0x1f0] sm:$0xff]
    %v1475 = vld [vmem:[#allocation6 + $0x1f8] sm:$0xff]
    %v1476 = vld [vmem:[#allocation6 + $0x200] sm:$0xff]
    %v1477 = vld [vmem:[#allocation6 + $0x208] sm:$0xff]
    %v1478 = vld [vmem:[#allocation6 + $0x210] sm:$0xff]
    %v1479 = vld [vmem:[#allocation6 + $0x218] sm:$0xff]
    %v1480 = vld [vmem:[#allocation6 + $0x220] sm:$0xff]
    %v1481 = vld [vmem:[#allocation6 + $0x228] sm:$0xff]
    %v1482 = vld [vmem:[#allocation6 + $0x230] sm:$0xff]
    %v1483 = vld [vmem:[#allocation6 + $0x238] sm:$0xff]
    %v1484 = vld [vmem:[#allocation6 + $0x240] sm:$0xff]
    %v1485 = vld [vmem:[#allocation6 + $0x248] sm:$0xff]
    %v1486 = vld [vmem:[#allocation6 + $0x250] sm:$0xff]
    %v1487 = vld [vmem:[#allocation6 + $0x258] sm:$0xff]
    %v1488 = vld [vmem:[#allocation6 + $0x260] sm:$0xff]
    %v1489 = vld [vmem:[#allocation6 + $0x268] sm:$0xff]
    %v1490 = vld [vmem:[#allocation6 + $0x270] sm:$0xff]
    %v1491 = vld [vmem:[#allocation6 + $0x278] sm:$0xff]
    %v1492 = vld [vmem:[#allocation6 + $0x280] sm:$0xff]
    %v1493 = vld [vmem:[#allocation6 + $0x288] sm:$0xff]
    %v1494 = vld [vmem:[#allocation6 + $0x290] sm:$0xff]
    %v1495 = vld [vmem:[#allocation6 + $0x298] sm:$0xff]
    %v1496 = vld [vmem:[#allocation6 + $0x2a0] sm:$0xff]
    %v1497 = vld [vmem:[#allocation6 + $0x2a8] sm:$0xff]
    %v1498 = vld [vmem:[#allocation6 + $0x2b0] sm:$0xff]
    %v1499 = vld [vmem:[#allocation6 + $0x2b8] sm:$0xff]
    %v1500 = vld [vmem:[#allocation6 + $0x2c0] sm:$0xff]
    %v1501 = vld [vmem:[#allocation6 + $0x2c8] sm:$0xff]
    %v1502 = vld [vmem:[#allocation6 + $0x2d0] sm:$0xff]
    %v1503 = vld [vmem:[#allocation6 + $0x2d8] sm:$0xff]
    %v1504 = vld [vmem:[#allocation6 + $0x2e0] sm:$0xff]
    %v1505 = vld [vmem:[#allocation6 + $0x2e8] sm:$0xff]
    %v1506 = vld [vmem:[#allocation6 + $0x2f0] sm:$0xff]
    %v1507 = vld [vmem:[#allocation6 + $0x2f8] sm:$0xff]
    %v1508 = vld [vmem:[#allocation6 + $0x300] sm:$0xff]
    %v1509 = vld [vmem:[#allocation6 + $0x308] sm:$0xff]
    %v1510 = vld [vmem:[#allocation6 + $0x310] sm:$0xff]
    %v1511 = vld [vmem:[#allocation6 + $0x318] sm:$0xff]
    %v1512 = vld [vmem:[#allocation6 + $0x320] sm:$0xff]
    %v1513 = vld [vmem:[#allocation6 + $0x328] sm:$0xff]
    %v1514 = vld [vmem:[#allocation6 + $0x330] sm:$0xff]
    %v1515 = vld [vmem:[#allocation6 + $0x338] sm:$0xff]
    %v1516 = vld [vmem:[#allocation6 + $0x340] sm:$0xff]
    %v1517 = vld [vmem:[#allocation6 + $0x348] sm:$0xff]
    %v1518 = vld [vmem:[#allocation6 + $0x350] sm:$0xff]
    %v1519 = vld [vmem:[#allocation6 + $0x358] sm:$0xff]
    %v1520 = vld [vmem:[#allocation6 + $0x360] sm:$0xff]
    %v1521 = vld [vmem:[#allocation6 + $0x368] sm:$0xff]
    %v1522 = vld [vmem:[#allocation6 + $0x370] sm:$0xff]
    %v1523 = vld [vmem:[#allocation6 + $0x378] sm:$0xff]
    %v1524 = vld [vmem:[#allocation6 + $0x380] sm:$0xff]
    %v1525 = vld [vmem:[#allocation6 + $0x388] sm:$0xff]
    %v1526 = vld [vmem:[#allocation6 + $0x390] sm:$0xff]
    %v1527 = vld [vmem:[#allocation6 + $0x398] sm:$0xff]
    %v1528 = vld [vmem:[#allocation6 + $0x3a0] sm:$0xff]
    %v1529 = vld [vmem:[#allocation6 + $0x3a8] sm:$0xff]
    %v1530 = vld [vmem:[#allocation6 + $0x3b0] sm:$0xff]
    %v1531 = vld [vmem:[#allocation6 + $0x3b8] sm:$0xff]
    %v1532 = vld [vmem:[#allocation6 + $0x3c0] sm:$0xff]
    %v1533 = vld [vmem:[#allocation6 + $0x3c8] sm:$0xff]
    %v1534 = vld [vmem:[#allocation6 + $0x3d0] sm:$0xff]
    %v1535 = vld [vmem:[#allocation6 + $0x3d8] sm:$0xff]
    %v1536 = vld [vmem:[#allocation6 + $0x3e0] sm:$0xff]
    %v1537 = vld [vmem:[#allocation6 + $0x3e8] sm:$0xff]
    %v1538 = vld [vmem:[#allocation6 + $0x3f0] sm:$0xff]
    %v1539 = vld [vmem:[#allocation6 + $0x3f8] sm:$0xff]
    %v1540 = vld [vmem:[#allocation6 + $0x400] sm:$0xff]
    %v1541 = vld [vmem:[#allocation6 + $0x408] sm:$0xff]
    %v1542 = vld [vmem:[#allocation6 + $0x410] sm:$0xff]
    %v1543 = vld [vmem:[#allocation6 + $0x418] sm:$0xff]
    %v1544 = vld [vmem:[#allocation6 + $0x420] sm:$0xff]
    %v1545 = vld [vmem:[#allocation6 + $0x428] sm:$0xff]
    %v1546 = vld [vmem:[#allocation6 + $0x430] sm:$0xff]
    %v1547 = vld [vmem:[#allocation6 + $0x438] sm:$0xff]
    %v1548 = vld [vmem:[#allocation6 + $0x440] sm:$0xff]
    %v1549 = vld [vmem:[#allocation6 + $0x448] sm:$0xff]
    %v1550 = vld [vmem:[#allocation6 + $0x450] sm:$0xff]
    %v1551 = vld [vmem:[#allocation6 + $0x458] sm:$0xff]
    %v1552 = vld [vmem:[#allocation6 + $0x460] sm:$0xff]
    %v1553 = vld [vmem:[#allocation6 + $0x468] sm:$0xff]
    %v1554 = vld [vmem:[#allocation6 + $0x470] sm:$0xff]
    %v1555 = vld [vmem:[#allocation6 + $0x478] sm:$0xff]
    %v1556 = vld [vmem:[#allocation6 + $0x480] sm:$0xff]
    %v1557 = vld [vmem:[#allocation6 + $0x488] sm:$0xff]
    %v1558 = vld [vmem:[#allocation6 + $0x490] sm:$0xff]
    %v1559 = vld [vmem:[#allocation6 + $0x498] sm:$0xff]
    %v1560 = vld [vmem:[#allocation6 + $0x4a0] sm:$0xff]
    %v1561 = vld [vmem:[#allocation6 + $0x4a8] sm:$0xff]
    %v1562 = vld [vmem:[#allocation6 + $0x4b0] sm:$0xff]
    %v1563 = vld [vmem:[#allocation6 + $0x4b8] sm:$0xff]
    %v1564 = vld [vmem:[#allocation6 + $0x4c0] sm:$0xff]
    %v1565 = vld [vmem:[#allocation6 + $0x4c8] sm:$0xff]
    %v1566 = vld [vmem:[#allocation6 + $0x4d0] sm:$0xff]
    %v1567 = vld [vmem:[#allocation6 + $0x4d8] sm:$0xff]
    %v1568 = vld [vmem:[#allocation6 + $0x4e0] sm:$0xff]
    %v1569 = vld [vmem:[#allocation6 + $0x4e8] sm:$0xff]
    %v1570 = vld [vmem:[#allocation6 + $0x4f0] sm:$0xff]
    %v1571 = vld [vmem:[#allocation6 + $0x4f8] sm:$0xff]
    %v1572 = vld [vmem:[#allocation6 + $0x500] sm:$0xff]
    %v1573 = vld [vmem:[#allocation6 + $0x508] sm:$0xff]
    %v1574 = vld [vmem:[#allocation6 + $0x510] sm:$0xff]
    %v1575 = vld [vmem:[#allocation6 + $0x518] sm:$0xff]
    %v1576 = vld [vmem:[#allocation6 + $0x520] sm:$0xff]
    %v1577 = vld [vmem:[#allocation6 + $0x528] sm:$0xff]
    %v1578 = vld [vmem:[#allocation6 + $0x530] sm:$0xff]
    %v1579 = vld [vmem:[#allocation6 + $0x538] sm:$0xff]
    %v1580 = vld [vmem:[#allocation6 + $0x540] sm:$0xff]
    %v1581 = vld [vmem:[#allocation6 + $0x548] sm:$0xff]
    %v1582 = vld [vmem:[#allocation6 + $0x550] sm:$0xff]
    %v1583 = vld [vmem:[#allocation6 + $0x558] sm:$0xff]
    %v1584 = vld [vmem:[#allocation6 + $0x560] sm:$0xff]
    %v1585 = vld [vmem:[#allocation6 + $0x568] sm:$0xff]
    %v1586 = vld [vmem:[#allocation6 + $0x570] sm:$0xff]
    %v1587 = vld [vmem:[#allocation6 + $0x578] sm:$0xff]
    %v1588 = vld [vmem:[#allocation6 + $0x580] sm:$0xff]
    %v1589 = vld [vmem:[#allocation6 + $0x588] sm:$0xff]
    %v1590 = vld [vmem:[#allocation6 + $0x590] sm:$0xff]
    %v1591 = vld [vmem:[#allocation6 + $0x598] sm:$0xff]
    %v1592 = vld [vmem:[#allocation6 + $0x5a0] sm:$0xff]
    %v1593 = vld [vmem:[#allocation6 + $0x5a8] sm:$0xff]
    %v1594 = vld [vmem:[#allocation6 + $0x5b0] sm:$0xff]
    %v1595 = vld [vmem:[#allocation6 + $0x5b8] sm:$0xff]
    %v1596 = vld [vmem:[#allocation6 + $0x5c0] sm:$0xff]
    %v1597 = vld [vmem:[#allocation6 + $0x5c8] sm:$0xff]
    %v1598 = vld [vmem:[#allocation6 + $0x5d0] sm:$0xff]
    %v1599 = vld [vmem:[#allocation6 + $0x5d8] sm:$0xff]
    %v1600 = vld [vmem:[#allocation6 + $0x5e0] sm:$0xff]
    %v1601 = vld [vmem:[#allocation6 + $0x5e8] sm:$0xff]
    %v1602 = vld [vmem:[#allocation6 + $0x5f0] sm:$0xff]
    %v1603 = vld [vmem:[#allocation6 + $0x5f8] sm:$0xff]
    %v1604 = vld [vmem:[#allocation6 + $0x600] sm:$0xff]
    %v1605 = vld [vmem:[#allocation6 + $0x608] sm:$0xff]
    %v1606 = vld [vmem:[#allocation6 + $0x610] sm:$0xff]
    %v1607 = vld [vmem:[#allocation6 + $0x618] sm:$0xff]
    %v1804 = vunpack.c.l.b16 %v1412
    %v1805 = vunpack.c.h.b16 %v1412
    %v1806 = vunpack.c.l.b16 %v1413
    %v1807 = vunpack.c.h.b16 %v1413
    %v1808 = vunpack.c.l.b16 %v1414
    %v1809 = vunpack.c.h.b16 %v1414
    %v1810 = vunpack.c.l.b16 %v1415
    %v1811 = vunpack.c.h.b16 %v1415
    %v1812 = vunpack.c.l.b16 %v1416
    %v1813 = vunpack.c.h.b16 %v1416
    %v1814 = vunpack.c.l.b16 %v1417
    %v1815 = vunpack.c.h.b16 %v1417
    %v1816 = vunpack.c.l.b16 %v1418
    %v1817 = vunpack.c.h.b16 %v1418
    %v1818 = vunpack.c.l.b16 %v1419
    %v1819 = vunpack.c.h.b16 %v1419
    %v1820 = vunpack.c.l.b16 %v1420
    %v1821 = vunpack.c.h.b16 %v1420
    %v1822 = vunpack.c.l.b16 %v1421
    %v1823 = vunpack.c.h.b16 %v1421
    %v1824 = vunpack.c.l.b16 %v1422
    %v1825 = vunpack.c.h.b16 %v1422
    %v1826 = vunpack.c.l.b16 %v1423
    %v1827 = vunpack.c.h.b16 %v1423
    %v1828 = vunpack.c.l.b16 %v1424
    %v1829 = vunpack.c.h.b16 %v1424
    %v1830 = vunpack.c.l.b16 %v1425
    %v1831 = vunpack.c.h.b16 %v1425
    %v1832 = vunpack.c.l.b16 %v1426
    %v1833 = vunpack.c.h.b16 %v1426
    %v1834 = vunpack.c.l.b16 %v1427
    %v1835 = vunpack.c.h.b16 %v1427
    %v1836 = vunpack.c.l.b16 %v1428
    %v1837 = vunpack.c.h.b16 %v1428
    %v1838 = vunpack.c.l.b16 %v1429
    %v1839 = vunpack.c.h.b16 %v1429
    %v1840 = vunpack.c.l.b16 %v1430
    %v1841 = vunpack.c.h.b16 %v1430
    %v1842 = vunpack.c.l.b16 %v1431
    %v1843 = vunpack.c.h.b16 %v1431
    %v1844 = vunpack.c.l.b16 %v1432
    %v1845 = vunpack.c.h.b16 %v1432
    %v1846 = vunpack.c.l.b16 %v1433
    %v1847 = vunpack.c.h.b16 %v1433
    %v1848 = vunpack.c.l.b16 %v1434
    %v1849 = vunpack.c.h.b16 %v1434
    %v1850 = vunpack.c.l.b16 %v1435
    %v1851 = vunpack.c.h.b16 %v1435
    %v1852 = vunpack.c.l.b16 %v1436
    %v1853 = vunpack.c.h.b16 %v1436
    %v1854 = vunpack.c.l.b16 %v1437
    %v1855 = vunpack.c.h.b16 %v1437
    %v1856 = vunpack.c.l.b16 %v1438
    %v1857 = vunpack.c.h.b16 %v1438
    %v1858 = vunpack.c.l.b16 %v1439
    %v1859 = vunpack.c.h.b16 %v1439
    %v1860 = vunpack.c.l.b16 %v1440
    %v1861 = vunpack.c.h.b16 %v1440
    %v1862 = vunpack.c.l.b16 %v1441
    %v1863 = vunpack.c.h.b16 %v1441
    %v1864 = vunpack.c.l.b16 %v1442
    %v1865 = vunpack.c.h.b16 %v1442
    %v1866 = vunpack.c.l.b16 %v1443
    %v1867 = vunpack.c.h.b16 %v1443
    %v1868 = vunpack.c.l.b16 %v1444
    %v1869 = vunpack.c.h.b16 %v1444
    %v1870 = vunpack.c.l.b16 %v1445
    %v1871 = vunpack.c.h.b16 %v1445
    %v1872 = vunpack.c.l.b16 %v1446
    %v1873 = vunpack.c.h.b16 %v1446
    %v1874 = vunpack.c.l.b16 %v1447
    %v1875 = vunpack.c.h.b16 %v1447
    %v1876 = vunpack.c.l.b16 %v1448
    %v1877 = vunpack.c.h.b16 %v1448
    %v1878 = vunpack.c.l.b16 %v1449
    %v1879 = vunpack.c.h.b16 %v1449
    %v1880 = vunpack.c.l.b16 %v1450
    %v1881 = vunpack.c.h.b16 %v1450
    %v1882 = vunpack.c.l.b16 %v1451
    %v1883 = vunpack.c.h.b16 %v1451
    %v1884 = vunpack.c.l.b16 %v1452
    %v1885 = vunpack.c.h.b16 %v1452
    %v1886 = vunpack.c.l.b16 %v1453
    %v1887 = vunpack.c.h.b16 %v1453
    %v1888 = vunpack.c.l.b16 %v1454
    %v1889 = vunpack.c.h.b16 %v1454
    %v1890 = vunpack.c.l.b16 %v1455
    %v1891 = vunpack.c.h.b16 %v1455
    %v1892 = vunpack.c.l.b16 %v1456
    %v1893 = vunpack.c.h.b16 %v1456
    %v1894 = vunpack.c.l.b16 %v1457
    %v1895 = vunpack.c.h.b16 %v1457
    %v1896 = vunpack.c.l.b16 %v1458
    %v1897 = vunpack.c.h.b16 %v1458
    %v1898 = vunpack.c.l.b16 %v1459
    %v1899 = vunpack.c.h.b16 %v1459
    %v1900 = vunpack.c.l.b16 %v1460
    %v1901 = vunpack.c.h.b16 %v1460
    %v1902 = vunpack.c.l.b16 %v1461
    %v1903 = vunpack.c.h.b16 %v1461
    %v1904 = vunpack.c.l.b16 %v1462
    %v1905 = vunpack.c.h.b16 %v1462
    %v1906 = vunpack.c.l.b16 %v1463
    %v1907 = vunpack.c.h.b16 %v1463
    %v1908 = vunpack.c.l.b16 %v1464
    %v1909 = vunpack.c.h.b16 %v1464
    %v1910 = vunpack.c.l.b16 %v1465
    %v1911 = vunpack.c.h.b16 %v1465
    %v1912 = vunpack.c.l.b16 %v1466
    %v1913 = vunpack.c.h.b16 %v1466
    %v1914 = vunpack.c.l.b16 %v1467
    %v1915 = vunpack.c.h.b16 %v1467
    %v1916 = vunpack.c.l.b16 %v1468
    %v1917 = vunpack.c.h.b16 %v1468
    %v1918 = vunpack.c.l.b16 %v1469
    %v1919 = vunpack.c.h.b16 %v1469
    %v1920 = vunpack.c.l.b16 %v1470
    %v1921 = vunpack.c.h.b16 %v1470
    %v1922 = vunpack.c.l.b16 %v1471
    %v1923 = vunpack.c.h.b16 %v1471
    %v1924 = vunpack.c.l.b16 %v1472
    %v1925 = vunpack.c.h.b16 %v1472
    %v1926 = vunpack.c.l.b16 %v1473
    %v1927 = vunpack.c.h.b16 %v1473
    %v1928 = vunpack.c.l.b16 %v1474
    %v1929 = vunpack.c.h.b16 %v1474
    %v1930 = vunpack.c.l.b16 %v1475
    %v1931 = vunpack.c.h.b16 %v1475
    %v1932 = vunpack.c.l.b16 %v1476
    %v1933 = vunpack.c.h.b16 %v1476
    %v1934 = vunpack.c.l.b16 %v1477
    %v1935 = vunpack.c.h.b16 %v1477
    %v1936 = vunpack.c.l.b16 %v1478
    %v1937 = vunpack.c.h.b16 %v1478
    %v1938 = vunpack.c.l.b16 %v1479
    %v1939 = vunpack.c.h.b16 %v1479
    %v1940 = vunpack.c.l.b16 %v1480
    %v1941 = vunpack.c.h.b16 %v1480
    %v1942 = vunpack.c.l.b16 %v1481
    %v1943 = vunpack.c.h.b16 %v1481
    %v1944 = vunpack.c.l.b16 %v1482
    %v1945 = vunpack.c.h.b16 %v1482
    %v1946 = vunpack.c.l.b16 %v1483
    %v1947 = vunpack.c.h.b16 %v1483
    %v1948 = vunpack.c.l.b16 %v1484
    %v1949 = vunpack.c.h.b16 %v1484
    %v1950 = vunpack.c.l.b16 %v1485
    %v1951 = vunpack.c.h.b16 %v1485
    %v1952 = vunpack.c.l.b16 %v1486
    %v1953 = vunpack.c.h.b16 %v1486
    %v1954 = vunpack.c.l.b16 %v1487
    %v1955 = vunpack.c.h.b16 %v1487
    %v1956 = vunpack.c.l.b16 %v1488
    %v1957 = vunpack.c.h.b16 %v1488
    %v1958 = vunpack.c.l.b16 %v1489
    %v1959 = vunpack.c.h.b16 %v1489
    %v1960 = vunpack.c.l.b16 %v1490
    %v1961 = vunpack.c.h.b16 %v1490
    %v1962 = vunpack.c.l.b16 %v1491
    %v1963 = vunpack.c.h.b16 %v1491
    %v1964 = vunpack.c.l.b16 %v1492
    %v1965 = vunpack.c.h.b16 %v1492
    %v1966 = vunpack.c.l.b16 %v1493
    %v1967 = vunpack.c.h.b16 %v1493
    %v1968 = vunpack.c.l.b16 %v1494
    %v1969 = vunpack.c.h.b16 %v1494
    %v1970 = vunpack.c.l.b16 %v1495
    %v1971 = vunpack.c.h.b16 %v1495
    %v1972 = vunpack.c.l.b16 %v1496
    %v1973 = vunpack.c.h.b16 %v1496
    %v1974 = vunpack.c.l.b16 %v1497
    %v1975 = vunpack.c.h.b16 %v1497
    %v1976 = vunpack.c.l.b16 %v1498
    %v1977 = vunpack.c.h.b16 %v1498
    %v1978 = vunpack.c.l.b16 %v1499
    %v1979 = vunpack.c.h.b16 %v1499
    %v1980 = vunpack.c.l.b16 %v1500
    %v1981 = vunpack.c.h.b16 %v1500
    %v1982 = vunpack.c.l.b16 %v1501
    %v1983 = vunpack.c.h.b16 %v1501
    %v1984 = vunpack.c.l.b16 %v1502
    %v1985 = vunpack.c.h.b16 %v1502
    %v1986 = vunpack.c.l.b16 %v1503
    %v1987 = vunpack.c.h.b16 %v1503
    %v1988 = vunpack.c.l.b16 %v1504
    %v1989 = vunpack.c.h.b16 %v1504
    %v1990 = vunpack.c.l.b16 %v1505
    %v1991 = vunpack.c.h.b16 %v1505
    %v1992 = vunpack.c.l.b16 %v1506
    %v1993 = vunpack.c.h.b16 %v1506
    %v1994 = vunpack.c.l.b16 %v1507
    %v1995 = vunpack.c.h.b16 %v1507
    %v1996 = vunpack.c.l.b16 %v1508
    %v1997 = vunpack.c.h.b16 %v1508
    %v1998 = vunpack.c.l.b16 %v1509
    %v1999 = vunpack.c.h.b16 %v1509
    %v2000 = vunpack.c.l.b16 %v1510
    %v2001 = vunpack.c.h.b16 %v1510
    %v2002 = vunpack.c.l.b16 %v1511
    %v2003 = vunpack.c.h.b16 %v1511
    %v2004 = vunpack.c.l.b16 %v1512
    %v2005 = vunpack.c.h.b16 %v1512
    %v2006 = vunpack.c.l.b16 %v1513
    %v2007 = vunpack.c.h.b16 %v1513
    %v2008 = vunpack.c.l.b16 %v1514
    %v2009 = vunpack.c.h.b16 %v1514
    %v2010 = vunpack.c.l.b16 %v1515
    %v2011 = vunpack.c.h.b16 %v1515
    %v2012 = vunpack.c.l.b16 %v1516
    %v2013 = vunpack.c.h.b16 %v1516
    %v2014 = vunpack.c.l.b16 %v1517
    %v2015 = vunpack.c.h.b16 %v1517
    %v2016 = vunpack.c.l.b16 %v1518
    %v2017 = vunpack.c.h.b16 %v1518
    %v2018 = vunpack.c.l.b16 %v1519
    %v2019 = vunpack.c.h.b16 %v1519
    %v2020 = vunpack.c.l.b16 %v1520
    %v2021 = vunpack.c.h.b16 %v1520
    %v2022 = vunpack.c.l.b16 %v1521
    %v2023 = vunpack.c.h.b16 %v1521
    %v2024 = vunpack.c.l.b16 %v1522
    %v2025 = vunpack.c.h.b16 %v1522
    %v2026 = vunpack.c.l.b16 %v1523
    %v2027 = vunpack.c.h.b16 %v1523
    %v2028 = vunpack.c.l.b16 %v1524
    %v2029 = vunpack.c.h.b16 %v1524
    %v2030 = vunpack.c.l.b16 %v1525
    %v2031 = vunpack.c.h.b16 %v1525
    %v2032 = vunpack.c.l.b16 %v1526
    %v2033 = vunpack.c.h.b16 %v1526
    %v2034 = vunpack.c.l.b16 %v1527
    %v2035 = vunpack.c.h.b16 %v1527
    %v2036 = vunpack.c.l.b16 %v1528
    %v2037 = vunpack.c.h.b16 %v1528
    %v2038 = vunpack.c.l.b16 %v1529
    %v2039 = vunpack.c.h.b16 %v1529
    %v2040 = vunpack.c.l.b16 %v1530
    %v2041 = vunpack.c.h.b16 %v1530
    %v2042 = vunpack.c.l.b16 %v1531
    %v2043 = vunpack.c.h.b16 %v1531
    %v2044 = vunpack.c.l.b16 %v1532
    %v2045 = vunpack.c.h.b16 %v1532
    %v2046 = vunpack.c.l.b16 %v1533
    %v2047 = vunpack.c.h.b16 %v1533
    %v2048 = vunpack.c.l.b16 %v1534
    %v2049 = vunpack.c.h.b16 %v1534
    %v2050 = vunpack.c.l.b16 %v1535
    %v2051 = vunpack.c.h.b16 %v1535
    %v2052 = vunpack.c.l.b16 %v1536
    %v2053 = vunpack.c.h.b16 %v1536
    %v2054 = vunpack.c.l.b16 %v1537
    %v2055 = vunpack.c.h.b16 %v1537
    %v2056 = vunpack.c.l.b16 %v1538
    %v2057 = vunpack.c.h.b16 %v1538
    %v2058 = vunpack.c.l.b16 %v1539
    %v2059 = vunpack.c.h.b16 %v1539
    %v2060 = vunpack.c.l.b16 %v1540
    %v2061 = vunpack.c.h.b16 %v1540
    %v2062 = vunpack.c.l.b16 %v1541
    %v2063 = vunpack.c.h.b16 %v1541
    %v2064 = vunpack.c.l.b16 %v1542
    %v2065 = vunpack.c.h.b16 %v1542
    %v2066 = vunpack.c.l.b16 %v1543
    %v2067 = vunpack.c.h.b16 %v1543
    %v2068 = vunpack.c.l.b16 %v1544
    %v2069 = vunpack.c.h.b16 %v1544
    %v2070 = vunpack.c.l.b16 %v1545
    %v2071 = vunpack.c.h.b16 %v1545
    %v2072 = vunpack.c.l.b16 %v1546
    %v2073 = vunpack.c.h.b16 %v1546
    %v2074 = vunpack.c.l.b16 %v1547
    %v2075 = vunpack.c.h.b16 %v1547
    %v2076 = vunpack.c.l.b16 %v1548
    %v2077 = vunpack.c.h.b16 %v1548
    %v2078 = vunpack.c.l.b16 %v1549
    %v2079 = vunpack.c.h.b16 %v1549
    %v2080 = vunpack.c.l.b16 %v1550
    %v2081 = vunpack.c.h.b16 %v1550
    %v2082 = vunpack.c.l.b16 %v1551
    %v2083 = vunpack.c.h.b16 %v1551
    %v2084 = vunpack.c.l.b16 %v1552
    %v2085 = vunpack.c.h.b16 %v1552
    %v2086 = vunpack.c.l.b16 %v1553
    %v2087 = vunpack.c.h.b16 %v1553
    %v2088 = vunpack.c.l.b16 %v1554
    %v2089 = vunpack.c.h.b16 %v1554
    %v2090 = vunpack.c.l.b16 %v1555
    %v2091 = vunpack.c.h.b16 %v1555
    %v2092 = vunpack.c.l.b16 %v1556
    %v2093 = vunpack.c.h.b16 %v1556
    %v2094 = vunpack.c.l.b16 %v1557
    %v2095 = vunpack.c.h.b16 %v1557
    %v2096 = vunpack.c.l.b16 %v1558
    %v2097 = vunpack.c.h.b16 %v1558
    %v2098 = vunpack.c.l.b16 %v1559
    %v2099 = vunpack.c.h.b16 %v1559
    %v2100 = vunpack.c.l.b16 %v1560
    %v2101 = vunpack.c.h.b16 %v1560
    %v2102 = vunpack.c.l.b16 %v1561
    %v2103 = vunpack.c.h.b16 %v1561
    %v2104 = vunpack.c.l.b16 %v1562
    %v2105 = vunpack.c.h.b16 %v1562
    %v2106 = vunpack.c.l.b16 %v1563
    %v2107 = vunpack.c.h.b16 %v1563
    %v2108 = vunpack.c.l.b16 %v1564
    %v2109 = vunpack.c.h.b16 %v1564
    %v2110 = vunpack.c.l.b16 %v1565
    %v2111 = vunpack.c.h.b16 %v1565
    %v2112 = vunpack.c.l.b16 %v1566
    %v2113 = vunpack.c.h.b16 %v1566
    %v2114 = vunpack.c.l.b16 %v1567
    %v2115 = vunpack.c.h.b16 %v1567
    %v2116 = vunpack.c.l.b16 %v1568
    %v2117 = vunpack.c.h.b16 %v1568
    %v2118 = vunpack.c.l.b16 %v1569
    %v2119 = vunpack.c.h.b16 %v1569
    %v2120 = vunpack.c.l.b16 %v1570
    %v2121 = vunpack.c.h.b16 %v1570
    %v2122 = vunpack.c.l.b16 %v1571
    %v2123 = vunpack.c.h.b16 %v1571
    %v2124 = vunpack.c.l.b16 %v1572
    %v2125 = vunpack.c.h.b16 %v1572
    %v2126 = vunpack.c.l.b16 %v1573
    %v2127 = vunpack.c.h.b16 %v1573
    %v2128 = vunpack.c.l.b16 %v1574
    %v2129 = vunpack.c.h.b16 %v1574
    %v2130 = vunpack.c.l.b16 %v1575
    %v2131 = vunpack.c.h.b16 %v1575
    %v2132 = vunpack.c.l.b16 %v1576
    %v2133 = vunpack.c.h.b16 %v1576
    %v2134 = vunpack.c.l.b16 %v1577
    %v2135 = vunpack.c.h.b16 %v1577
    %v2136 = vunpack.c.l.b16 %v1578
    %v2137 = vunpack.c.h.b16 %v1578
    %v2138 = vunpack.c.l.b16 %v1579
    %v2139 = vunpack.c.h.b16 %v1579
    %v2140 = vunpack.c.l.b16 %v1580
    %v2141 = vunpack.c.h.b16 %v1580
    %v2142 = vunpack.c.l.b16 %v1581
    %v2143 = vunpack.c.h.b16 %v1581
    %v2144 = vunpack.c.l.b16 %v1582
    %v2145 = vunpack.c.h.b16 %v1582
    %v2146 = vunpack.c.l.b16 %v1583
    %v2147 = vunpack.c.h.b16 %v1583
    %v2148 = vunpack.c.l.b16 %v1584
    %v2149 = vunpack.c.h.b16 %v1584
    %v2150 = vunpack.c.l.b16 %v1585
    %v2151 = vunpack.c.h.b16 %v1585
    %v2152 = vunpack.c.l.b16 %v1586
    %v2153 = vunpack.c.h.b16 %v1586
    %v2154 = vunpack.c.l.b16 %v1587
    %v2155 = vunpack.c.h.b16 %v1587
    %v2156 = vunpack.c.l.b16 %v1588
    %v2157 = vunpack.c.h.b16 %v1588
    %v2158 = vunpack.c.l.b16 %v1589
    %v2159 = vunpack.c.h.b16 %v1589
    %v2160 = vunpack.c.l.b16 %v1590
    %v2161 = vunpack.c.h.b16 %v1590
    %v2162 = vunpack.c.l.b16 %v1591
    %v2163 = vunpack.c.h.b16 %v1591
    %v2164 = vunpack.c.l.b16 %v1592
    %v2165 = vunpack.c.h.b16 %v1592
    %v2166 = vunpack.c.l.b16 %v1593
    %v2167 = vunpack.c.h.b16 %v1593
    %v2168 = vunpack.c.l.b16 %v1594
    %v2169 = vunpack.c.h.b16 %v1594
    %v2170 = vunpack.c.l.b16 %v1595
    %v2171 = vunpack.c.h.b16 %v1595
    %v2172 = vunpack.c.l.b16 %v1596
    %v2173 = vunpack.c.h.b16 %v1596
    %v2174 = vunpack.c.l.b16 %v1597
    %v2175 = vunpack.c.h.b16 %v1597
    %v2176 = vunpack.c.l.b16 %v1598
    %v2177 = vunpack.c.h.b16 %v1598
    %v2178 = vunpack.c.l.b16 %v1599
    %v2179 = vunpack.c.h.b16 %v1599
    %v2180 = vunpack.c.l.b16 %v1600
    %v2181 = vunpack.c.h.b16 %v1600
    %v2182 = vunpack.c.l.b16 %v1601
    %v2183 = vunpack.c.h.b16 %v1601
    %v2184 = vunpack.c.l.b16 %v1602
    %v2185 = vunpack.c.h.b16 %v1602
    %v2186 = vunpack.c.l.b16 %v1603
    %v2187 = vunpack.c.h.b16 %v1603
    %v2188 = vunpack.c.l.b16 %v1604
    %v2189 = vunpack.c.h.b16 %v1604
    %v2190 = vunpack.c.l.b16 %v1605
    %v2191 = vunpack.c.h.b16 %v1605
    %v2192 = vunpack.c.l.b16 %v1606
    %v2193 = vunpack.c.h.b16 %v1606
    %v2194 = vunpack.c.l.b16 %v1607
    %v2195 = vunpack.c.h.b16 %v1607
    %v2196 = vpack.c.b16 %v1818, %v1804
    %v2197 = vpack.c.b16 %v1819, %v1805
    %v2198 = vpack.c.b16 %v1820, %v1806
    %v2199 = vpack.c.b16 %v1821, %v1807
    %v2200 = vpack.c.b16 %v1822, %v1808
    %v2201 = vpack.c.b16 %v1823, %v1809
    %v2202 = vpack.c.b16 %v1824, %v1810
    %v2203 = vpack.c.b16 %v1825, %v1811
    %v2204 = vpack.c.b16 %v1826, %v1812
    %v2205 = vpack.c.b16 %v1827, %v1813
    %v2206 = vpack.c.b16 %v1828, %v1814
    %v2207 = vpack.c.b16 %v1829, %v1815
    %v2208 = vpack.c.b16 %v1830, %v1816
    %v2209 = vpack.c.b16 %v1831, %v1817
    %v2210 = vpack.c.b16 %v1846, %v1832
    %v2211 = vpack.c.b16 %v1847, %v1833
    %v2212 = vpack.c.b16 %v1848, %v1834
    %v2213 = vpack.c.b16 %v1849, %v1835
    %v2214 = vpack.c.b16 %v1850, %v1836
    %v2215 = vpack.c.b16 %v1851, %v1837
    %v2216 = vpack.c.b16 %v1852, %v1838
    %v2217 = vpack.c.b16 %v1853, %v1839
    %v2218 = vpack.c.b16 %v1854, %v1840
    %v2219 = vpack.c.b16 %v1855, %v1841
    %v2220 = vpack.c.b16 %v1856, %v1842
    %v2221 = vpack.c.b16 %v1857, %v1843
    %v2222 = vpack.c.b16 %v1858, %v1844
    %v2223 = vpack.c.b16 %v1859, %v1845
    %v2224 = vpack.c.b16 %v1874, %v1860
    %v2225 = vpack.c.b16 %v1875, %v1861
    %v2226 = vpack.c.b16 %v1876, %v1862
    %v2227 = vpack.c.b16 %v1877, %v1863
    %v2228 = vpack.c.b16 %v1878, %v1864
    %v2229 = vpack.c.b16 %v1879, %v1865
    %v2230 = vpack.c.b16 %v1880, %v1866
    %v2231 = vpack.c.b16 %v1881, %v1867
    %v2232 = vpack.c.b16 %v1882, %v1868
    %v2233 = vpack.c.b16 %v1883, %v1869
    %v2234 = vpack.c.b16 %v1884, %v1870
    %v2235 = vpack.c.b16 %v1885, %v1871
    %v2236 = vpack.c.b16 %v1886, %v1872
    %v2237 = vpack.c.b16 %v1887, %v1873
    %v2238 = vpack.c.b16 %v1902, %v1888
    %v2239 = vpack.c.b16 %v1903, %v1889
    %v2240 = vpack.c.b16 %v1904, %v1890
    %v2241 = vpack.c.b16 %v1905, %v1891
    %v2242 = vpack.c.b16 %v1906, %v1892
    %v2243 = vpack.c.b16 %v1907, %v1893
    %v2244 = vpack.c.b16 %v1908, %v1894
    %v2245 = vpack.c.b16 %v1909, %v1895
    %v2246 = vpack.c.b16 %v1910, %v1896
    %v2247 = vpack.c.b16 %v1911, %v1897
    %v2248 = vpack.c.b16 %v1912, %v1898
    %v2249 = vpack.c.b16 %v1913, %v1899
    %v2250 = vpack.c.b16 %v1914, %v1900
    %v2251 = vpack.c.b16 %v1915, %v1901
    %v2252 = vpack.c.b16 %v1930, %v1916
    %v2253 = vpack.c.b16 %v1931, %v1917
    %v2254 = vpack.c.b16 %v1932, %v1918
    %v2255 = vpack.c.b16 %v1933, %v1919
    %v2256 = vpack.c.b16 %v1934, %v1920
    %v2257 = vpack.c.b16 %v1935, %v1921
    %v2258 = vpack.c.b16 %v1936, %v1922
    %v2259 = vpack.c.b16 %v1937, %v1923
    %v2260 = vpack.c.b16 %v1938, %v1924
    %v2261 = vpack.c.b16 %v1939, %v1925
    %v2262 = vpack.c.b16 %v1940, %v1926
    %v2263 = vpack.c.b16 %v1941, %v1927
    %v2264 = vpack.c.b16 %v1942, %v1928
    %v2265 = vpack.c.b16 %v1943, %v1929
    %v2266 = vpack.c.b16 %v1958, %v1944
    %v2267 = vpack.c.b16 %v1959, %v1945
    %v2268 = vpack.c.b16 %v1960, %v1946
    %v2269 = vpack.c.b16 %v1961, %v1947
    %v2270 = vpack.c.b16 %v1962, %v1948
    %v2271 = vpack.c.b16 %v1963, %v1949
    %v2272 = vpack.c.b16 %v1964, %v1950
    %v2273 = vpack.c.b16 %v1965, %v1951
    %v2274 = vpack.c.b16 %v1966, %v1952
    %v2275 = vpack.c.b16 %v1967, %v1953
    %v2276 = vpack.c.b16 %v1968, %v1954
    %v2277 = vpack.c.b16 %v1969, %v1955
    %v2278 = vpack.c.b16 %v1970, %v1956
    %v2279 = vpack.c.b16 %v1971, %v1957
    %v2280 = vpack.c.b16 %v1986, %v1972
    %v2281 = vpack.c.b16 %v1987, %v1973
    %v2282 = vpack.c.b16 %v1988, %v1974
    %v2283 = vpack.c.b16 %v1989, %v1975
    %v2284 = vpack.c.b16 %v1990, %v1976
    %v2285 = vpack.c.b16 %v1991, %v1977
    %v2286 = vpack.c.b16 %v1992, %v1978
    %v2287 = vpack.c.b16 %v1993, %v1979
    %v2288 = vpack.c.b16 %v1994, %v1980
    %v2289 = vpack.c.b16 %v1995, %v1981
    %v2290 = vpack.c.b16 %v1996, %v1982
    %v2291 = vpack.c.b16 %v1997, %v1983
    %v2292 = vpack.c.b16 %v1998, %v1984
    %v2293 = vpack.c.b16 %v1999, %v1985
    %v2294 = vpack.c.b16 %v2014, %v2000
    %v2295 = vpack.c.b16 %v2015, %v2001
    %v2296 = vpack.c.b16 %v2016, %v2002
    %v2297 = vpack.c.b16 %v2017, %v2003
    %v2298 = vpack.c.b16 %v2018, %v2004
    %v2299 = vpack.c.b16 %v2019, %v2005
    %v2300 = vpack.c.b16 %v2020, %v2006
    %v2301 = vpack.c.b16 %v2021, %v2007
    %v2302 = vpack.c.b16 %v2022, %v2008
    %v2303 = vpack.c.b16 %v2023, %v2009
    %v2304 = vpack.c.b16 %v2024, %v2010
    %v2305 = vpack.c.b16 %v2025, %v2011
    %v2306 = vpack.c.b16 %v2026, %v2012
    %v2307 = vpack.c.b16 %v2027, %v2013
    %v2308 = vpack.c.b16 %v2042, %v2028
    %v2309 = vpack.c.b16 %v2043, %v2029
    %v2310 = vpack.c.b16 %v2044, %v2030
    %v2311 = vpack.c.b16 %v2045, %v2031
    %v2312 = vpack.c.b16 %v2046, %v2032
    %v2313 = vpack.c.b16 %v2047, %v2033
    %v2314 = vpack.c.b16 %v2048, %v2034
    %v2315 = vpack.c.b16 %v2049, %v2035
    %v2316 = vpack.c.b16 %v2050, %v2036
    %v2317 = vpack.c.b16 %v2051, %v2037
    %v2318 = vpack.c.b16 %v2052, %v2038
    %v2319 = vpack.c.b16 %v2053, %v2039
    %v2320 = vpack.c.b16 %v2054, %v2040
    %v2321 = vpack.c.b16 %v2055, %v2041
    %v2322 = vpack.c.b16 %v2070, %v2056
    %v2323 = vpack.c.b16 %v2071, %v2057
    %v2324 = vpack.c.b16 %v2072, %v2058
    %v2325 = vpack.c.b16 %v2073, %v2059
    %v2326 = vpack.c.b16 %v2074, %v2060
    %v2327 = vpack.c.b16 %v2075, %v2061
    %v2328 = vpack.c.b16 %v2076, %v2062
    %v2329 = vpack.c.b16 %v2077, %v2063
    %v2330 = vpack.c.b16 %v2078, %v2064
    %v2331 = vpack.c.b16 %v2079, %v2065
    %v2332 = vpack.c.b16 %v2080, %v2066
    %v2333 = vpack.c.b16 %v2081, %v2067
    %v2334 = vpack.c.b16 %v2082, %v2068
    %v2335 = vpack.c.b16 %v2083, %v2069
    %v2336 = vpack.c.b16 %v2098, %v2084
    %v2337 = vpack.c.b16 %v2099, %v2085
    %v2338 = vpack.c.b16 %v2100, %v2086
    %v2339 = vpack.c.b16 %v2101, %v2087
    %v2340 = vpack.c.b16 %v2102, %v2088
    %v2341 = vpack.c.b16 %v2103, %v2089
    %v2342 = vpack.c.b16 %v2104, %v2090
    %v2343 = vpack.c.b16 %v2105, %v2091
    %v2344 = vpack.c.b16 %v2106, %v2092
    %v2345 = vpack.c.b16 %v2107, %v2093
    %v2346 = vpack.c.b16 %v2108, %v2094
    %v2347 = vpack.c.b16 %v2109, %v2095
    %v2348 = vpack.c.b16 %v2110, %v2096
    %v2349 = vpack.c.b16 %v2111, %v2097
    %v2350 = vpack.c.b16 %v2126, %v2112
    %v2351 = vpack.c.b16 %v2127, %v2113
    %v2352 = vpack.c.b16 %v2128, %v2114
    %v2353 = vpack.c.b16 %v2129, %v2115
    %v2354 = vpack.c.b16 %v2130, %v2116
    %v2355 = vpack.c.b16 %v2131, %v2117
    %v2356 = vpack.c.b16 %v2132, %v2118
    %v2357 = vpack.c.b16 %v2133, %v2119
    %v2358 = vpack.c.b16 %v2134, %v2120
    %v2359 = vpack.c.b16 %v2135, %v2121
    %v2360 = vpack.c.b16 %v2136, %v2122
    %v2361 = vpack.c.b16 %v2137, %v2123
    %v2362 = vpack.c.b16 %v2138, %v2124
    %v2363 = vpack.c.b16 %v2139, %v2125
    %v2364 = vpack.c.b16 %v2154, %v2140
    %v2365 = vpack.c.b16 %v2155, %v2141
    %v2366 = vpack.c.b16 %v2156, %v2142
    %v2367 = vpack.c.b16 %v2157, %v2143
    %v2368 = vpack.c.b16 %v2158, %v2144
    %v2369 = vpack.c.b16 %v2159, %v2145
    %v2370 = vpack.c.b16 %v2160, %v2146
    %v2371 = vpack.c.b16 %v2161, %v2147
    %v2372 = vpack.c.b16 %v2162, %v2148
    %v2373 = vpack.c.b16 %v2163, %v2149
    %v2374 = vpack.c.b16 %v2164, %v2150
    %v2375 = vpack.c.b16 %v2165, %v2151
    %v2376 = vpack.c.b16 %v2166, %v2152
    %v2377 = vpack.c.b16 %v2167, %v2153
    %v2378 = vpack.c.b16 %v2182, %v2168
    %v2379 = vpack.c.b16 %v2183, %v2169
    %v2380 = vpack.c.b16 %v2184, %v2170
    %v2381 = vpack.c.b16 %v2185, %v2171
    %v2382 = vpack.c.b16 %v2186, %v2172
    %v2383 = vpack.c.b16 %v2187, %v2173
    %v2384 = vpack.c.b16 %v2188, %v2174
    %v2385 = vpack.c.b16 %v2189, %v2175
    %v2386 = vpack.c.b16 %v2190, %v2176
    %v2387 = vpack.c.b16 %v2191, %v2177
    %v2388 = vpack.c.b16 %v2192, %v2178
    %v2389 = vpack.c.b16 %v2193, %v2179
    %v2390 = vpack.c.b16 %v2194, %v2180
    %v2391 = vpack.c.b16 %v2195, %v2181
    %v2589 = vsel %vm719, %v1411, 0
    %2591 = vmatpush.bf16.msra.mxu0 %v2294
    %2592 = vmatpush.bf16.msra.mxu0 %v2280
    %2593 = vmatpush.bf16.msra.mxu0 %v2266
    %2594 = vmatpush.bf16.msra.mxu0 %v2252
    %2595 = vmatpush.bf16.msra.mxu0 %v2238
    %2596 = vmatpush.bf16.msra.mxu0 %v2224
    %2597 = vmatpush.bf16.msra.mxu0 %v2210
    %2598 = vmatpush.bf16.msra.mxu0 %v2196
    %2599 = vmatmul.bf16.gmra.mxu0 %v1410
    %v2600 = vpop.f32.mrf.mxu0
    %v2601 = vadd.f32 0.0, %v2600
    %v2602 = vpop.f32.mrf.mxu0
    %v2603 = vadd.f32 0.0, %v2602
    %2604 = vdwg.mxu0
    %2605 = vmatpush.bf16.msra.mxu0 0
    %2606 = vmatpush.bf16.msra.mxu0 0
    %2607 = vmatpush.bf16.msra.mxu0 %v2378
    %2608 = vmatpush.bf16.msra.mxu0 %v2364
    %2609 = vmatpush.bf16.msra.mxu0 %v2350
    %2610 = vmatpush.bf16.msra.mxu0 %v2336
    %2611 = vmatpush.bf16.msra.mxu0 %v2322
    %2612 = vmatpush.bf16.msra.mxu0 %v2308
    %2613 = vmatmul.bf16.gmra.mxu0 %v2589
    %v2614 = vpop.f32.mrf.mxu0
    %v2615 = vadd.f32 %v2601, %v2614
    %v2616 = vpop.f32.mrf.mxu0
    %v2617 = vadd.f32 %v2603, %v2616
    %2618 = vdwg.mxu0
    %2619 = vmatpush.bf16.msra.mxu0 %v2295
    %2620 = vmatpush.bf16.msra.mxu0 %v2281
    %2621 = vmatpush.bf16.msra.mxu0 %v2267
    %2622 = vmatpush.bf16.msra.mxu0 %v2253
    %2623 = vmatpush.bf16.msra.mxu0 %v2239
    %2624 = vmatpush.bf16.msra.mxu0 %v2225
    %2625 = vmatpush.bf16.msra.mxu0 %v2211
    %2626 = vmatpush.bf16.msra.mxu0 %v2197
    %2627 = vmatmul.bf16.gmra.mxu0 %v1410
    %v2628 = vpop.f32.mrf.mxu0
    %v2629 = vadd.f32 0.0, %v2628
    %v2630 = vpop.f32.mrf.mxu0
    %v2631 = vadd.f32 0.0, %v2630
    %2632 = vdwg.mxu0
    %2633 = vmatpush.bf16.msra.mxu0 0
    %2634 = vmatpush.bf16.msra.mxu0 0
    %2635 = vmatpush.bf16.msra.mxu0 %v2379
    %2636 = vmatpush.bf16.msra.mxu0 %v2365
    %2637 = vmatpush.bf16.msra.mxu0 %v2351
    %2638 = vmatpush.bf16.msra.mxu0 %v2337
    %2639 = vmatpush.bf16.msra.mxu0 %v2323
    %2640 = vmatpush.bf16.msra.mxu0 %v2309
    %2641 = vmatmul.bf16.gmra.mxu0 %v2589
    %v2642 = vpop.f32.mrf.mxu0
    %v2643 = vadd.f32 %v2629, %v2642
    %v2644 = vpop.f32.mrf.mxu0
    %v2645 = vadd.f32 %v2631, %v2644
    %2646 = vdwg.mxu0
    %2647 = vmatpush.bf16.msra.mxu0 %v2296
    %2648 = vmatpush.bf16.msra.mxu0 %v2282
    %2649 = vmatpush.bf16.msra.mxu0 %v2268
    %2650 = vmatpush.bf16.msra.mxu0 %v2254
    %2651 = vmatpush.bf16.msra.mxu0 %v2240
    %2652 = vmatpush.bf16.msra.mxu0 %v2226
    %2653 = vmatpush.bf16.msra.mxu0 %v2212
    %2654 = vmatpush.bf16.msra.mxu0 %v2198
    %2655 = vmatmul.bf16.gmra.mxu0 %v1410
    %v2656 = vpop.f32.mrf.mxu0
    %v2657 = vadd.f32 0.0, %v2656
    %v2658 = vpop.f32.mrf.mxu0
    %v2659 = vadd.f32 0.0, %v2658
    %2660 = vdwg.mxu0
    %2661 = vmatpush.bf16.msra.mxu0 0
    %2662 = vmatpush.bf16.msra.mxu0 0
    %2663 = vmatpush.bf16.msra.mxu0 %v2380
    %2664 = vmatpush.bf16.msra.mxu0 %v2366
    %2665 = vmatpush.bf16.msra.mxu0 %v2352
    %2666 = vmatpush.bf16.msra.mxu0 %v2338
    %2667 = vmatpush.bf16.msra.mxu0 %v2324
    %2668 = vmatpush.bf16.msra.mxu0 %v2310
    %2669 = vmatmul.bf16.gmra.mxu0 %v2589
    %v2670 = vpop.f32.mrf.mxu0
    %v2671 = vadd.f32 %v2657, %v2670
    %v2672 = vpop.f32.mrf.mxu0
    %v2673 = vadd.f32 %v2659, %v2672
    %2674 = vdwg.mxu0
    %2675 = vmatpush.bf16.msra.mxu0 %v2297
    %2676 = vmatpush.bf16.msra.mxu0 %v2283
    %2677 = vmatpush.bf16.msra.mxu0 %v2269
    %2678 = vmatpush.bf16.msra.mxu0 %v2255
    %2679 = vmatpush.bf16.msra.mxu0 %v2241
    %2680 = vmatpush.bf16.msra.mxu0 %v2227
    %2681 = vmatpush.bf16.msra.mxu0 %v2213
    %2682 = vmatpush.bf16.msra.mxu0 %v2199
    %2683 = vmatmul.bf16.gmra.mxu0 %v1410
    %v2684 = vpop.f32.mrf.mxu0
    %v2685 = vadd.f32 0.0, %v2684
    %v2686 = vpop.f32.mrf.mxu0
    %v2687 = vadd.f32 0.0, %v2686
    %2688 = vdwg.mxu0
    %2689 = vmatpush.bf16.msra.mxu0 0
    %2690 = vmatpush.bf16.msra.mxu0 0
    %2691 = vmatpush.bf16.msra.mxu0 %v2381
    %2692 = vmatpush.bf16.msra.mxu0 %v2367
    %2693 = vmatpush.bf16.msra.mxu0 %v2353
    %2694 = vmatpush.bf16.msra.mxu0 %v2339
    %2695 = vmatpush.bf16.msra.mxu0 %v2325
    %2696 = vmatpush.bf16.msra.mxu0 %v2311
    %2697 = vmatmul.bf16.gmra.mxu0 %v2589
    %v2698 = vpop.f32.mrf.mxu0
    %v2699 = vadd.f32 %v2685, %v2698
    %v2700 = vpop.f32.mrf.mxu0
    %v2701 = vadd.f32 %v2687, %v2700
    %2702 = vdwg.mxu0
    %2703 = vmatpush.bf16.msra.mxu0 %v2298
    %2704 = vmatpush.bf16.msra.mxu0 %v2284
    %2705 = vmatpush.bf16.msra.mxu0 %v2270
    %2706 = vmatpush.bf16.msra.mxu0 %v2256
    %2707 = vmatpush.bf16.msra.mxu0 %v2242
    %2708 = vmatpush.bf16.msra.mxu0 %v2228
    %2709 = vmatpush.bf16.msra.mxu0 %v2214
    %2710 = vmatpush.bf16.msra.mxu0 %v2200
    %2711 = vmatmul.bf16.gmra.mxu0 %v1410
    %v2712 = vpop.f32.mrf.mxu0
    %v2713 = vadd.f32 0.0, %v2712
    %v2714 = vpop.f32.mrf.mxu0
    %v2715 = vadd.f32 0.0, %v2714
    %2716 = vdwg.mxu0
    %2717 = vmatpush.bf16.msra.mxu0 0
    %2718 = vmatpush.bf16.msra.mxu0 0
    %2719 = vmatpush.bf16.msra.mxu0 %v2382
    %2720 = vmatpush.bf16.msra.mxu0 %v2368
    %2721 = vmatpush.bf16.msra.mxu0 %v2354
    %2722 = vmatpush.bf16.msra.mxu0 %v2340
    %2723 = vmatpush.bf16.msra.mxu0 %v2326
    %2724 = vmatpush.bf16.msra.mxu0 %v2312
    %2725 = vmatmul.bf16.gmra.mxu0 %v2589
    %v2726 = vpop.f32.mrf.mxu0
    %v2727 = vadd.f32 %v2713, %v2726
    %v2728 = vpop.f32.mrf.mxu0
    %v2729 = vadd.f32 %v2715, %v2728
    %2730 = vdwg.mxu0
    %2731 = vmatpush.bf16.msra.mxu0 %v2299
    %2732 = vmatpush.bf16.msra.mxu0 %v2285
    %2733 = vmatpush.bf16.msra.mxu0 %v2271
    %2734 = vmatpush.bf16.msra.mxu0 %v2257
    %2735 = vmatpush.bf16.msra.mxu0 %v2243
    %2736 = vmatpush.bf16.msra.mxu0 %v2229
    %2737 = vmatpush.bf16.msra.mxu0 %v2215
    %2738 = vmatpush.bf16.msra.mxu0 %v2201
    %2739 = vmatmul.bf16.gmra.mxu0 %v1410
    %v2740 = vpop.f32.mrf.mxu0
    %v2741 = vadd.f32 0.0, %v2740
    %v2742 = vpop.f32.mrf.mxu0
    %v2743 = vadd.f32 0.0, %v2742
    %2744 = vdwg.mxu0
    %2745 = vmatpush.bf16.msra.mxu0 0
    %2746 = vmatpush.bf16.msra.mxu0 0
    %2747 = vmatpush.bf16.msra.mxu0 %v2383
    %2748 = vmatpush.bf16.msra.mxu0 %v2369
    %2749 = vmatpush.bf16.msra.mxu0 %v2355
    %2750 = vmatpush.bf16.msra.mxu0 %v2341
    %2751 = vmatpush.bf16.msra.mxu0 %v2327
    %2752 = vmatpush.bf16.msra.mxu0 %v2313
    %2753 = vmatmul.bf16.gmra.mxu0 %v2589
    %v2754 = vpop.f32.mrf.mxu0
    %v2755 = vadd.f32 %v2741, %v2754
    %v2756 = vpop.f32.mrf.mxu0
    %v2757 = vadd.f32 %v2743, %v2756
    %2758 = vdwg.mxu0
    %2759 = vmatpush.bf16.msra.mxu0 %v2300
    %2760 = vmatpush.bf16.msra.mxu0 %v2286
    %2761 = vmatpush.bf16.msra.mxu0 %v2272
    %2762 = vmatpush.bf16.msra.mxu0 %v2258
    %2763 = vmatpush.bf16.msra.mxu0 %v2244
    %2764 = vmatpush.bf16.msra.mxu0 %v2230
    %2765 = vmatpush.bf16.msra.mxu0 %v2216
    %2766 = vmatpush.bf16.msra.mxu0 %v2202
    %2767 = vmatmul.bf16.gmra.mxu0 %v1410
    %v2768 = vpop.f32.mrf.mxu0
    %v2769 = vadd.f32 0.0, %v2768
    %v2770 = vpop.f32.mrf.mxu0
    %v2771 = vadd.f32 0.0, %v2770
    %2772 = vdwg.mxu0
    %2773 = vmatpush.bf16.msra.mxu0 0
    %2774 = vmatpush.bf16.msra.mxu0 0
    %2775 = vmatpush.bf16.msra.mxu0 %v2384
    %2776 = vmatpush.bf16.msra.mxu0 %v2370
    %2777 = vmatpush.bf16.msra.mxu0 %v2356
    %2778 = vmatpush.bf16.msra.mxu0 %v2342
    %2779 = vmatpush.bf16.msra.mxu0 %v2328
    %2780 = vmatpush.bf16.msra.mxu0 %v2314
    %2781 = vmatmul.bf16.gmra.mxu0 %v2589
    %v2782 = vpop.f32.mrf.mxu0
    %v2783 = vadd.f32 %v2769, %v2782
    %v2784 = vpop.f32.mrf.mxu0
    %v2785 = vadd.f32 %v2771, %v2784
    %2786 = vdwg.mxu0
    %2787 = vmatpush.bf16.msra.mxu0 %v2301
    %2788 = vmatpush.bf16.msra.mxu0 %v2287
    %2789 = vmatpush.bf16.msra.mxu0 %v2273
    %2790 = vmatpush.bf16.msra.mxu0 %v2259
    %2791 = vmatpush.bf16.msra.mxu0 %v2245
    %2792 = vmatpush.bf16.msra.mxu0 %v2231
    %2793 = vmatpush.bf16.msra.mxu0 %v2217
    %2794 = vmatpush.bf16.msra.mxu0 %v2203
    %2795 = vmatmul.bf16.gmra.mxu0 %v1410
    %v2796 = vpop.f32.mrf.mxu0
    %v2797 = vadd.f32 0.0, %v2796
    %v2798 = vpop.f32.mrf.mxu0
    %v2799 = vadd.f32 0.0, %v2798
    %2800 = vdwg.mxu0
    %2801 = vmatpush.bf16.msra.mxu0 0
    %2802 = vmatpush.bf16.msra.mxu0 0
    %2803 = vmatpush.bf16.msra.mxu0 %v2385
    %2804 = vmatpush.bf16.msra.mxu0 %v2371
    %2805 = vmatpush.bf16.msra.mxu0 %v2357
    %2806 = vmatpush.bf16.msra.mxu0 %v2343
    %2807 = vmatpush.bf16.msra.mxu0 %v2329
    %2808 = vmatpush.bf16.msra.mxu0 %v2315
    %2809 = vmatmul.bf16.gmra.mxu0 %v2589
    %v2810 = vpop.f32.mrf.mxu0
    %v2811 = vadd.f32 %v2797, %v2810
    %v2812 = vpop.f32.mrf.mxu0
    %v2813 = vadd.f32 %v2799, %v2812
    %2814 = vdwg.mxu0
    %2815 = vmatpush.bf16.msra.mxu0 %v2302
    %2816 = vmatpush.bf16.msra.mxu0 %v2288
    %2817 = vmatpush.bf16.msra.mxu0 %v2274
    %2818 = vmatpush.bf16.msra.mxu0 %v2260
    %2819 = vmatpush.bf16.msra.mxu0 %v2246
    %2820 = vmatpush.bf16.msra.mxu0 %v2232
    %2821 = vmatpush.bf16.msra.mxu0 %v2218
    %2822 = vmatpush.bf16.msra.mxu0 %v2204
    %2823 = vmatmul.bf16.gmra.mxu0 %v1410
    %v2824 = vpop.f32.mrf.mxu0
    %v2825 = vadd.f32 0.0, %v2824
    %v2826 = vpop.f32.mrf.mxu0
    %v2827 = vadd.f32 0.0, %v2826
    %2828 = vdwg.mxu0
    %2829 = vmatpush.bf16.msra.mxu0 0
    %2830 = vmatpush.bf16.msra.mxu0 0
    %2831 = vmatpush.bf16.msra.mxu0 %v2386
    %2832 = vmatpush.bf16.msra.mxu0 %v2372
    %2833 = vmatpush.bf16.msra.mxu0 %v2358
    %2834 = vmatpush.bf16.msra.mxu0 %v2344
    %2835 = vmatpush.bf16.msra.mxu0 %v2330
    %2836 = vmatpush.bf16.msra.mxu0 %v2316
    %2837 = vmatmul.bf16.gmra.mxu0 %v2589
    %v2838 = vpop.f32.mrf.mxu0
    %v2839 = vadd.f32 %v2825, %v2838
    %v2840 = vpop.f32.mrf.mxu0
    %v2841 = vadd.f32 %v2827, %v2840
    %2842 = vdwg.mxu0
    %2843 = vmatpush.bf16.msra.mxu0 %v2303
    %2844 = vmatpush.bf16.msra.mxu0 %v2289
    %2845 = vmatpush.bf16.msra.mxu0 %v2275
    %2846 = vmatpush.bf16.msra.mxu0 %v2261
    %2847 = vmatpush.bf16.msra.mxu0 %v2247
    %2848 = vmatpush.bf16.msra.mxu0 %v2233
    %2849 = vmatpush.bf16.msra.mxu0 %v2219
    %2850 = vmatpush.bf16.msra.mxu0 %v2205
    %2851 = vmatmul.bf16.gmra.mxu0 %v1410
    %v2852 = vpop.f32.mrf.mxu0
    %v2853 = vadd.f32 0.0, %v2852
    %v2854 = vpop.f32.mrf.mxu0
    %v2855 = vadd.f32 0.0, %v2854
    %2856 = vdwg.mxu0
    %2857 = vmatpush.bf16.msra.mxu0 0
    %2858 = vmatpush.bf16.msra.mxu0 0
    %2859 = vmatpush.bf16.msra.mxu0 %v2387
    %2860 = vmatpush.bf16.msra.mxu0 %v2373
    %2861 = vmatpush.bf16.msra.mxu0 %v2359
    %2862 = vmatpush.bf16.msra.mxu0 %v2345
    %2863 = vmatpush.bf16.msra.mxu0 %v2331
    %2864 = vmatpush.bf16.msra.mxu0 %v2317
    %2865 = vmatmul.bf16.gmra.mxu0 %v2589
    %v2866 = vpop.f32.mrf.mxu0
    %v2867 = vadd.f32 %v2853, %v2866
    %v2868 = vpop.f32.mrf.mxu0
    %v2869 = vadd.f32 %v2855, %v2868
    %2870 = vdwg.mxu0
    %2871 = vmatpush.bf16.msra.mxu0 %v2304
    %2872 = vmatpush.bf16.msra.mxu0 %v2290
    %2873 = vmatpush.bf16.msra.mxu0 %v2276
    %2874 = vmatpush.bf16.msra.mxu0 %v2262
    %2875 = vmatpush.bf16.msra.mxu0 %v2248
    %2876 = vmatpush.bf16.msra.mxu0 %v2234
    %2877 = vmatpush.bf16.msra.mxu0 %v2220
    %2878 = vmatpush.bf16.msra.mxu0 %v2206
    %2879 = vmatmul.bf16.gmra.mxu0 %v1410
    %v2880 = vpop.f32.mrf.mxu0
    %v2881 = vadd.f32 0.0, %v2880
    %v2882 = vpop.f32.mrf.mxu0
    %v2883 = vadd.f32 0.0, %v2882
    %2884 = vdwg.mxu0
    %2885 = vmatpush.bf16.msra.mxu0 0
    %2886 = vmatpush.bf16.msra.mxu0 0
    %2887 = vmatpush.bf16.msra.mxu0 %v2388
    %2888 = vmatpush.bf16.msra.mxu0 %v2374
    %2889 = vmatpush.bf16.msra.mxu0 %v2360
    %2890 = vmatpush.bf16.msra.mxu0 %v2346
    %2891 = vmatpush.bf16.msra.mxu0 %v2332
    %2892 = vmatpush.bf16.msra.mxu0 %v2318
    %2893 = vmatmul.bf16.gmra.mxu0 %v2589
    %v2894 = vpop.f32.mrf.mxu0
    %v2895 = vadd.f32 %v2881, %v2894
    %v2896 = vpop.f32.mrf.mxu0
    %v2897 = vadd.f32 %v2883, %v2896
    %2898 = vdwg.mxu0
    %2899 = vmatpush.bf16.msra.mxu0 %v2305
    %2900 = vmatpush.bf16.msra.mxu0 %v2291
    %2901 = vmatpush.bf16.msra.mxu0 %v2277
    %2902 = vmatpush.bf16.msra.mxu0 %v2263
    %2903 = vmatpush.bf16.msra.mxu0 %v2249
    %2904 = vmatpush.bf16.msra.mxu0 %v2235
    %2905 = vmatpush.bf16.msra.mxu0 %v2221
    %2906 = vmatpush.bf16.msra.mxu0 %v2207
    %2907 = vmatmul.bf16.gmra.mxu0 %v1410
    %v2908 = vpop.f32.mrf.mxu0
    %v2909 = vadd.f32 0.0, %v2908
    %v2910 = vpop.f32.mrf.mxu0
    %v2911 = vadd.f32 0.0, %v2910
    %2912 = vdwg.mxu0
    %2913 = vmatpush.bf16.msra.mxu0 0
    %2914 = vmatpush.bf16.msra.mxu0 0
    %2915 = vmatpush.bf16.msra.mxu0 %v2389
    %2916 = vmatpush.bf16.msra.mxu0 %v2375
    %2917 = vmatpush.bf16.msra.mxu0 %v2361
    %2918 = vmatpush.bf16.msra.mxu0 %v2347
    %2919 = vmatpush.bf16.msra.mxu0 %v2333
    %2920 = vmatpush.bf16.msra.mxu0 %v2319
    %2921 = vmatmul.bf16.gmra.mxu0 %v2589
    %v2922 = vpop.f32.mrf.mxu0
    %v2923 = vadd.f32 %v2909, %v2922
    %v2924 = vpop.f32.mrf.mxu0
    %v2925 = vadd.f32 %v2911, %v2924
    %2926 = vdwg.mxu0
    %2927 = vmatpush.bf16.msra.mxu0 %v2306
    %2928 = vmatpush.bf16.msra.mxu0 %v2292
    %2929 = vmatpush.bf16.msra.mxu0 %v2278
    %2930 = vmatpush.bf16.msra.mxu0 %v2264
    %2931 = vmatpush.bf16.msra.mxu0 %v2250
    %2932 = vmatpush.bf16.msra.mxu0 %v2236
    %2933 = vmatpush.bf16.msra.mxu0 %v2222
    %2934 = vmatpush.bf16.msra.mxu0 %v2208
    %2935 = vmatmul.bf16.gmra.mxu0 %v1410
    %v2936 = vpop.f32.mrf.mxu0
    %v2937 = vadd.f32 0.0, %v2936
    %v2938 = vpop.f32.mrf.mxu0
    %v2939 = vadd.f32 0.0, %v2938
    %2940 = vdwg.mxu0
    %2941 = vmatpush.bf16.msra.mxu0 0
    %2942 = vmatpush.bf16.msra.mxu0 0
    %2943 = vmatpush.bf16.msra.mxu0 %v2390
    %2944 = vmatpush.bf16.msra.mxu0 %v2376
    %2945 = vmatpush.bf16.msra.mxu0 %v2362
    %2946 = vmatpush.bf16.msra.mxu0 %v2348
    %2947 = vmatpush.bf16.msra.mxu0 %v2334
    %2948 = vmatpush.bf16.msra.mxu0 %v2320
    %2949 = vmatmul.bf16.gmra.mxu0 %v2589
    %v2950 = vpop.f32.mrf.mxu0
    %v2951 = vadd.f32 %v2937, %v2950
    %v2952 = vpop.f32.mrf.mxu0
    %v2953 = vadd.f32 %v2939, %v2952
    %2954 = vdwg.mxu0
    %2955 = vmatpush.bf16.msra.mxu0 %v2307
    %2956 = vmatpush.bf16.msra.mxu0 %v2293
    %2957 = vmatpush.bf16.msra.mxu0 %v2279
    %2958 = vmatpush.bf16.msra.mxu0 %v2265
    %2959 = vmatpush.bf16.msra.mxu0 %v2251
    %2960 = vmatpush.bf16.msra.mxu0 %v2237
    %2961 = vmatpush.bf16.msra.mxu0 %v2223
    %2962 = vmatpush.bf16.msra.mxu0 %v2209
    %2963 = vmatmul.bf16.gmra.mxu0 %v1410
    %v2964 = vpop.f32.mrf.mxu0
    %v2965 = vadd.f32 0.0, %v2964
    %v2966 = vpop.f32.mrf.mxu0
    %v2967 = vadd.f32 0.0, %v2966
    %2968 = vdwg.mxu0
    %2969 = vmatpush.bf16.msra.mxu0 0
    %2970 = vmatpush.bf16.msra.mxu0 0
    %2971 = vmatpush.bf16.msra.mxu0 %v2391
    %2972 = vmatpush.bf16.msra.mxu0 %v2377
    %2973 = vmatpush.bf16.msra.mxu0 %v2363
    %2974 = vmatpush.bf16.msra.mxu0 %v2349
    %2975 = vmatpush.bf16.msra.mxu0 %v2335
    %2976 = vmatpush.bf16.msra.mxu0 %v2321
    %2977 = vmatmul.bf16.gmra.mxu0 %v2589
    %v2978 = vpop.f32.mrf.mxu0
    %v2979 = vadd.f32 %v2965, %v2978
    %v2980 = vpop.f32.mrf.mxu0
    %v2981 = vadd.f32 %v2967, %v2980
    %2982 = vdwg.mxu0
    %v2983 = vld [vmem:[%s12] sm:$0xff]
    %v2984 = vld [vmem:[%s12 + $0x8] sm:$0xff]
    %v2985 = vld [vmem:[%s12 + $0x10] sm:$0xff]
    %v2986 = vld [vmem:[%s12 + $0x18] sm:$0xf]
    %v2988 = vperm.slane %v1409, 0
    %v2989 = vperm.slane %v1409, 1
    %v2990 = vperm.slane %v1409, 2
    %v2991 = vperm.slane %v1409, 3
    %vm2996 = vcmask 113664
    %v2998 = vsel %vm2996, %v2983, 0
    %v3001 = vsel %vm2996, %v2984, 0
    %v3004 = vsel %vm2996, %v2985, 0
    %v3007 = vsel %vm2996, %v2986, 0
    %v3010 = vsel %vm828, %v2617, 0
    %v3013 = vsel %vm828, %v2645, 0
    %v3016 = vsel %vm828, %v2673, 0
    %v3019 = vsel %vm828, %v2701, 0
    %3021 = vmatpush.msra.mxu0 0.0
    %3022 = vmatpush.msra.mxu0 0.0
    %3023 = vmatpush.msra.mxu0 0.0
    %3024 = vmatpush.msra.mxu0 0.0
    %3025 = vmatpush.msra.mxu0 0.0
    %3026 = vmatpush.msra.mxu0 0.0
    %3027 = vmatpush.msra.mxu0 0.0
    %3028 = vmatpush.msra.mxu0 0.0
    %3029 = vmatpush.msra.mxu0 0.0
    %3030 = vmatpush.msra.mxu0 0.0
    %3031 = vmatpush.msra.mxu0 0.0
    %3032 = vmatpush.msra.mxu0 0.0
    %3033 = vmatpush.msra.mxu0 0.0
    %3034 = vmatpush.msra.mxu0 0.0
    %3035 = vmatpush.msra.mxu0 %v3010
    %3036 = vmatpush.msra.mxu0 %v2615
    %3037 = vmatmul.f32.gmra.mxu0 %v2998
    %v3038 = vpop.f32.mrf.mxu0
    %v3039 = vadd.f32 %v2988, %v3038
    %3040 = vmatmul.f32.gmra.mxu0 %v3001
    %v3041 = vpop.f32.mrf.mxu0
    %v3042 = vadd.f32 %v2988, %v3041
    %3043 = vmatmul.f32.gmra.mxu0 %v3004
    %v3044 = vpop.f32.mrf.mxu0
    %v3045 = vadd.f32 %v2988, %v3044
    %3046 = vmatmul.f32.gmra.mxu0 %v3007
    %v3047 = vpop.f32.mrf.mxu0
    %v3048 = vadd.f32 %v2988, %v3047
    %3049 = vdwg.mxu0
    %3050 = vmatpush.msra.mxu0 0.0
    %3051 = vmatpush.msra.mxu0 0.0
    %3052 = vmatpush.msra.mxu0 0.0
    %3053 = vmatpush.msra.mxu0 0.0
    %3054 = vmatpush.msra.mxu0 0.0
    %3055 = vmatpush.msra.mxu0 0.0
    %3056 = vmatpush.msra.mxu0 0.0
    %3057 = vmatpush.msra.mxu0 0.0
    %3058 = vmatpush.msra.mxu0 0.0
    %3059 = vmatpush.msra.mxu0 0.0
    %3060 = vmatpush.msra.mxu0 0.0
    %3061 = vmatpush.msra.mxu0 0.0
    %3062 = vmatpush.msra.mxu0 0.0
    %3063 = vmatpush.msra.mxu0 0.0
    %3064 = vmatpush.msra.mxu0 %v3013
    %3065 = vmatpush.msra.mxu0 %v2643
    %3066 = vmatmul.f32.gmra.mxu0 %v2998
    %v3067 = vpop.f32.mrf.mxu0
    %v3068 = vadd.f32 %v2989, %v3067
    %3069 = vmatmul.f32.gmra.mxu0 %v3001
    %v3070 = vpop.f32.mrf.mxu0
    %v3071 = vadd.f32 %v2989, %v3070
    %3072 = vmatmul.f32.gmra.mxu0 %v3004
    %v3073 = vpop.f32.mrf.mxu0
    %v3074 = vadd.f32 %v2989, %v3073
    %3075 = vmatmul.f32.gmra.mxu0 %v3007
    %v3076 = vpop.f32.mrf.mxu0
    %v3077 = vadd.f32 %v2989, %v3076
    %3078 = vdwg.mxu0
    %3079 = vmatpush.msra.mxu0 0.0
    %3080 = vmatpush.msra.mxu0 0.0
    %3081 = vmatpush.msra.mxu0 0.0
    %3082 = vmatpush.msra.mxu0 0.0
    %3083 = vmatpush.msra.mxu0 0.0
    %3084 = vmatpush.msra.mxu0 0.0
    %3085 = vmatpush.msra.mxu0 0.0
    %3086 = vmatpush.msra.mxu0 0.0
    %3087 = vmatpush.msra.mxu0 0.0
    %3088 = vmatpush.msra.mxu0 0.0
    %3089 = vmatpush.msra.mxu0 0.0
    %3090 = vmatpush.msra.mxu0 0.0
    %3091 = vmatpush.msra.mxu0 0.0
    %3092 = vmatpush.msra.mxu0 0.0
    %3093 = vmatpush.msra.mxu0 %v3016
    %3094 = vmatpush.msra.mxu0 %v2671
    %3095 = vmatmul.f32.gmra.mxu0 %v2998
    %v3096 = vpop.f32.mrf.mxu0
    %v3097 = vadd.f32 %v2990, %v3096
    %3098 = vmatmul.f32.gmra.mxu0 %v3001
    %v3099 = vpop.f32.mrf.mxu0
    %v3100 = vadd.f32 %v2990, %v3099
    %3101 = vmatmul.f32.gmra.mxu0 %v3004
    %v3102 = vpop.f32.mrf.mxu0
    %v3103 = vadd.f32 %v2990, %v3102
    %3104 = vmatmul.f32.gmra.mxu0 %v3007
    %v3105 = vpop.f32.mrf.mxu0
    %v3106 = vadd.f32 %v2990, %v3105
    %3107 = vdwg.mxu0
    %3108 = vmatpush.msra.mxu0 0.0
    %3109 = vmatpush.msra.mxu0 0.0
    %3110 = vmatpush.msra.mxu0 0.0
    %3111 = vmatpush.msra.mxu0 0.0
    %3112 = vmatpush.msra.mxu0 0.0
    %3113 = vmatpush.msra.mxu0 0.0
    %3114 = vmatpush.msra.mxu0 0.0
    %3115 = vmatpush.msra.mxu0 0.0
    %3116 = vmatpush.msra.mxu0 0.0
    %3117 = vmatpush.msra.mxu0 0.0
    %3118 = vmatpush.msra.mxu0 0.0
    %3119 = vmatpush.msra.mxu0 0.0
    %3120 = vmatpush.msra.mxu0 0.0
    %3121 = vmatpush.msra.mxu0 0.0
    %3122 = vmatpush.msra.mxu0 %v3019
    %3123 = vmatpush.msra.mxu0 %v2699
    %3124 = vmatmul.f32.gmra.mxu0 %v2998
    %v3125 = vpop.f32.mrf.mxu0
    %v3126 = vadd.f32 %v2991, %v3125
    %3127 = vmatmul.f32.gmra.mxu0 %v3001
    %v3128 = vpop.f32.mrf.mxu0
    %v3129 = vadd.f32 %v2991, %v3128
    %3130 = vmatmul.f32.gmra.mxu0 %v3004
    %v3131 = vpop.f32.mrf.mxu0
    %v3132 = vadd.f32 %v2991, %v3131
    %3133 = vmatmul.f32.gmra.mxu0 %v3007
    %v3134 = vpop.f32.mrf.mxu0
    %v3135 = vadd.f32 %v2991, %v3134
    %3136 = vdwg.mxu0
    %s3137 = scalar_lea.vmem %s12, 32
    %v3138 = vld [vmem:[%s3137] sm:$0xff]
    %v3139 = vld [vmem:[%s3137 + $0x8] sm:$0xff]
    %v3140 = vld [vmem:[%s3137 + $0x10] sm:$0xff]
    %v3141 = vld [vmem:[%s3137 + $0x18] sm:$0xf]
    %3149 = vrot.lane.b32.xlu0 %v2699, 64
    %v3150 = vpop.permute.xlu0 %3149
    %3151 = vrot.lane.b32.xlu0 %v2727, 64
    %v3152 = vpop.permute.xlu0 %3151
    %3153 = vrot.lane.b32.xlu0 %v2755, 64
    %v3154 = vpop.permute.xlu0 %3153
    %3155 = vrot.lane.b32.xlu0 %v2783, 64
    %v3156 = vpop.permute.xlu0 %3155
    %3157 = vrot.lane.b32.xlu0 %v2701, 64
    %v3158 = vpop.permute.xlu0 %3157
    %3159 = vrot.lane.b32.xlu0 %v2729, 64
    %v3160 = vpop.permute.xlu0 %3159
    %3161 = vrot.lane.b32.xlu0 %v2757, 64
    %v3162 = vpop.permute.xlu0 %3161
    %3163 = vrot.lane.b32.xlu0 %v2785, 64
    %v3164 = vpop.permute.xlu0 %3163
    %v3165 = vsel %vm150, %v3150, %v3152
    %v3166 = vsel %vm150, %v3152, %v3154
    %v3167 = vsel %vm150, %v3154, %v3156
    %v3168 = vsel %vm150, %v3158, %v3160
    %v3169 = vsel %vm150, %v3160, %v3162
    %v3170 = vsel %vm150, %v3162, %v3164
    %v3176 = vsel %vm2996, %v3138, 0
    %v3179 = vsel %vm2996, %v3139, 0
    %v3182 = vsel %vm2996, %v3140, 0
    %v3185 = vsel %vm2996, %v3141, 0
    %v3187 = vsel %vm828, %v3168, 0
    %v3189 = vsel %vm828, %v3169, 0
    %v3191 = vsel %vm828, %v3170, 0
    %v3193 = vsel %vm828, %v3164, 0
    %3195 = vmatpush.msra.mxu0 0.0
    %3196 = vmatpush.msra.mxu0 0.0
    %3197 = vmatpush.msra.mxu0 0.0
    %3198 = vmatpush.msra.mxu0 0.0
    %3199 = vmatpush.msra.mxu0 0.0
    %3200 = vmatpush.msra.mxu0 0.0
    %3201 = vmatpush.msra.mxu0 0.0
    %3202 = vmatpush.msra.mxu0 0.0
    %3203 = vmatpush.msra.mxu0 0.0
    %3204 = vmatpush.msra.mxu0 0.0
    %3205 = vmatpush.msra.mxu0 0.0
    %3206 = vmatpush.msra.mxu0 0.0
    %3207 = vmatpush.msra.mxu0 0.0
    %3208 = vmatpush.msra.mxu0 0.0
    %3209 = vmatpush.msra.mxu0 %v3187
    %3210 = vmatpush.msra.mxu0 %v3165
    %3211 = vmatmul.f32.gmra.mxu0 %v3176
    %v3212 = vpop.f32.mrf.mxu0
    %v3213 = vadd.f32 0.0, %v3212
    %3214 = vmatmul.f32.gmra.mxu0 %v3179
    %v3215 = vpop.f32.mrf.mxu0
    %v3216 = vadd.f32 0.0, %v3215
    %3217 = vmatmul.f32.gmra.mxu0 %v3182
    %v3218 = vpop.f32.mrf.mxu0
    %v3219 = vadd.f32 0.0, %v3218
    %3220 = vmatmul.f32.gmra.mxu0 %v3185
    %v3221 = vpop.f32.mrf.mxu0
    %v3222 = vadd.f32 0.0, %v3221
    %3223 = vdwg.mxu0
    %3224 = vmatpush.msra.mxu0 0.0
    %3225 = vmatpush.msra.mxu0 0.0
    %3226 = vmatpush.msra.mxu0 0.0
    %3227 = vmatpush.msra.mxu0 0.0
    %3228 = vmatpush.msra.mxu0 0.0
    %3229 = vmatpush.msra.mxu0 0.0
    %3230 = vmatpush.msra.mxu0 0.0
    %3231 = vmatpush.msra.mxu0 0.0
    %3232 = vmatpush.msra.mxu0 0.0
    %3233 = vmatpush.msra.mxu0 0.0
    %3234 = vmatpush.msra.mxu0 0.0
    %3235 = vmatpush.msra.mxu0 0.0
    %3236 = vmatpush.msra.mxu0 0.0
    %3237 = vmatpush.msra.mxu0 0.0
    %3238 = vmatpush.msra.mxu0 %v3189
    %3239 = vmatpush.msra.mxu0 %v3166
    %3240 = vmatmul.f32.gmra.mxu0 %v3176
    %v3241 = vpop.f32.mrf.mxu0
    %v3242 = vadd.f32 0.0, %v3241
    %3243 = vmatmul.f32.gmra.mxu0 %v3179
    %v3244 = vpop.f32.mrf.mxu0
    %v3245 = vadd.f32 0.0, %v3244
    %3246 = vmatmul.f32.gmra.mxu0 %v3182
    %v3247 = vpop.f32.mrf.mxu0
    %v3248 = vadd.f32 0.0, %v3247
    %3249 = vmatmul.f32.gmra.mxu0 %v3185
    %v3250 = vpop.f32.mrf.mxu0
    %v3251 = vadd.f32 0.0, %v3250
    %3252 = vdwg.mxu0
    %3253 = vmatpush.msra.mxu0 0.0
    %3254 = vmatpush.msra.mxu0 0.0
    %3255 = vmatpush.msra.mxu0 0.0
    %3256 = vmatpush.msra.mxu0 0.0
    %3257 = vmatpush.msra.mxu0 0.0
    %3258 = vmatpush.msra.mxu0 0.0
    %3259 = vmatpush.msra.mxu0 0.0
    %3260 = vmatpush.msra.mxu0 0.0
    %3261 = vmatpush.msra.mxu0 0.0
    %3262 = vmatpush.msra.mxu0 0.0
    %3263 = vmatpush.msra.mxu0 0.0
    %3264 = vmatpush.msra.mxu0 0.0
    %3265 = vmatpush.msra.mxu0 0.0
    %3266 = vmatpush.msra.mxu0 0.0
    %3267 = vmatpush.msra.mxu0 %v3191
    %3268 = vmatpush.msra.mxu0 %v3167
    %3269 = vmatmul.f32.gmra.mxu0 %v3176
    %v3270 = vpop.f32.mrf.mxu0
    %v3271 = vadd.f32 0.0, %v3270
    %3272 = vmatmul.f32.gmra.mxu0 %v3179
    %v3273 = vpop.f32.mrf.mxu0
    %v3274 = vadd.f32 0.0, %v3273
    %3275 = vmatmul.f32.gmra.mxu0 %v3182
    %v3276 = vpop.f32.mrf.mxu0
    %v3277 = vadd.f32 0.0, %v3276
    %3278 = vmatmul.f32.gmra.mxu0 %v3185
    %v3279 = vpop.f32.mrf.mxu0
    %v3280 = vadd.f32 0.0, %v3279
    %3281 = vdwg.mxu0
    %3282 = vmatpush.msra.mxu0 0.0
    %3283 = vmatpush.msra.mxu0 0.0
    %3284 = vmatpush.msra.mxu0 0.0
    %3285 = vmatpush.msra.mxu0 0.0
    %3286 = vmatpush.msra.mxu0 0.0
    %3287 = vmatpush.msra.mxu0 0.0
    %3288 = vmatpush.msra.mxu0 0.0
    %3289 = vmatpush.msra.mxu0 0.0
    %3290 = vmatpush.msra.mxu0 0.0
    %3291 = vmatpush.msra.mxu0 0.0
    %3292 = vmatpush.msra.mxu0 0.0
    %3293 = vmatpush.msra.mxu0 0.0
    %3294 = vmatpush.msra.mxu0 0.0
    %3295 = vmatpush.msra.mxu0 0.0
    %3296 = vmatpush.msra.mxu0 %v3193
    %3297 = vmatpush.msra.mxu0 %v3156
    %3298 = vmatmul.f32.gmra.mxu0 %v3176
    %v3299 = vpop.f32.mrf.mxu0
    %v3300 = vadd.f32 0.0, %v3299
    %3301 = vmatmul.f32.gmra.mxu0 %v3179
    %v3302 = vpop.f32.mrf.mxu0
    %v3303 = vadd.f32 0.0, %v3302
    %3304 = vmatmul.f32.gmra.mxu0 %v3182
    %v3305 = vpop.f32.mrf.mxu0
    %v3306 = vadd.f32 0.0, %v3305
    %3307 = vmatmul.f32.gmra.mxu0 %v3185
    %v3308 = vpop.f32.mrf.mxu0
    %v3309 = vadd.f32 0.0, %v3308
    %3310 = vdwg.mxu0
    %v3311 = vadd.f32 %v3039, %v3213
    %v3312 = vadd.f32 %v3068, %v3242
    %v3313 = vadd.f32 %v3097, %v3271
    %v3314 = vadd.f32 %v3126, %v3300
    %v3315 = vadd.f32 %v3042, %v3216
    %v3316 = vadd.f32 %v3071, %v3245
    %v3317 = vadd.f32 %v3100, %v3274
    %v3318 = vadd.f32 %v3129, %v3303
    %v3319 = vadd.f32 %v3045, %v3219
    %v3320 = vadd.f32 %v3074, %v3248
    %v3321 = vadd.f32 %v3103, %v3277
    %v3322 = vadd.f32 %v3132, %v3306
    %v3323 = vadd.f32 %v3048, %v3222
    %v3324 = vadd.f32 %v3077, %v3251
    %v3325 = vadd.f32 %v3106, %v3280
    %v3326 = vadd.f32 %v3135, %v3309
    %s3327 = scalar_lea.vmem %s12, 64
    %v3328 = vld [vmem:[%s3327] sm:$0xff]
    %v3329 = vld [vmem:[%s3327 + $0x8] sm:$0xff]
    %v3330 = vld [vmem:[%s3327 + $0x10] sm:$0xff]
    %v3331 = vld [vmem:[%s3327 + $0x18] sm:$0xf]
    %v3333 = vsel %vm2996, %v3328, 0
    %v3336 = vsel %vm2996, %v3329, 0
    %v3339 = vsel %vm2996, %v3330, 0
    %v3342 = vsel %vm2996, %v3331, 0
    %v3345 = vsel %vm828, %v2813, 0
    %v3348 = vsel %vm828, %v2841, 0
    %v3351 = vsel %vm828, %v2869, 0
    %v3354 = vsel %vm828, %v2897, 0
    %3356 = vmatpush.msra.mxu0 0.0
    %3357 = vmatpush.msra.mxu0 0.0
    %3358 = vmatpush.msra.mxu0 0.0
    %3359 = vmatpush.msra.mxu0 0.0
    %3360 = vmatpush.msra.mxu0 0.0
    %3361 = vmatpush.msra.mxu0 0.0
    %3362 = vmatpush.msra.mxu0 0.0
    %3363 = vmatpush.msra.mxu0 0.0
    %3364 = vmatpush.msra.mxu0 0.0
    %3365 = vmatpush.msra.mxu0 0.0
    %3366 = vmatpush.msra.mxu0 0.0
    %3367 = vmatpush.msra.mxu0 0.0
    %3368 = vmatpush.msra.mxu0 0.0
    %3369 = vmatpush.msra.mxu0 0.0
    %3370 = vmatpush.msra.mxu0 %v3345
    %3371 = vmatpush.msra.mxu0 %v2811
    %3372 = vmatmul.f32.gmra.mxu0 %v3333
    %v3373 = vpop.f32.mrf.mxu0
    %v3374 = vadd.f32 0.0, %v3373
    %3375 = vmatmul.f32.gmra.mxu0 %v3336
    %v3376 = vpop.f32.mrf.mxu0
    %v3377 = vadd.f32 0.0, %v3376
    %3378 = vmatmul.f32.gmra.mxu0 %v3339
    %v3379 = vpop.f32.mrf.mxu0
    %v3380 = vadd.f32 0.0, %v3379
    %3381 = vmatmul.f32.gmra.mxu0 %v3342
    %v3382 = vpop.f32.mrf.mxu0
    %v3383 = vadd.f32 0.0, %v3382
    %3384 = vdwg.mxu0
    %3385 = vmatpush.msra.mxu0 0.0
    %3386 = vmatpush.msra.mxu0 0.0
    %3387 = vmatpush.msra.mxu0 0.0
    %3388 = vmatpush.msra.mxu0 0.0
    %3389 = vmatpush.msra.mxu0 0.0
    %3390 = vmatpush.msra.mxu0 0.0
    %3391 = vmatpush.msra.mxu0 0.0
    %3392 = vmatpush.msra.mxu0 0.0
    %3393 = vmatpush.msra.mxu0 0.0
    %3394 = vmatpush.msra.mxu0 0.0
    %3395 = vmatpush.msra.mxu0 0.0
    %3396 = vmatpush.msra.mxu0 0.0
    %3397 = vmatpush.msra.mxu0 0.0
    %3398 = vmatpush.msra.mxu0 0.0
    %3399 = vmatpush.msra.mxu0 %v3348
    %3400 = vmatpush.msra.mxu0 %v2839
    %3401 = vmatmul.f32.gmra.mxu0 %v3333
    %v3402 = vpop.f32.mrf.mxu0
    %v3403 = vadd.f32 0.0, %v3402
    %3404 = vmatmul.f32.gmra.mxu0 %v3336
    %v3405 = vpop.f32.mrf.mxu0
    %v3406 = vadd.f32 0.0, %v3405
    %3407 = vmatmul.f32.gmra.mxu0 %v3339
    %v3408 = vpop.f32.mrf.mxu0
    %v3409 = vadd.f32 0.0, %v3408
    %3410 = vmatmul.f32.gmra.mxu0 %v3342
    %v3411 = vpop.f32.mrf.mxu0
    %v3412 = vadd.f32 0.0, %v3411
    %3413 = vdwg.mxu0
    %3414 = vmatpush.msra.mxu0 0.0
    %3415 = vmatpush.msra.mxu0 0.0
    %3416 = vmatpush.msra.mxu0 0.0
    %3417 = vmatpush.msra.mxu0 0.0
    %3418 = vmatpush.msra.mxu0 0.0
    %3419 = vmatpush.msra.mxu0 0.0
    %3420 = vmatpush.msra.mxu0 0.0
    %3421 = vmatpush.msra.mxu0 0.0
    %3422 = vmatpush.msra.mxu0 0.0
    %3423 = vmatpush.msra.mxu0 0.0
    %3424 = vmatpush.msra.mxu0 0.0
    %3425 = vmatpush.msra.mxu0 0.0
    %3426 = vmatpush.msra.mxu0 0.0
    %3427 = vmatpush.msra.mxu0 0.0
    %3428 = vmatpush.msra.mxu0 %v3351
    %3429 = vmatpush.msra.mxu0 %v2867
    %3430 = vmatmul.f32.gmra.mxu0 %v3333
    %v3431 = vpop.f32.mrf.mxu0
    %v3432 = vadd.f32 0.0, %v3431
    %3433 = vmatmul.f32.gmra.mxu0 %v3336
    %v3434 = vpop.f32.mrf.mxu0
    %v3435 = vadd.f32 0.0, %v3434
    %3436 = vmatmul.f32.gmra.mxu0 %v3339
    %v3437 = vpop.f32.mrf.mxu0
    %v3438 = vadd.f32 0.0, %v3437
    %3439 = vmatmul.f32.gmra.mxu0 %v3342
    %v3440 = vpop.f32.mrf.mxu0
    %v3441 = vadd.f32 0.0, %v3440
    %3442 = vdwg.mxu0
    %3443 = vmatpush.msra.mxu0 0.0
    %3444 = vmatpush.msra.mxu0 0.0
    %3445 = vmatpush.msra.mxu0 0.0
    %3446 = vmatpush.msra.mxu0 0.0
    %3447 = vmatpush.msra.mxu0 0.0
    %3448 = vmatpush.msra.mxu0 0.0
    %3449 = vmatpush.msra.mxu0 0.0
    %3450 = vmatpush.msra.mxu0 0.0
    %3451 = vmatpush.msra.mxu0 0.0
    %3452 = vmatpush.msra.mxu0 0.0
    %3453 = vmatpush.msra.mxu0 0.0
    %3454 = vmatpush.msra.mxu0 0.0
    %3455 = vmatpush.msra.mxu0 0.0
    %3456 = vmatpush.msra.mxu0 0.0
    %3457 = vmatpush.msra.mxu0 %v3354
    %3458 = vmatpush.msra.mxu0 %v2895
    %3459 = vmatmul.f32.gmra.mxu0 %v3333
    %v3460 = vpop.f32.mrf.mxu0
    %v3461 = vadd.f32 0.0, %v3460
    %3462 = vmatmul.f32.gmra.mxu0 %v3336
    %v3463 = vpop.f32.mrf.mxu0
    %v3464 = vadd.f32 0.0, %v3463
    %3465 = vmatmul.f32.gmra.mxu0 %v3339
    %v3466 = vpop.f32.mrf.mxu0
    %v3467 = vadd.f32 0.0, %v3466
    %3468 = vmatmul.f32.gmra.mxu0 %v3342
    %v3469 = vpop.f32.mrf.mxu0
    %v3470 = vadd.f32 0.0, %v3469
    %3471 = vdwg.mxu0
    %v3472 = vadd.f32 %v3311, %v3374
    %v3473 = vadd.f32 %v3312, %v3403
    %v3474 = vadd.f32 %v3313, %v3432
    %v3475 = vadd.f32 %v3314, %v3461
    %v3476 = vadd.f32 %v3315, %v3377
    %v3477 = vadd.f32 %v3316, %v3406
    %v3478 = vadd.f32 %v3317, %v3435
    %v3479 = vadd.f32 %v3318, %v3464
    %v3480 = vadd.f32 %v3319, %v3380
    %v3481 = vadd.f32 %v3320, %v3409
    %v3482 = vadd.f32 %v3321, %v3438
    %v3483 = vadd.f32 %v3322, %v3467
    %v3484 = vadd.f32 %v3323, %v3383
    %v3485 = vadd.f32 %v3324, %v3412
    %v3486 = vadd.f32 %v3325, %v3441
    %v3487 = vadd.f32 %v3326, %v3470
    %s3488 = scalar_lea.vmem %s12, 96
    %v3489 = vld [vmem:[%s3488] sm:$0xff]
    %v3490 = vld [vmem:[%s3488 + $0x8] sm:$0xff]
    %v3491 = vld [vmem:[%s3488 + $0x10] sm:$0xff]
    %v3492 = vld [vmem:[%s3488 + $0x18] sm:$0xf]
    %3500 = vrot.lane.b32.xlu0 %v2895, 64
    %v3501 = vpop.permute.xlu0 %3500
    %3502 = vrot.lane.b32.xlu0 %v2923, 64
    %v3503 = vpop.permute.xlu0 %3502
    %3504 = vrot.lane.b32.xlu0 %v2951, 64
    %v3505 = vpop.permute.xlu0 %3504
    %3506 = vrot.lane.b32.xlu0 %v2979, 64
    %v3507 = vpop.permute.xlu0 %3506
    %3508 = vrot.lane.b32.xlu0 %v2897, 64
    %v3509 = vpop.permute.xlu0 %3508
    %3510 = vrot.lane.b32.xlu0 %v2925, 64
    %v3511 = vpop.permute.xlu0 %3510
    %3512 = vrot.lane.b32.xlu0 %v2953, 64
    %v3513 = vpop.permute.xlu0 %3512
    %3514 = vrot.lane.b32.xlu0 %v2981, 64
    %v3515 = vpop.permute.xlu0 %3514
    %v3516 = vsel %vm150, %v3501, %v3503
    %v3517 = vsel %vm150, %v3503, %v3505
    %v3518 = vsel %vm150, %v3505, %v3507
    %v3519 = vsel %vm150, %v3509, %v3511
    %v3520 = vsel %vm150, %v3511, %v3513
    %v3521 = vsel %vm150, %v3513, %v3515
    %v3527 = vsel %vm2996, %v3489, 0
    %v3530 = vsel %vm2996, %v3490, 0
    %v3533 = vsel %vm2996, %v3491, 0
    %v3536 = vsel %vm2996, %v3492, 0
    %v3538 = vsel %vm828, %v3519, 0
    %v3540 = vsel %vm828, %v3520, 0
    %v3542 = vsel %vm828, %v3521, 0
    %v3544 = vsel %vm828, %v3515, 0
    %3546 = vmatpush.msra.mxu0 0.0
    %3547 = vmatpush.msra.mxu0 0.0
    %3548 = vmatpush.msra.mxu0 0.0
    %3549 = vmatpush.msra.mxu0 0.0
    %3550 = vmatpush.msra.mxu0 0.0
    %3551 = vmatpush.msra.mxu0 0.0
    %3552 = vmatpush.msra.mxu0 0.0
    %3553 = vmatpush.msra.mxu0 0.0
    %3554 = vmatpush.msra.mxu0 0.0
    %3555 = vmatpush.msra.mxu0 0.0
    %3556 = vmatpush.msra.mxu0 0.0
    %3557 = vmatpush.msra.mxu0 0.0
    %3558 = vmatpush.msra.mxu0 0.0
    %3559 = vmatpush.msra.mxu0 0.0
    %3560 = vmatpush.msra.mxu0 %v3538
    %3561 = vmatpush.msra.mxu0 %v3516
    %3562 = vmatmul.f32.gmra.mxu0 %v3527
    %v3563 = vpop.f32.mrf.mxu0
    %v3564 = vadd.f32 0.0, %v3563
    %3565 = vmatmul.f32.gmra.mxu0 %v3530
    %v3566 = vpop.f32.mrf.mxu0
    %v3567 = vadd.f32 0.0, %v3566
    %3568 = vmatmul.f32.gmra.mxu0 %v3533
    %v3569 = vpop.f32.mrf.mxu0
    %v3570 = vadd.f32 0.0, %v3569
    %3571 = vmatmul.f32.gmra.mxu0 %v3536
    %v3572 = vpop.f32.mrf.mxu0
    %v3573 = vadd.f32 0.0, %v3572
    %3574 = vdwg.mxu0
    %3575 = vmatpush.msra.mxu0 0.0
    %3576 = vmatpush.msra.mxu0 0.0
    %3577 = vmatpush.msra.mxu0 0.0
    %3578 = vmatpush.msra.mxu0 0.0
    %3579 = vmatpush.msra.mxu0 0.0
    %3580 = vmatpush.msra.mxu0 0.0
    %3581 = vmatpush.msra.mxu0 0.0
    %3582 = vmatpush.msra.mxu0 0.0
    %3583 = vmatpush.msra.mxu0 0.0
    %3584 = vmatpush.msra.mxu0 0.0
    %3585 = vmatpush.msra.mxu0 0.0
    %3586 = vmatpush.msra.mxu0 0.0
    %3587 = vmatpush.msra.mxu0 0.0
    %3588 = vmatpush.msra.mxu0 0.0
    %3589 = vmatpush.msra.mxu0 %v3540
    %3590 = vmatpush.msra.mxu0 %v3517
    %3591 = vmatmul.f32.gmra.mxu0 %v3527
    %v3592 = vpop.f32.mrf.mxu0
    %v3593 = vadd.f32 0.0, %v3592
    %3594 = vmatmul.f32.gmra.mxu0 %v3530
    %v3595 = vpop.f32.mrf.mxu0
    %v3596 = vadd.f32 0.0, %v3595
    %3597 = vmatmul.f32.gmra.mxu0 %v3533
    %v3598 = vpop.f32.mrf.mxu0
    %v3599 = vadd.f32 0.0, %v3598
    %3600 = vmatmul.f32.gmra.mxu0 %v3536
    %v3601 = vpop.f32.mrf.mxu0
    %v3602 = vadd.f32 0.0, %v3601
    %3603 = vdwg.mxu0
    %3604 = vmatpush.msra.mxu0 0.0
    %3605 = vmatpush.msra.mxu0 0.0
    %3606 = vmatpush.msra.mxu0 0.0
    %3607 = vmatpush.msra.mxu0 0.0
    %3608 = vmatpush.msra.mxu0 0.0
    %3609 = vmatpush.msra.mxu0 0.0
    %3610 = vmatpush.msra.mxu0 0.0
    %3611 = vmatpush.msra.mxu0 0.0
    %3612 = vmatpush.msra.mxu0 0.0
    %3613 = vmatpush.msra.mxu0 0.0
    %3614 = vmatpush.msra.mxu0 0.0
    %3615 = vmatpush.msra.mxu0 0.0
    %3616 = vmatpush.msra.mxu0 0.0
    %3617 = vmatpush.msra.mxu0 0.0
    %3618 = vmatpush.msra.mxu0 %v3542
    %3619 = vmatpush.msra.mxu0 %v3518
    %3620 = vmatmul.f32.gmra.mxu0 %v3527
    %v3621 = vpop.f32.mrf.mxu0
    %v3622 = vadd.f32 0.0, %v3621
    %3623 = vmatmul.f32.gmra.mxu0 %v3530
    %v3624 = vpop.f32.mrf.mxu0
    %v3625 = vadd.f32 0.0, %v3624
    %3626 = vmatmul.f32.gmra.mxu0 %v3533
    %v3627 = vpop.f32.mrf.mxu0
    %v3628 = vadd.f32 0.0, %v3627
    %3629 = vmatmul.f32.gmra.mxu0 %v3536
    %v3630 = vpop.f32.mrf.mxu0
    %v3631 = vadd.f32 0.0, %v3630
    %3632 = vdwg.mxu0
    %3633 = vmatpush.msra.mxu0 0.0
    %3634 = vmatpush.msra.mxu0 0.0
    %3635 = vmatpush.msra.mxu0 0.0
    %3636 = vmatpush.msra.mxu0 0.0
    %3637 = vmatpush.msra.mxu0 0.0
    %3638 = vmatpush.msra.mxu0 0.0
    %3639 = vmatpush.msra.mxu0 0.0
    %3640 = vmatpush.msra.mxu0 0.0
    %3641 = vmatpush.msra.mxu0 0.0
    %3642 = vmatpush.msra.mxu0 0.0
    %3643 = vmatpush.msra.mxu0 0.0
    %3644 = vmatpush.msra.mxu0 0.0
    %3645 = vmatpush.msra.mxu0 0.0
    %3646 = vmatpush.msra.mxu0 0.0
    %3647 = vmatpush.msra.mxu0 %v3544
    %3648 = vmatpush.msra.mxu0 %v3507
    %3649 = vmatmul.f32.gmra.mxu0 %v3527
    %v3650 = vpop.f32.mrf.mxu0
    %v3651 = vadd.f32 0.0, %v3650
    %3652 = vmatmul.f32.gmra.mxu0 %v3530
    %v3653 = vpop.f32.mrf.mxu0
    %v3654 = vadd.f32 0.0, %v3653
    %3655 = vmatmul.f32.gmra.mxu0 %v3533
    %v3656 = vpop.f32.mrf.mxu0
    %v3657 = vadd.f32 0.0, %v3656
    %3658 = vmatmul.f32.gmra.mxu0 %v3536
    %v3659 = vpop.f32.mrf.mxu0
    %v3660 = vadd.f32 0.0, %v3659
    %3661 = vdwg.mxu0
    %v3662 = vadd.f32 %v3472, %v3564
    %v3663 = vadd.f32 %v3473, %v3593
    %v3664 = vadd.f32 %v3474, %v3622
    %v3665 = vadd.f32 %v3475, %v3651
    %v3666 = vadd.f32 %v3476, %v3567
    %v3667 = vadd.f32 %v3477, %v3596
    %v3668 = vadd.f32 %v3478, %v3625
    %v3669 = vadd.f32 %v3479, %v3654
    %v3670 = vadd.f32 %v3480, %v3570
    %v3671 = vadd.f32 %v3481, %v3599
    %v3672 = vadd.f32 %v3482, %v3628
    %v3673 = vadd.f32 %v3483, %v3657
    %v3674 = vadd.f32 %v3484, %v3573
    %v3675 = vadd.f32 %v3485, %v3602
    %v3676 = vadd.f32 %v3486, %v3631
    %v3677 = vadd.f32 %v3487, %v3660
    %v3678 = vld [vmem:[%s15] sm:$0xff]
    %v3679 = vld [vmem:[%s15 + $0x8] sm:$0xff]
    %v3680 = vld [vmem:[%s15 + $0x10] sm:$0xff]
    %v3681 = vld [vmem:[%s15 + $0x18] sm:$0xff]
    %v3682 = vld [vmem:[%s15 + $0x20] sm:$0xff]
    %v3683 = vld [vmem:[%s15 + $0x28] sm:$0xff]
    %v3684 = vld [vmem:[%s15 + $0x30] sm:$0xff]
    %v3685 = vld [vmem:[%s15 + $0x38] sm:$0xff]
    %v3686 = vld [vmem:[%s15 + $0x40] sm:$0xff]
    %v3687 = vld [vmem:[%s15 + $0x48] sm:$0xff]
    %v3688 = vld [vmem:[%s15 + $0x50] sm:$0xff]
    %v3689 = vld [vmem:[%s15 + $0x58] sm:$0xff]
    %v3690 = vld [vmem:[%s15 + $0x60] sm:$0xff]
    %v3691 = vld [vmem:[%s15 + $0x68] sm:$0xff]
    %v3692 = vld [vmem:[%s15 + $0x70] sm:$0xff]
    %v3693 = vld [vmem:[%s15 + $0x78] sm:$0xff]
    %v3694 = vld [vmem:[%s15 + $0x80] sm:$0xff]
    %v3695 = vld [vmem:[%s15 + $0x88] sm:$0xff]
    %v3696 = vld [vmem:[%s15 + $0x90] sm:$0xff]
    %v3697 = vld [vmem:[%s15 + $0x98] sm:$0xff]
    %v3698 = vld [vmem:[%s15 + $0xa0] sm:$0xff]
    %v3699 = vld [vmem:[%s15 + $0xa8] sm:$0xff]
    %v3700 = vld [vmem:[%s15 + $0xb0] sm:$0xff]
    %v3701 = vld [vmem:[%s15 + $0xb8] sm:$0xff]
    %v3702 = vld [vmem:[%s15 + $0xc0] sm:$0xff]
    %v3703 = vld [vmem:[%s15 + $0xc8] sm:$0xff]
    %v3704 = vld [vmem:[%s15 + $0xd0] sm:$0xff]
    %v3705 = vld [vmem:[%s15 + $0xd8] sm:$0xff]
    %v3706 = vld [vmem:[%s15 + $0xe0] sm:$0xff]
    %v3707 = vld [vmem:[%s15 + $0xe8] sm:$0xff]
    %v3708 = vld [vmem:[%s15 + $0xf0] sm:$0xff]
    %v3709 = vld [vmem:[%s15 + $0xf8] sm:$0xff]
    %v3710 = vld [vmem:[%s15 + $0x100] sm:$0xff]
    %v3711 = vld [vmem:[%s15 + $0x108] sm:$0xff]
    %v3712 = vld [vmem:[%s15 + $0x110] sm:$0xff]
    %v3713 = vld [vmem:[%s15 + $0x118] sm:$0xff]
    %v3714 = vld [vmem:[%s15 + $0x120] sm:$0xff]
    %v3715 = vld [vmem:[%s15 + $0x128] sm:$0xff]
    %v3716 = vld [vmem:[%s15 + $0x130] sm:$0xff]
    %v3717 = vld [vmem:[%s15 + $0x138] sm:$0xff]
    %v3718 = vld [vmem:[%s15 + $0x140] sm:$0xff]
    %v3719 = vld [vmem:[%s15 + $0x148] sm:$0xff]
    %v3720 = vld [vmem:[%s15 + $0x150] sm:$0xff]
    %v3721 = vld [vmem:[%s15 + $0x158] sm:$0xff]
    %v3722 = vld [vmem:[%s15 + $0x160] sm:$0xff]
    %v3723 = vld [vmem:[%s15 + $0x168] sm:$0xff]
    %v3724 = vld [vmem:[%s15 + $0x170] sm:$0xff]
    %v3725 = vld [vmem:[%s15 + $0x178] sm:$0xff]
    %v3726 = vld [vmem:[%s15 + $0x180] sm:$0xff]
    %v3727 = vld [vmem:[%s15 + $0x188] sm:$0xff]
    %v3728 = vld [vmem:[%s15 + $0x190] sm:$0xff]
    %v3729 = vld [vmem:[%s15 + $0x198] sm:$0xff]
    %v3730 = vld [vmem:[%s15 + $0x1a0] sm:$0xff]
    %v3731 = vld [vmem:[%s15 + $0x1a8] sm:$0xff]
    %v3732 = vld [vmem:[%s15 + $0x1b0] sm:$0xff]
    %v3733 = vld [vmem:[%s15 + $0x1b8] sm:$0xff]
    %v3734 = vld [vmem:[%s16] sm:$0xff]
    %v3735 = vld [vmem:[%s16 + $0x8] sm:$0xff]
    %v3736 = vld [vmem:[%s16 + $0x10] sm:$0xff]
    %v3737 = vld [vmem:[%s16 + $0x18] sm:$0xff]
    %v3738 = vld [vmem:[%s16 + $0x20] sm:$0xff]
    %v3739 = vld [vmem:[%s16 + $0x28] sm:$0xff]
    %v3740 = vld [vmem:[%s16 + $0x30] sm:$0xff]
    %v3741 = vld [vmem:[%s16 + $0x38] sm:$0xff]
    %v3742 = vld [vmem:[%s16 + $0x40] sm:$0xff]
    %v3743 = vld [vmem:[%s16 + $0x48] sm:$0xff]
    %v3744 = vld [vmem:[%s16 + $0x50] sm:$0xff]
    %v3745 = vld [vmem:[%s16 + $0x58] sm:$0xff]
    %v3746 = vld [vmem:[%s16 + $0x60] sm:$0xff]
    %v3747 = vld [vmem:[%s16 + $0x68] sm:$0xff]
    %v3748 = vld [vmem:[%s16 + $0x70] sm:$0xff]
    %v3749 = vld [vmem:[%s16 + $0x78] sm:$0xff]
    %v3750 = vld [vmem:[#allocation4 + $0x10] sm:$0xf]
    %v3751 = vld [vmem:[#allocation4 + $0x14] sm:$0xf]
    %vm3752 = vcmp.gt.f32.partialorder %v3662, 0.0
    %vm3753 = vcmp.gt.f32.partialorder %v3663, 0.0
    %vm3754 = vcmp.gt.f32.partialorder %v3664, 0.0
    %vm3755 = vcmp.gt.f32.partialorder %v3665, 0.0
    %vm3756 = vcmp.gt.f32.partialorder %v3666, 0.0
    %vm3757 = vcmp.gt.f32.partialorder %v3667, 0.0
    %vm3758 = vcmp.gt.f32.partialorder %v3668, 0.0
    %vm3759 = vcmp.gt.f32.partialorder %v3669, 0.0
    %vm3760 = vcmp.gt.f32.partialorder %v3670, 0.0
    %vm3761 = vcmp.gt.f32.partialorder %v3671, 0.0
    %vm3762 = vcmp.gt.f32.partialorder %v3672, 0.0
    %vm3763 = vcmp.gt.f32.partialorder %v3673, 0.0
    %vm3764 = vcmp.gt.f32.partialorder %v3674, 0.0
    %vm3765 = vcmp.gt.f32.partialorder %v3675, 0.0
    %vm3766 = vcmp.gt.f32.partialorder %v3676, 0.0
    %vm3767 = vcmp.gt.f32.partialorder %v3677, 0.0
    %v3768 = vmul.f32 %v3662, 0.01
    %v3769 = vmul.f32 %v3663, 0.01
    %v3770 = vmul.f32 %v3664, 0.01
    %v3771 = vmul.f32 %v3665, 0.01
    %v3772 = vmul.f32 %v3666, 0.01
    %v3773 = vmul.f32 %v3667, 0.01
    %v3774 = vmul.f32 %v3668, 0.01
    %v3775 = vmul.f32 %v3669, 0.01
    %v3776 = vmul.f32 %v3670, 0.01
    %v3777 = vmul.f32 %v3671, 0.01
    %v3778 = vmul.f32 %v3672, 0.01
    %v3779 = vmul.f32 %v3673, 0.01
    %v3780 = vmul.f32 %v3674, 0.01
    %v3781 = vmul.f32 %v3675, 0.01
    %v3782 = vmul.f32 %v3676, 0.01
    %v3783 = vmul.f32 %v3677, 0.01
    %v3784 = vsel %vm3752, %v3662, %v3768
    %v3785 = vsel %vm3753, %v3663, %v3769
    %v3786 = vsel %vm3754, %v3664, %v3770
    %v3787 = vsel %vm3755, %v3665, %v3771
    %v3788 = vsel %vm3756, %v3666, %v3772
    %v3789 = vsel %vm3757, %v3667, %v3773
    %v3790 = vsel %vm3758, %v3668, %v3774
    %v3791 = vsel %vm3759, %v3669, %v3775
    %v3792 = vsel %vm3760, %v3670, %v3776
    %v3793 = vsel %vm3761, %v3671, %v3777
    %v3794 = vsel %vm3762, %v3672, %v3778
    %v3795 = vsel %vm3763, %v3673, %v3779
    %v3796 = vsel %vm3764, %v3674, %v3780
    %v3797 = vsel %vm3765, %v3675, %v3781
    %v3798 = vsel %vm3766, %v3676, %v3782
    %v3799 = vsel %vm3767, %v3677, %v3783
    %v3800 = vadd.f32 %v3784, %v3788
    %v3801 = vadd.f32 %v3800, %v3792
    %vm3802 = vcmask 1043456
    %v3803 = vsel %vm3802, %v3796, 0.0
    %v3804 = vadd.f32 %v3801, %v3803
    %v3805 = vrot.slane %v3804, 4
    %v3806 = vadd.f32 %v3804, %v3805
    %v3807 = vrot.slane %v3806, 2
    %v3808 = vadd.f32 %v3806, %v3807
    %v3809 = vrot.slane %v3808, 1
    %v3810 = vadd.f32 %v3808, %v3809
    %v3811 = vadd.f32 %v3785, %v3789
    %v3812 = vadd.f32 %v3811, %v3793
    %v3813 = vsel %vm3802, %v3797, 0.0
    %v3814 = vadd.f32 %v3812, %v3813
    %v3815 = vrot.slane %v3814, 4
    %v3816 = vadd.f32 %v3814, %v3815
    %v3817 = vrot.slane %v3816, 2
    %v3818 = vadd.f32 %v3816, %v3817
    %v3819 = vrot.slane %v3818, 1
    %v3820 = vadd.f32 %v3818, %v3819
    %v3821 = vadd.f32 %v3786, %v3790
    %v3822 = vadd.f32 %v3821, %v3794
    %v3823 = vsel %vm3802, %v3798, 0.0
    %v3824 = vadd.f32 %v3822, %v3823
    %v3825 = vrot.slane %v3824, 4
    %v3826 = vadd.f32 %v3824, %v3825
    %v3827 = vrot.slane %v3826, 2
    %v3828 = vadd.f32 %v3826, %v3827
    %v3829 = vrot.slane %v3828, 1
    %v3830 = vadd.f32 %v3828, %v3829
    %v3831 = vsel %vm150, %v3787, 0.0
    %v3832 = vsel %vm150, %v3791, 0.0
    %v3833 = vadd.f32 %v3831, %v3832
    %v3834 = vsel %vm150, %v3795, 0.0
    %v3835 = vadd.f32 %v3833, %v3834
    %vm3836 = vcmask 519168
    %v3837 = vsel %vm3836, %v3799, 0.0
    %v3838 = vadd.f32 %v3835, %v3837
    %v3839 = vrot.slane %v3838, 4
    %v3840 = vadd.f32 %v3838, %v3839
    %v3841 = vrot.slane %v3840, 2
    %v3842 = vadd.f32 %v3840, %v3841
    %v3843 = vrot.slane %v3842, 1
    %v3844 = vadd.f32 %v3842, %v3843
    %v3846 = vsel %vm150, %v3844, 0
    %3848 = vmatpush.msra.mxu0 %v3693
    %3849 = vmatpush.msra.mxu0 %v3692
    %3850 = vmatpush.msra.mxu0 %v3691
    %3851 = vmatpush.msra.mxu0 %v3690
    %3852 = vmatpush.msra.mxu0 %v3689
    %3853 = vmatpush.msra.mxu0 %v3688
    %3854 = vmatpush.msra.mxu0 %v3687
    %3855 = vmatpush.msra.mxu0 %v3686
    %3856 = vmatpush.msra.mxu0 %v3685
    %3857 = vmatpush.msra.mxu0 %v3684
    %3858 = vmatpush.msra.mxu0 %v3683
    %3859 = vmatpush.msra.mxu0 %v3682
    %3860 = vmatpush.msra.mxu0 %v3681
    %3861 = vmatpush.msra.mxu0 %v3680
    %3862 = vmatpush.msra.mxu0 %v3679
    %3863 = vmatpush.msra.mxu0 %v3678
    %3864 = vmatmul.f32.gmra.mxu0 %v3810
    %v3865 = vpop.f32.mrf.mxu0
    %v3866 = vadd.f32 0.0, %v3865
    %3867 = vdwg.mxu0
    %3868 = vmatpush.msra.mxu0 %v3709
    %3869 = vmatpush.msra.mxu0 %v3708
    %3870 = vmatpush.msra.mxu0 %v3707
    %3871 = vmatpush.msra.mxu0 %v3706
    %3872 = vmatpush.msra.mxu0 %v3705
    %3873 = vmatpush.msra.mxu0 %v3704
    %3874 = vmatpush.msra.mxu0 %v3703
    %3875 = vmatpush.msra.mxu0 %v3702
    %3876 = vmatpush.msra.mxu0 %v3701
    %3877 = vmatpush.msra.mxu0 %v3700
    %3878 = vmatpush.msra.mxu0 %v3699
    %3879 = vmatpush.msra.mxu0 %v3698
    %3880 = vmatpush.msra.mxu0 %v3697
    %3881 = vmatpush.msra.mxu0 %v3696
    %3882 = vmatpush.msra.mxu0 %v3695
    %3883 = vmatpush.msra.mxu0 %v3694
    %3884 = vmatmul.f32.gmra.mxu0 %v3820
    %v3885 = vpop.f32.mrf.mxu0
    %v3886 = vadd.f32 %v3866, %v3885
    %3887 = vdwg.mxu0
    %3888 = vmatpush.msra.mxu0 %v3725
    %3889 = vmatpush.msra.mxu0 %v3724
    %3890 = vmatpush.msra.mxu0 %v3723
    %3891 = vmatpush.msra.mxu0 %v3722
    %3892 = vmatpush.msra.mxu0 %v3721
    %3893 = vmatpush.msra.mxu0 %v3720
    %3894 = vmatpush.msra.mxu0 %v3719
    %3895 = vmatpush.msra.mxu0 %v3718
    %3896 = vmatpush.msra.mxu0 %v3717
    %3897 = vmatpush.msra.mxu0 %v3716
    %3898 = vmatpush.msra.mxu0 %v3715
    %3899 = vmatpush.msra.mxu0 %v3714
    %3900 = vmatpush.msra.mxu0 %v3713
    %3901 = vmatpush.msra.mxu0 %v3712
    %3902 = vmatpush.msra.mxu0 %v3711
    %3903 = vmatpush.msra.mxu0 %v3710
    %3904 = vmatmul.f32.gmra.mxu0 %v3830
    %v3905 = vpop.f32.mrf.mxu0
    %v3906 = vadd.f32 %v3886, %v3905
    %3907 = vdwg.mxu0
    %3908 = vmatpush.msra.mxu0 0.0
    %3909 = vmatpush.msra.mxu0 0.0
    %3910 = vmatpush.msra.mxu0 0.0
    %3911 = vmatpush.msra.mxu0 0.0
    %3912 = vmatpush.msra.mxu0 0.0
    %3913 = vmatpush.msra.mxu0 0.0
    %3914 = vmatpush.msra.mxu0 0.0
    %3915 = vmatpush.msra.mxu0 0.0
    %3916 = vmatpush.msra.mxu0 %v3733
    %3917 = vmatpush.msra.mxu0 %v3732
    %3918 = vmatpush.msra.mxu0 %v3731
    %3919 = vmatpush.msra.mxu0 %v3730
    %3920 = vmatpush.msra.mxu0 %v3729
    %3921 = vmatpush.msra.mxu0 %v3728
    %3922 = vmatpush.msra.mxu0 %v3727
    %3923 = vmatpush.msra.mxu0 %v3726
    %3924 = vmatmul.f32.gmra.mxu0 %v3846
    %v3925 = vpop.f32.mrf.mxu0
    %v3926 = vadd.f32 %v3906, %v3925
    %3927 = vdwg.mxu0
    %v3928 = vmul.f32 %v3926, 0.0025510204
    %v3930 = vsel %vm389, %v3928, 0
    %3932 = vmatpush.msra.mxu0 0.0
    %3933 = vmatpush.msra.mxu0 0.0
    %3934 = vmatpush.msra.mxu0 0.0
    %3935 = vmatpush.msra.mxu0 0.0
    %3936 = vmatpush.msra.mxu0 0.0
    %3937 = vmatpush.msra.mxu0 0.0
    %3938 = vmatpush.msra.mxu0 0.0
    %3939 = vmatpush.msra.mxu0 0.0
    %3940 = vmatpush.msra.mxu0 0.0
    %3941 = vmatpush.msra.mxu0 0.0
    %3942 = vmatpush.msra.mxu0 0.0
    %3943 = vmatpush.msra.mxu0 0.0
    %3944 = vmatpush.msra.mxu0 %v3746
    %3945 = vmatpush.msra.mxu0 %v3742
    %3946 = vmatpush.msra.mxu0 %v3738
    %3947 = vmatpush.msra.mxu0 %v3734
    %3948 = vmatmul.f32.gmra.mxu0 %v3930
    %v3949 = vpop.f32.mrf.mxu0
    %v3950 = vadd.f32 0.0, %v3949
    %3951 = vdwg.mxu0
    %3952 = vmatpush.msra.mxu0 0.0
    %3953 = vmatpush.msra.mxu0 0.0
    %3954 = vmatpush.msra.mxu0 0.0
    %3955 = vmatpush.msra.mxu0 0.0
    %3956 = vmatpush.msra.mxu0 0.0
    %3957 = vmatpush.msra.mxu0 0.0
    %3958 = vmatpush.msra.mxu0 0.0
    %3959 = vmatpush.msra.mxu0 0.0
    %3960 = vmatpush.msra.mxu0 0.0
    %3961 = vmatpush.msra.mxu0 0.0
    %3962 = vmatpush.msra.mxu0 0.0
    %3963 = vmatpush.msra.mxu0 0.0
    %3964 = vmatpush.msra.mxu0 %v3747
    %3965 = vmatpush.msra.mxu0 %v3743
    %3966 = vmatpush.msra.mxu0 %v3739
    %3967 = vmatpush.msra.mxu0 %v3735
    %3968 = vmatmul.f32.gmra.mxu0 %v3930
    %v3969 = vpop.f32.mrf.mxu0
    %v3970 = vadd.f32 0.0, %v3969
    %3971 = vdwg.mxu0
    %3972 = vmatpush.msra.mxu0 0.0
    %3973 = vmatpush.msra.mxu0 0.0
    %3974 = vmatpush.msra.mxu0 0.0
    %3975 = vmatpush.msra.mxu0 0.0
    %3976 = vmatpush.msra.mxu0 0.0
    %3977 = vmatpush.msra.mxu0 0.0
    %3978 = vmatpush.msra.mxu0 0.0
    %3979 = vmatpush.msra.mxu0 0.0
    %3980 = vmatpush.msra.mxu0 0.0
    %3981 = vmatpush.msra.mxu0 0.0
    %3982 = vmatpush.msra.mxu0 0.0
    %3983 = vmatpush.msra.mxu0 0.0
    %3984 = vmatpush.msra.mxu0 %v3748
    %3985 = vmatpush.msra.mxu0 %v3744
    %3986 = vmatpush.msra.mxu0 %v3740
    %3987 = vmatpush.msra.mxu0 %v3736
    %3988 = vmatmul.f32.gmra.mxu0 %v3930
    %v3989 = vpop.f32.mrf.mxu0
    %v3990 = vadd.f32 0.0, %v3989
    %3991 = vdwg.mxu0
    %3992 = vmatpush.msra.mxu0 0.0
    %3993 = vmatpush.msra.mxu0 0.0
    %3994 = vmatpush.msra.mxu0 0.0
    %3995 = vmatpush.msra.mxu0 0.0
    %3996 = vmatpush.msra.mxu0 0.0
    %3997 = vmatpush.msra.mxu0 0.0
    %3998 = vmatpush.msra.mxu0 0.0
    %3999 = vmatpush.msra.mxu0 0.0
    %4000 = vmatpush.msra.mxu0 0.0
    %4001 = vmatpush.msra.mxu0 0.0
    %4002 = vmatpush.msra.mxu0 0.0
    %4003 = vmatpush.msra.mxu0 0.0
    %4004 = vmatpush.msra.mxu0 %v3749
    %4005 = vmatpush.msra.mxu0 %v3745
    %4006 = vmatpush.msra.mxu0 %v3741
    %4007 = vmatpush.msra.mxu0 %v3737
    %4008 = vmatmul.f32.gmra.mxu0 %v3930
    %v4009 = vpop.f32.mrf.mxu0
    %v4010 = vadd.f32 0.0, %v4009
    %4011 = vdwg.mxu0
    %v4012 = vperm.slane %v3950, 0
    %v4013 = vperm.slane %v3970, 0
    %v4014 = vperm.slane %v3990, 0
    %v4015 = vperm.slane %v4010, 0
    %v4016 = vsub.f32 %v3784, %v4012
    %v4017 = vsub.f32 %v3785, %v4013
    %v4018 = vsub.f32 %v3786, %v4014
    %v4019 = vsub.f32 %v3787, %v4015
    %v4020 = vsub.f32 %v3788, %v4012
    %v4021 = vsub.f32 %v3789, %v4013
    %v4022 = vsub.f32 %v3790, %v4014
    %v4023 = vsub.f32 %v3791, %v4015
    %v4024 = vsub.f32 %v3792, %v4012
    %v4025 = vsub.f32 %v3793, %v4013
    %v4026 = vsub.f32 %v3794, %v4014
    %v4027 = vsub.f32 %v3795, %v4015
    %v4028 = vsub.f32 %v3796, %v4012
    %v4029 = vsub.f32 %v3797, %v4013
    %v4030 = vsub.f32 %v3798, %v4014
    %v4031 = vsub.f32 %v3799, %v4015
    %v4032 = vmul.f32 %v4016, %v4016
    %v4033 = vmul.f32 %v4017, %v4017
    %v4034 = vmul.f32 %v4018, %v4018
    %v4035 = vmul.f32 %v4019, %v4019
    %v4036 = vmul.f32 %v4020, %v4020
    %v4037 = vmul.f32 %v4021, %v4021
    %v4038 = vmul.f32 %v4022, %v4022
    %v4039 = vmul.f32 %v4023, %v4023
    %v4040 = vmul.f32 %v4024, %v4024
    %v4041 = vmul.f32 %v4025, %v4025
    %v4042 = vmul.f32 %v4026, %v4026
    %v4043 = vmul.f32 %v4027, %v4027
    %v4044 = vmul.f32 %v4028, %v4028
    %v4045 = vmul.f32 %v4029, %v4029
    %v4046 = vmul.f32 %v4030, %v4030
    %v4047 = vmul.f32 %v4031, %v4031
    %v4048 = vadd.f32 %v4032, %v4036
    %v4049 = vadd.f32 %v4048, %v4040
    %v4050 = vsel %vm3802, %v4044, 0.0
    %v4051 = vadd.f32 %v4049, %v4050
    %v4052 = vrot.slane %v4051, 4
    %v4053 = vadd.f32 %v4051, %v4052
    %v4054 = vrot.slane %v4053, 2
    %v4055 = vadd.f32 %v4053, %v4054
    %v4056 = vrot.slane %v4055, 1
    %v4057 = vadd.f32 %v4055, %v4056
    %v4058 = vadd.f32 %v4033, %v4037
    %v4059 = vadd.f32 %v4058, %v4041
    %v4060 = vsel %vm3802, %v4045, 0.0
    %v4061 = vadd.f32 %v4059, %v4060
    %v4062 = vrot.slane %v4061, 4
    %v4063 = vadd.f32 %v4061, %v4062
    %v4064 = vrot.slane %v4063, 2
    %v4065 = vadd.f32 %v4063, %v4064
    %v4066 = vrot.slane %v4065, 1
    %v4067 = vadd.f32 %v4065, %v4066
    %v4068 = vadd.f32 %v4034, %v4038
    %v4069 = vadd.f32 %v4068, %v4042
    %v4070 = vsel %vm3802, %v4046, 0.0
    %v4071 = vadd.f32 %v4069, %v4070
    %v4072 = vrot.slane %v4071, 4
    %v4073 = vadd.f32 %v4071, %v4072
    %v4074 = vrot.slane %v4073, 2
    %v4075 = vadd.f32 %v4073, %v4074
    %v4076 = vrot.slane %v4075, 1
    %v4077 = vadd.f32 %v4075, %v4076
    %v4078 = vsel %vm150, %v4035, 0.0
    %v4079 = vsel %vm150, %v4039, 0.0
    %v4080 = vadd.f32 %v4078, %v4079
    %v4081 = vsel %vm150, %v4043, 0.0
    %v4082 = vadd.f32 %v4080, %v4081
    %v4083 = vsel %vm3836, %v4047, 0.0
    %v4084 = vadd.f32 %v4082, %v4083
    %v4085 = vrot.slane %v4084, 4
    %v4086 = vadd.f32 %v4084, %v4085
    %v4087 = vrot.slane %v4086, 2
    %v4088 = vadd.f32 %v4086, %v4087
    %v4089 = vrot.slane %v4088, 1
    %v4090 = vadd.f32 %v4088, %v4089
    %v4092 = vsel %vm150, %v4090, 0
    %4094 = vmatpush.msra.mxu0 %v3693
    %4095 = vmatpush.msra.mxu0 %v3692
    %4096 = vmatpush.msra.mxu0 %v3691
    %4097 = vmatpush.msra.mxu0 %v3690
    %4098 = vmatpush.msra.mxu0 %v3689
    %4099 = vmatpush.msra.mxu0 %v3688
    %4100 = vmatpush.msra.mxu0 %v3687
    %4101 = vmatpush.msra.mxu0 %v3686
    %4102 = vmatpush.msra.mxu0 %v3685
    %4103 = vmatpush.msra.mxu0 %v3684
    %4104 = vmatpush.msra.mxu0 %v3683
    %4105 = vmatpush.msra.mxu0 %v3682
    %4106 = vmatpush.msra.mxu0 %v3681
    %4107 = vmatpush.msra.mxu0 %v3680
    %4108 = vmatpush.msra.mxu0 %v3679
    %4109 = vmatpush.msra.mxu0 %v3678
    %4110 = vmatmul.f32.gmra.mxu0 %v4057
    %v4111 = vpop.f32.mrf.mxu0
    %v4112 = vadd.f32 0.0, %v4111
    %4113 = vdwg.mxu0
    %4114 = vmatpush.msra.mxu0 %v3709
    %4115 = vmatpush.msra.mxu0 %v3708
    %4116 = vmatpush.msra.mxu0 %v3707
    %4117 = vmatpush.msra.mxu0 %v3706
    %4118 = vmatpush.msra.mxu0 %v3705
    %4119 = vmatpush.msra.mxu0 %v3704
    %4120 = vmatpush.msra.mxu0 %v3703
    %4121 = vmatpush.msra.mxu0 %v3702
    %4122 = vmatpush.msra.mxu0 %v3701
    %4123 = vmatpush.msra.mxu0 %v3700
    %4124 = vmatpush.msra.mxu0 %v3699
    %4125 = vmatpush.msra.mxu0 %v3698
    %4126 = vmatpush.msra.mxu0 %v3697
    %4127 = vmatpush.msra.mxu0 %v3696
    %4128 = vmatpush.msra.mxu0 %v3695
    %4129 = vmatpush.msra.mxu0 %v3694
    %4130 = vmatmul.f32.gmra.mxu0 %v4067
    %v4131 = vpop.f32.mrf.mxu0
    %v4132 = vadd.f32 %v4112, %v4131
    %4133 = vdwg.mxu0
    %4134 = vmatpush.msra.mxu0 %v3725
    %4135 = vmatpush.msra.mxu0 %v3724
    %4136 = vmatpush.msra.mxu0 %v3723
    %4137 = vmatpush.msra.mxu0 %v3722
    %4138 = vmatpush.msra.mxu0 %v3721
    %4139 = vmatpush.msra.mxu0 %v3720
    %4140 = vmatpush.msra.mxu0 %v3719
    %4141 = vmatpush.msra.mxu0 %v3718
    %4142 = vmatpush.msra.mxu0 %v3717
    %4143 = vmatpush.msra.mxu0 %v3716
    %4144 = vmatpush.msra.mxu0 %v3715
    %4145 = vmatpush.msra.mxu0 %v3714
    %4146 = vmatpush.msra.mxu0 %v3713
    %4147 = vmatpush.msra.mxu0 %v3712
    %4148 = vmatpush.msra.mxu0 %v3711
    %4149 = vmatpush.msra.mxu0 %v3710
    %4150 = vmatmul.f32.gmra.mxu0 %v4077
    %v4151 = vpop.f32.mrf.mxu0
    %v4152 = vadd.f32 %v4132, %v4151
    %4153 = vdwg.mxu0
    %4154 = vmatpush.msra.mxu0 0.0
    %4155 = vmatpush.msra.mxu0 0.0
    %4156 = vmatpush.msra.mxu0 0.0
    %4157 = vmatpush.msra.mxu0 0.0
    %4158 = vmatpush.msra.mxu0 0.0
    %4159 = vmatpush.msra.mxu0 0.0
    %4160 = vmatpush.msra.mxu0 0.0
    %4161 = vmatpush.msra.mxu0 0.0
    %4162 = vmatpush.msra.mxu0 %v3733
    %4163 = vmatpush.msra.mxu0 %v3732
    %4164 = vmatpush.msra.mxu0 %v3731
    %4165 = vmatpush.msra.mxu0 %v3730
    %4166 = vmatpush.msra.mxu0 %v3729
    %4167 = vmatpush.msra.mxu0 %v3728
    %4168 = vmatpush.msra.mxu0 %v3727
    %4169 = vmatpush.msra.mxu0 %v3726
    %4170 = vmatmul.f32.gmra.mxu0 %v4092
    %v4171 = vpop.f32.mrf.mxu0
    %v4172 = vadd.f32 %v4152, %v4171
    %4173 = vdwg.mxu0
    %v4174 = vmul.f32 %v4172, 0.0025510204
    %v4176 = vsel %vm389, %v4174, 0
    %4178 = vmatpush.msra.mxu0 0.0
    %4179 = vmatpush.msra.mxu0 0.0
    %4180 = vmatpush.msra.mxu0 0.0
    %4181 = vmatpush.msra.mxu0 0.0
    %4182 = vmatpush.msra.mxu0 0.0
    %4183 = vmatpush.msra.mxu0 0.0
    %4184 = vmatpush.msra.mxu0 0.0
    %4185 = vmatpush.msra.mxu0 0.0
    %4186 = vmatpush.msra.mxu0 0.0
    %4187 = vmatpush.msra.mxu0 0.0
    %4188 = vmatpush.msra.mxu0 0.0
    %4189 = vmatpush.msra.mxu0 0.0
    %4190 = vmatpush.msra.mxu0 %v3746
    %4191 = vmatpush.msra.mxu0 %v3742
    %4192 = vmatpush.msra.mxu0 %v3738
    %4193 = vmatpush.msra.mxu0 %v3734
    %4194 = vmatmul.f32.gmra.mxu0 %v4176
    %v4195 = vpop.f32.mrf.mxu0
    %v4196 = vadd.f32 1e-05, %v4195
    %4197 = vdwg.mxu0
    %4198 = vmatpush.msra.mxu0 0.0
    %4199 = vmatpush.msra.mxu0 0.0
    %4200 = vmatpush.msra.mxu0 0.0
    %4201 = vmatpush.msra.mxu0 0.0
    %4202 = vmatpush.msra.mxu0 0.0
    %4203 = vmatpush.msra.mxu0 0.0
    %4204 = vmatpush.msra.mxu0 0.0
    %4205 = vmatpush.msra.mxu0 0.0
    %4206 = vmatpush.msra.mxu0 0.0
    %4207 = vmatpush.msra.mxu0 0.0
    %4208 = vmatpush.msra.mxu0 0.0
    %4209 = vmatpush.msra.mxu0 0.0
    %4210 = vmatpush.msra.mxu0 %v3747
    %4211 = vmatpush.msra.mxu0 %v3743
    %4212 = vmatpush.msra.mxu0 %v3739
    %4213 = vmatpush.msra.mxu0 %v3735
    %4214 = vmatmul.f32.gmra.mxu0 %v4176
    %v4215 = vpop.f32.mrf.mxu0
    %v4216 = vadd.f32 1e-05, %v4215
    %4217 = vdwg.mxu0
    %4218 = vmatpush.msra.mxu0 0.0
    %4219 = vmatpush.msra.mxu0 0.0
    %4220 = vmatpush.msra.mxu0 0.0
    %4221 = vmatpush.msra.mxu0 0.0
    %4222 = vmatpush.msra.mxu0 0.0
    %4223 = vmatpush.msra.mxu0 0.0
    %4224 = vmatpush.msra.mxu0 0.0
    %4225 = vmatpush.msra.mxu0 0.0
    %4226 = vmatpush.msra.mxu0 0.0
    %4227 = vmatpush.msra.mxu0 0.0
    %4228 = vmatpush.msra.mxu0 0.0
    %4229 = vmatpush.msra.mxu0 0.0
    %4230 = vmatpush.msra.mxu0 %v3748
    %4231 = vmatpush.msra.mxu0 %v3744
    %4232 = vmatpush.msra.mxu0 %v3740
    %4233 = vmatpush.msra.mxu0 %v3736
    %4234 = vmatmul.f32.gmra.mxu0 %v4176
    %v4235 = vpop.f32.mrf.mxu0
    %v4236 = vadd.f32 1e-05, %v4235
    %4237 = vdwg.mxu0
    %4238 = vmatpush.msra.mxu0 0.0
    %4239 = vmatpush.msra.mxu0 0.0
    %4240 = vmatpush.msra.mxu0 0.0
    %4241 = vmatpush.msra.mxu0 0.0
    %4242 = vmatpush.msra.mxu0 0.0
    %4243 = vmatpush.msra.mxu0 0.0
    %4244 = vmatpush.msra.mxu0 0.0
    %4245 = vmatpush.msra.mxu0 0.0
    %4246 = vmatpush.msra.mxu0 0.0
    %4247 = vmatpush.msra.mxu0 0.0
    %4248 = vmatpush.msra.mxu0 0.0
    %4249 = vmatpush.msra.mxu0 0.0
    %4250 = vmatpush.msra.mxu0 %v3749
    %4251 = vmatpush.msra.mxu0 %v3745
    %4252 = vmatpush.msra.mxu0 %v3741
    %4253 = vmatpush.msra.mxu0 %v3737
    %4254 = vmatmul.f32.gmra.mxu0 %v4176
    %v4255 = vpop.f32.mrf.mxu0
    %v4256 = vadd.f32 1e-05, %v4255
    %4257 = vdwg.mxu0
    %v4258 = vrsqrt.pop %v4196
    %v4259 = vmul.f32 %v4258, %v4196
    %v4260 = vmul.f32 %v4259, %v4258
    %v4261 = vmul.f32 0.5, %v4260
    %v4262 = vsub.f32 1.5, %v4261
    %v4263 = vmul.f32 %v4258, %v4262
    %vm4264 = vweird.f32 %v4196
    %vm4265 = vweird.f32 %v4258
    %vm4266 = vmor %vm4264, %vm4265
    %v4267 = vsel %vm4266, %v4258, %v4263
    %v4268 = vrsqrt.pop %v4216
    %v4269 = vmul.f32 %v4268, %v4216
    %v4270 = vmul.f32 %v4269, %v4268
    %v4271 = vmul.f32 0.5, %v4270
    %v4272 = vsub.f32 1.5, %v4271
    %v4273 = vmul.f32 %v4268, %v4272
    %vm4274 = vweird.f32 %v4216
    %vm4275 = vweird.f32 %v4268
    %vm4276 = vmor %vm4274, %vm4275
    %v4277 = vsel %vm4276, %v4268, %v4273
    %v4278 = vrsqrt.pop %v4236
    %v4279 = vmul.f32 %v4278, %v4236
    %v4280 = vmul.f32 %v4279, %v4278
    %v4281 = vmul.f32 0.5, %v4280
    %v4282 = vsub.f32 1.5, %v4281
    %v4283 = vmul.f32 %v4278, %v4282
    %vm4284 = vweird.f32 %v4236
    %vm4285 = vweird.f32 %v4278
    %vm4286 = vmor %vm4284, %vm4285
    %v4287 = vsel %vm4286, %v4278, %v4283
    %v4288 = vrsqrt.pop %v4256
    %v4289 = vmul.f32 %v4288, %v4256
    %v4290 = vmul.f32 %v4289, %v4288
    %v4291 = vmul.f32 0.5, %v4290
    %v4292 = vsub.f32 1.5, %v4291
    %v4293 = vmul.f32 %v4288, %v4292
    %vm4294 = vweird.f32 %v4256
    %vm4295 = vweird.f32 %v4288
    %vm4296 = vmor %vm4294, %vm4295
    %v4297 = vsel %vm4296, %v4288, %v4293
    %v4298 = vperm.slane %v4267, 0
    %v4299 = vperm.slane %v4277, 0
    %v4300 = vperm.slane %v4287, 0
    %v4301 = vperm.slane %v4297, 0
    %v4302 = vmul.f32 %v4016, %v4298
    %v4303 = vmul.f32 %v4017, %v4299
    %v4304 = vmul.f32 %v4018, %v4300
    %v4305 = vmul.f32 %v4019, %v4301
    %v4306 = vmul.f32 %v4020, %v4298
    %v4307 = vmul.f32 %v4021, %v4299
    %v4308 = vmul.f32 %v4022, %v4300
    %v4309 = vmul.f32 %v4023, %v4301
    %v4310 = vmul.f32 %v4024, %v4298
    %v4311 = vmul.f32 %v4025, %v4299
    %v4312 = vmul.f32 %v4026, %v4300
    %v4313 = vmul.f32 %v4027, %v4301
    %v4314 = vmul.f32 %v4028, %v4298
    %v4315 = vmul.f32 %v4029, %v4299
    %v4316 = vmul.f32 %v4030, %v4300
    %v4317 = vmul.f32 %v4031, %v4301
    %v4319 = vperm.slane %v3750, 0
    %v4320 = vperm.slane %v3750, 1
    %v4321 = vperm.slane %v3750, 2
    %v4322 = vperm.slane %v3750, 3
    %v4327 = vmul.f32 %v4302, %v4319
    %v4328 = vmul.f32 %v4303, %v4320
    %v4329 = vmul.f32 %v4304, %v4321
    %v4330 = vmul.f32 %v4305, %v4322
    %v4331 = vmul.f32 %v4306, %v4319
    %v4332 = vmul.f32 %v4307, %v4320
    %v4333 = vmul.f32 %v4308, %v4321
    %v4334 = vmul.f32 %v4309, %v4322
    %v4335 = vmul.f32 %v4310, %v4319
    %v4336 = vmul.f32 %v4311, %v4320
    %v4337 = vmul.f32 %v4312, %v4321
    %v4338 = vmul.f32 %v4313, %v4322
    %v4339 = vmul.f32 %v4314, %v4319
    %v4340 = vmul.f32 %v4315, %v4320
    %v4341 = vmul.f32 %v4316, %v4321
    %v4342 = vmul.f32 %v4317, %v4322
    %v4344 = vperm.slane %v3751, 0
    %v4345 = vperm.slane %v3751, 1
    %v4346 = vperm.slane %v3751, 2
    %v4347 = vperm.slane %v3751, 3
    %v4352 = vadd.f32 %v4327, %v4344
    %v4353 = vadd.f32 %v4328, %v4345
    %v4354 = vadd.f32 %v4329, %v4346
    %v4355 = vadd.f32 %v4330, %v4347
    %v4356 = vadd.f32 %v4331, %v4344
    %v4357 = vadd.f32 %v4332, %v4345
    %v4358 = vadd.f32 %v4333, %v4346
    %v4359 = vadd.f32 %v4334, %v4347
    %v4360 = vadd.f32 %v4335, %v4344
    %v4361 = vadd.f32 %v4336, %v4345
    %v4362 = vadd.f32 %v4337, %v4346
    %v4363 = vadd.f32 %v4338, %v4347
    %v4364 = vadd.f32 %v4339, %v4344
    %v4365 = vadd.f32 %v4340, %v4345
    %v4366 = vadd.f32 %v4341, %v4346
    %v4367 = vadd.f32 %v4342, %v4347
    %v4368 = vld [vmem:[#allocation4 + $0xb] sm:$0x1]
    %v4369 = vpack.c.bf16 %v4356, %v4352
    %v4370 = vpack.c.bf16 %v4357, %v4353
    %v4371 = vpack.c.bf16 %v4358, %v4354
    %v4372 = vpack.c.bf16 %v4359, %v4355
    %v4373 = vpack.c.bf16 %v4364, %v4360
    %v4374 = vpack.c.bf16 %v4365, %v4361
    %v4375 = vpack.c.bf16 %v4366, %v4362
    %v4376 = vpack.c.bf16 %v4367, %v4363
    %v4377 = vld [vmem:[%s13] sm:$0xff]
    %v4378 = vld [vmem:[%s13 + $0x8] sm:$0xff]
    %v4379 = vld [vmem:[%s13 + $0x10] sm:$0xff]
    %v4380 = vld [vmem:[%s13 + $0x18] sm:$0xff]
    %v4381 = vld [vmem:[%s13 + $0x20] sm:$0xff]
    %v4382 = vld [vmem:[%s13 + $0x28] sm:$0xff]
    %v4383 = vld [vmem:[%s13 + $0x30] sm:$0xff]
    %v4384 = vld [vmem:[%s13 + $0x38] sm:$0xff]
    %v4385 = vld [vmem:[%s13 + $0x40] sm:$0xff]
    %v4386 = vld [vmem:[%s13 + $0x48] sm:$0xff]
    %v4387 = vld [vmem:[%s13 + $0x50] sm:$0xff]
    %v4388 = vld [vmem:[%s13 + $0x58] sm:$0xff]
    %v4389 = vld [vmem:[%s13 + $0x60] sm:$0xff]
    %v4390 = vld [vmem:[%s13 + $0x68] sm:$0xff]
    %v4391 = vld [vmem:[%s13 + $0x70] sm:$0xff]
    %v4392 = vld [vmem:[%s13 + $0x78] sm:$0xff]
    %v4393 = vld [vmem:[%s13 + $0x80] sm:$0xff]
    %v4394 = vld [vmem:[%s13 + $0x88] sm:$0xff]
    %v4395 = vld [vmem:[%s13 + $0x90] sm:$0xff]
    %v4396 = vld [vmem:[%s13 + $0x98] sm:$0xff]
    %v4397 = vld [vmem:[%s13 + $0xa0] sm:$0xff]
    %v4398 = vld [vmem:[%s13 + $0xa8] sm:$0xff]
    %v4399 = vld [vmem:[%s13 + $0xb0] sm:$0xff]
    %v4400 = vld [vmem:[%s13 + $0xb8] sm:$0xff]
    %v4401 = vld [vmem:[%s13 + $0xc0] sm:$0xff]
    %v4402 = vld [vmem:[%s13 + $0xc8] sm:$0xff]
    %v4403 = vld [vmem:[%s13 + $0xd0] sm:$0xff]
    %v4404 = vld [vmem:[%s13 + $0xd8] sm:$0xff]
    %v4405 = vld [vmem:[%s13 + $0xe0] sm:$0xff]
    %v4406 = vld [vmem:[%s13 + $0xe8] sm:$0xff]
    %v4407 = vld [vmem:[%s13 + $0xf0] sm:$0xff]
    %v4408 = vld [vmem:[%s13 + $0xf8] sm:$0xff]
    %v4409 = vld [vmem:[%s13 + $0x100] sm:$0xff]
    %v4410 = vld [vmem:[%s13 + $0x108] sm:$0xff]
    %v4411 = vld [vmem:[%s13 + $0x110] sm:$0xff]
    %v4412 = vld [vmem:[%s13 + $0x118] sm:$0xff]
    %v4413 = vld [vmem:[%s13 + $0x120] sm:$0xff]
    %v4414 = vld [vmem:[%s13 + $0x128] sm:$0xff]
    %v4415 = vld [vmem:[%s13 + $0x130] sm:$0xff]
    %v4416 = vld [vmem:[%s13 + $0x138] sm:$0xff]
    %v4417 = vld [vmem:[%s13 + $0x140] sm:$0xff]
    %v4418 = vld [vmem:[%s13 + $0x148] sm:$0xff]
    %v4419 = vld [vmem:[%s13 + $0x150] sm:$0xff]
    %v4420 = vld [vmem:[%s13 + $0x158] sm:$0xff]
    %v4421 = vld [vmem:[%s13 + $0x160] sm:$0xff]
    %v4422 = vld [vmem:[%s13 + $0x168] sm:$0xff]
    %v4423 = vld [vmem:[%s13 + $0x170] sm:$0xff]
    %v4424 = vld [vmem:[%s13 + $0x178] sm:$0xff]
    %v4425 = vld [vmem:[%s13 + $0x180] sm:$0xff]
    %v4426 = vld [vmem:[%s13 + $0x188] sm:$0xff]
    %v4427 = vld [vmem:[%s13 + $0x190] sm:$0xff]
    %v4428 = vld [vmem:[%s13 + $0x198] sm:$0xff]
    %v4429 = vld [vmem:[%s13 + $0x1a0] sm:$0xff]
    %v4430 = vld [vmem:[%s13 + $0x1a8] sm:$0xff]
    %v4431 = vld [vmem:[%s13 + $0x1b0] sm:$0xff]
    %v4432 = vld [vmem:[%s13 + $0x1b8] sm:$0xff]
    %v4489 = vunpack.c.l.b16 %v4377
    %v4490 = vunpack.c.h.b16 %v4377
    %v4491 = vunpack.c.l.b16 %v4378
    %v4492 = vunpack.c.h.b16 %v4378
    %v4493 = vunpack.c.l.b16 %v4379
    %v4494 = vunpack.c.h.b16 %v4379
    %v4495 = vunpack.c.l.b16 %v4380
    %v4496 = vunpack.c.h.b16 %v4380
    %v4497 = vunpack.c.l.b16 %v4381
    %v4498 = vunpack.c.h.b16 %v4381
    %v4499 = vunpack.c.l.b16 %v4382
    %v4500 = vunpack.c.h.b16 %v4382
    %v4501 = vunpack.c.l.b16 %v4383
    %v4502 = vunpack.c.h.b16 %v4383
    %v4503 = vunpack.c.l.b16 %v4384
    %v4504 = vunpack.c.h.b16 %v4384
    %v4505 = vunpack.c.l.b16 %v4385
    %v4506 = vunpack.c.h.b16 %v4385
    %v4507 = vunpack.c.l.b16 %v4386
    %v4508 = vunpack.c.h.b16 %v4386
    %v4509 = vunpack.c.l.b16 %v4387
    %v4510 = vunpack.c.h.b16 %v4387
    %v4511 = vunpack.c.l.b16 %v4388
    %v4512 = vunpack.c.h.b16 %v4388
    %v4513 = vunpack.c.l.b16 %v4389
    %v4514 = vunpack.c.h.b16 %v4389
    %v4515 = vunpack.c.l.b16 %v4390
    %v4516 = vunpack.c.h.b16 %v4390
    %v4517 = vunpack.c.l.b16 %v4391
    %v4518 = vunpack.c.h.b16 %v4391
    %v4519 = vunpack.c.l.b16 %v4392
    %v4520 = vunpack.c.h.b16 %v4392
    %v4521 = vunpack.c.l.b16 %v4393
    %v4522 = vunpack.c.h.b16 %v4393
    %v4523 = vunpack.c.l.b16 %v4394
    %v4524 = vunpack.c.h.b16 %v4394
    %v4525 = vunpack.c.l.b16 %v4395
    %v4526 = vunpack.c.h.b16 %v4395
    %v4527 = vunpack.c.l.b16 %v4396
    %v4528 = vunpack.c.h.b16 %v4396
    %v4529 = vunpack.c.l.b16 %v4397
    %v4530 = vunpack.c.h.b16 %v4397
    %v4531 = vunpack.c.l.b16 %v4398
    %v4532 = vunpack.c.h.b16 %v4398
    %v4533 = vunpack.c.l.b16 %v4399
    %v4534 = vunpack.c.h.b16 %v4399
    %v4535 = vunpack.c.l.b16 %v4400
    %v4536 = vunpack.c.h.b16 %v4400
    %v4537 = vunpack.c.l.b16 %v4401
    %v4538 = vunpack.c.h.b16 %v4401
    %v4539 = vunpack.c.l.b16 %v4402
    %v4540 = vunpack.c.h.b16 %v4402
    %v4541 = vunpack.c.l.b16 %v4403
    %v4542 = vunpack.c.h.b16 %v4403
    %v4543 = vunpack.c.l.b16 %v4404
    %v4544 = vunpack.c.h.b16 %v4404
    %v4545 = vunpack.c.l.b16 %v4405
    %v4546 = vunpack.c.h.b16 %v4405
    %v4547 = vunpack.c.l.b16 %v4406
    %v4548 = vunpack.c.h.b16 %v4406
    %v4549 = vunpack.c.l.b16 %v4407
    %v4550 = vunpack.c.h.b16 %v4407
    %v4551 = vunpack.c.l.b16 %v4408
    %v4552 = vunpack.c.h.b16 %v4408
    %v4553 = vunpack.c.l.b16 %v4409
    %v4554 = vunpack.c.h.b16 %v4409
    %v4555 = vunpack.c.l.b16 %v4410
    %v4556 = vunpack.c.h.b16 %v4410
    %v4557 = vunpack.c.l.b16 %v4411
    %v4558 = vunpack.c.h.b16 %v4411
    %v4559 = vunpack.c.l.b16 %v4412
    %v4560 = vunpack.c.h.b16 %v4412
    %v4561 = vunpack.c.l.b16 %v4413
    %v4562 = vunpack.c.h.b16 %v4413
    %v4563 = vunpack.c.l.b16 %v4414
    %v4564 = vunpack.c.h.b16 %v4414
    %v4565 = vunpack.c.l.b16 %v4415
    %v4566 = vunpack.c.h.b16 %v4415
    %v4567 = vunpack.c.l.b16 %v4416
    %v4568 = vunpack.c.h.b16 %v4416
    %v4569 = vunpack.c.l.b16 %v4417
    %v4570 = vunpack.c.h.b16 %v4417
    %v4571 = vunpack.c.l.b16 %v4418
    %v4572 = vunpack.c.h.b16 %v4418
    %v4573 = vunpack.c.l.b16 %v4419
    %v4574 = vunpack.c.h.b16 %v4419
    %v4575 = vunpack.c.l.b16 %v4420
    %v4576 = vunpack.c.h.b16 %v4420
    %v4577 = vunpack.c.l.b16 %v4421
    %v4578 = vunpack.c.h.b16 %v4421
    %v4579 = vunpack.c.l.b16 %v4422
    %v4580 = vunpack.c.h.b16 %v4422
    %v4581 = vunpack.c.l.b16 %v4423
    %v4582 = vunpack.c.h.b16 %v4423
    %v4583 = vunpack.c.l.b16 %v4424
    %v4584 = vunpack.c.h.b16 %v4424
    %v4585 = vunpack.c.l.b16 %v4425
    %v4586 = vunpack.c.h.b16 %v4425
    %v4587 = vunpack.c.l.b16 %v4426
    %v4588 = vunpack.c.h.b16 %v4426
    %v4589 = vunpack.c.l.b16 %v4427
    %v4590 = vunpack.c.h.b16 %v4427
    %v4591 = vunpack.c.l.b16 %v4428
    %v4592 = vunpack.c.h.b16 %v4428
    %v4593 = vunpack.c.l.b16 %v4429
    %v4594 = vunpack.c.h.b16 %v4429
    %v4595 = vunpack.c.l.b16 %v4430
    %v4596 = vunpack.c.h.b16 %v4430
    %v4597 = vunpack.c.l.b16 %v4431
    %v4598 = vunpack.c.h.b16 %v4431
    %v4599 = vunpack.c.l.b16 %v4432
    %v4600 = vunpack.c.h.b16 %v4432
    %v4601 = vpack.c.b16 %v4491, %v4489
    %v4602 = vpack.c.b16 %v4492, %v4490
    %v4603 = vpack.c.b16 %v4495, %v4493
    %v4604 = vpack.c.b16 %v4496, %v4494
    %v4605 = vpack.c.b16 %v4499, %v4497
    %v4606 = vpack.c.b16 %v4500, %v4498
    %v4607 = vpack.c.b16 %v4503, %v4501
    %v4608 = vpack.c.b16 %v4504, %v4502
    %v4609 = vpack.c.b16 %v4507, %v4505
    %v4610 = vpack.c.b16 %v4508, %v4506
    %v4611 = vpack.c.b16 %v4511, %v4509
    %v4612 = vpack.c.b16 %v4512, %v4510
    %v4613 = vpack.c.b16 %v4515, %v4513
    %v4614 = vpack.c.b16 %v4516, %v4514
    %v4615 = vpack.c.b16 %v4519, %v4517
    %v4616 = vpack.c.b16 %v4520, %v4518
    %v4617 = vpack.c.b16 %v4523, %v4521
    %v4618 = vpack.c.b16 %v4524, %v4522
    %v4619 = vpack.c.b16 %v4527, %v4525
    %v4620 = vpack.c.b16 %v4528, %v4526
    %v4621 = vpack.c.b16 %v4531, %v4529
    %v4622 = vpack.c.b16 %v4532, %v4530
    %v4623 = vpack.c.b16 %v4535, %v4533
    %v4624 = vpack.c.b16 %v4536, %v4534
    %v4625 = vpack.c.b16 %v4539, %v4537
    %v4626 = vpack.c.b16 %v4540, %v4538
    %v4627 = vpack.c.b16 %v4543, %v4541
    %v4628 = vpack.c.b16 %v4544, %v4542
    %v4629 = vpack.c.b16 %v4547, %v4545
    %v4630 = vpack.c.b16 %v4548, %v4546
    %v4631 = vpack.c.b16 %v4551, %v4549
    %v4632 = vpack.c.b16 %v4552, %v4550
    %v4633 = vpack.c.b16 %v4555, %v4553
    %v4634 = vpack.c.b16 %v4556, %v4554
    %v4635 = vpack.c.b16 %v4559, %v4557
    %v4636 = vpack.c.b16 %v4560, %v4558
    %v4637 = vpack.c.b16 %v4563, %v4561
    %v4638 = vpack.c.b16 %v4564, %v4562
    %v4639 = vpack.c.b16 %v4567, %v4565
    %v4640 = vpack.c.b16 %v4568, %v4566
    %v4641 = vpack.c.b16 %v4571, %v4569
    %v4642 = vpack.c.b16 %v4572, %v4570
    %v4643 = vpack.c.b16 %v4575, %v4573
    %v4644 = vpack.c.b16 %v4576, %v4574
    %v4645 = vpack.c.b16 %v4579, %v4577
    %v4646 = vpack.c.b16 %v4580, %v4578
    %v4647 = vpack.c.b16 %v4583, %v4581
    %v4648 = vpack.c.b16 %v4584, %v4582
    %v4649 = vpack.c.b16 %v4587, %v4585
    %v4650 = vpack.c.b16 %v4588, %v4586
    %v4651 = vpack.c.b16 %v4591, %v4589
    %v4652 = vpack.c.b16 %v4592, %v4590
    %v4653 = vpack.c.b16 %v4595, %v4593
    %v4654 = vpack.c.b16 %v4596, %v4594
    %v4655 = vpack.c.b16 %v4599, %v4597
    %v4656 = vpack.c.b16 %v4600, %v4598
    %v4714 = vsel %vm150, %v4372, 0
    %v4717 = vsel %vm150, %v4376, 0
    %4719 = vmatpush.bf16.msra.mxu0 %v4615
    %4720 = vmatpush.bf16.msra.mxu0 %v4613
    %4721 = vmatpush.bf16.msra.mxu0 %v4611
    %4722 = vmatpush.bf16.msra.mxu0 %v4609
    %4723 = vmatpush.bf16.msra.mxu0 %v4607
    %4724 = vmatpush.bf16.msra.mxu0 %v4605
    %4725 = vmatpush.bf16.msra.mxu0 %v4603
    %4726 = vmatpush.bf16.msra.mxu0 %v4601
    %4727 = vmatmul.bf16.gmra.mxu0 %v4369
    %v4728 = vpop.f32.mrf.mxu0
    %v4729 = vadd.f32 0.0, %v4728
    %v4730 = vpop.f32.mrf.mxu0
    %v4731 = vadd.f32 0.0, %v4730
    %4732 = vmatmul.bf16.gmra.mxu0 %v4373
    %v4733 = vpop.f32.mrf.mxu0
    %v4734 = vadd.f32 0.0, %v4733
    %v4735 = vpop.f32.mrf.mxu0
    %v4736 = vadd.f32 0.0, %v4735
    %4737 = vdwg.mxu0
    %4738 = vmatpush.bf16.msra.mxu0 %v4631
    %4739 = vmatpush.bf16.msra.mxu0 %v4629
    %4740 = vmatpush.bf16.msra.mxu0 %v4627
    %4741 = vmatpush.bf16.msra.mxu0 %v4625
    %4742 = vmatpush.bf16.msra.mxu0 %v4623
    %4743 = vmatpush.bf16.msra.mxu0 %v4621
    %4744 = vmatpush.bf16.msra.mxu0 %v4619
    %4745 = vmatpush.bf16.msra.mxu0 %v4617
    %4746 = vmatmul.bf16.gmra.mxu0 %v4370
    %v4747 = vpop.f32.mrf.mxu0
    %v4748 = vadd.f32 %v4729, %v4747
    %v4749 = vpop.f32.mrf.mxu0
    %v4750 = vadd.f32 %v4731, %v4749
    %4751 = vmatmul.bf16.gmra.mxu0 %v4374
    %v4752 = vpop.f32.mrf.mxu0
    %v4753 = vadd.f32 %v4734, %v4752
    %v4754 = vpop.f32.mrf.mxu0
    %v4755 = vadd.f32 %v4736, %v4754
    %4756 = vdwg.mxu0
    %4757 = vmatpush.bf16.msra.mxu0 %v4647
    %4758 = vmatpush.bf16.msra.mxu0 %v4645
    %4759 = vmatpush.bf16.msra.mxu0 %v4643
    %4760 = vmatpush.bf16.msra.mxu0 %v4641
    %4761 = vmatpush.bf16.msra.mxu0 %v4639
    %4762 = vmatpush.bf16.msra.mxu0 %v4637
    %4763 = vmatpush.bf16.msra.mxu0 %v4635
    %4764 = vmatpush.bf16.msra.mxu0 %v4633
    %4765 = vmatmul.bf16.gmra.mxu0 %v4371
    %v4766 = vpop.f32.mrf.mxu0
    %v4767 = vadd.f32 %v4748, %v4766
    %v4768 = vpop.f32.mrf.mxu0
    %v4769 = vadd.f32 %v4750, %v4768
    %4770 = vmatmul.bf16.gmra.mxu0 %v4375
    %v4771 = vpop.f32.mrf.mxu0
    %v4772 = vadd.f32 %v4753, %v4771
    %v4773 = vpop.f32.mrf.mxu0
    %v4774 = vadd.f32 %v4755, %v4773
    %4775 = vdwg.mxu0
    %4776 = vmatpush.bf16.msra.mxu0 0
    %4777 = vmatpush.bf16.msra.mxu0 0
    %4778 = vmatpush.bf16.msra.mxu0 0
    %4779 = vmatpush.bf16.msra.mxu0 0
    %4780 = vmatpush.bf16.msra.mxu0 %v4655
    %4781 = vmatpush.bf16.msra.mxu0 %v4653
    %4782 = vmatpush.bf16.msra.mxu0 %v4651
    %4783 = vmatpush.bf16.msra.mxu0 %v4649
    %4784 = vmatmul.bf16.gmra.mxu0 %v4714
    %v4785 = vpop.f32.mrf.mxu0
    %v4786 = vadd.f32 %v4767, %v4785
    %v4787 = vpop.f32.mrf.mxu0
    %v4788 = vadd.f32 %v4769, %v4787
    %4789 = vmatmul.bf16.gmra.mxu0 %v4717
    %v4790 = vpop.f32.mrf.mxu0
    %v4791 = vadd.f32 %v4772, %v4790
    %v4792 = vpop.f32.mrf.mxu0
    %v4793 = vadd.f32 %v4774, %v4792
    %4794 = vdwg.mxu0
    %4795 = vmatpush.bf16.msra.mxu0 %v4616
    %4796 = vmatpush.bf16.msra.mxu0 %v4614
    %4797 = vmatpush.bf16.msra.mxu0 %v4612
    %4798 = vmatpush.bf16.msra.mxu0 %v4610
    %4799 = vmatpush.bf16.msra.mxu0 %v4608
    %4800 = vmatpush.bf16.msra.mxu0 %v4606
    %4801 = vmatpush.bf16.msra.mxu0 %v4604
    %4802 = vmatpush.bf16.msra.mxu0 %v4602
    %4803 = vmatmul.bf16.gmra.mxu0 %v4369
    %v4804 = vpop.f32.mrf.mxu0
    %v4805 = vadd.f32 0.0, %v4804
    %v4806 = vpop.f32.mrf.mxu0
    %v4807 = vadd.f32 0.0, %v4806
    %4808 = vmatmul.bf16.gmra.mxu0 %v4373
    %v4809 = vpop.f32.mrf.mxu0
    %v4810 = vadd.f32 0.0, %v4809
    %v4811 = vpop.f32.mrf.mxu0
    %v4812 = vadd.f32 0.0, %v4811
    %4813 = vdwg.mxu0
    %4814 = vmatpush.bf16.msra.mxu0 %v4632
    %4815 = vmatpush.bf16.msra.mxu0 %v4630
    %4816 = vmatpush.bf16.msra.mxu0 %v4628
    %4817 = vmatpush.bf16.msra.mxu0 %v4626
    %4818 = vmatpush.bf16.msra.mxu0 %v4624
    %4819 = vmatpush.bf16.msra.mxu0 %v4622
    %4820 = vmatpush.bf16.msra.mxu0 %v4620
    %4821 = vmatpush.bf16.msra.mxu0 %v4618
    %4822 = vmatmul.bf16.gmra.mxu0 %v4370
    %v4823 = vpop.f32.mrf.mxu0
    %v4824 = vadd.f32 %v4805, %v4823
    %v4825 = vpop.f32.mrf.mxu0
    %v4826 = vadd.f32 %v4807, %v4825
    %4827 = vmatmul.bf16.gmra.mxu0 %v4374
    %v4828 = vpop.f32.mrf.mxu0
    %v4829 = vadd.f32 %v4810, %v4828
    %v4830 = vpop.f32.mrf.mxu0
    %v4831 = vadd.f32 %v4812, %v4830
    %4832 = vdwg.mxu0
    %4833 = vmatpush.bf16.msra.mxu0 %v4648
    %4834 = vmatpush.bf16.msra.mxu0 %v4646
    %4835 = vmatpush.bf16.msra.mxu0 %v4644
    %4836 = vmatpush.bf16.msra.mxu0 %v4642
    %4837 = vmatpush.bf16.msra.mxu0 %v4640
    %4838 = vmatpush.bf16.msra.mxu0 %v4638
    %4839 = vmatpush.bf16.msra.mxu0 %v4636
    %4840 = vmatpush.bf16.msra.mxu0 %v4634
    %4841 = vmatmul.bf16.gmra.mxu0 %v4371
    %v4842 = vpop.f32.mrf.mxu0
    %v4843 = vadd.f32 %v4824, %v4842
    %v4844 = vpop.f32.mrf.mxu0
    %v4845 = vadd.f32 %v4826, %v4844
    %4846 = vmatmul.bf16.gmra.mxu0 %v4375
    %v4847 = vpop.f32.mrf.mxu0
    %v4848 = vadd.f32 %v4829, %v4847
    %v4849 = vpop.f32.mrf.mxu0
    %v4850 = vadd.f32 %v4831, %v4849
    %4851 = vdwg.mxu0
    %4852 = vmatpush.bf16.msra.mxu0 0
    %4853 = vmatpush.bf16.msra.mxu0 0
    %4854 = vmatpush.bf16.msra.mxu0 0
    %4855 = vmatpush.bf16.msra.mxu0 0
    %4856 = vmatpush.bf16.msra.mxu0 %v4656
    %4857 = vmatpush.bf16.msra.mxu0 %v4654
    %4858 = vmatpush.bf16.msra.mxu0 %v4652
    %4859 = vmatpush.bf16.msra.mxu0 %v4650
    %4860 = vmatmul.bf16.gmra.mxu0 %v4714
    %v4861 = vpop.f32.mrf.mxu0
    %v4862 = vadd.f32 %v4843, %v4861
    %v4863 = vpop.f32.mrf.mxu0
    %v4864 = vadd.f32 %v4845, %v4863
    %4865 = vmatmul.bf16.gmra.mxu0 %v4717
    %v4866 = vpop.f32.mrf.mxu0
    %v4867 = vadd.f32 %v4848, %v4866
    %v4868 = vpop.f32.mrf.mxu0
    %v4869 = vadd.f32 %v4850, %v4868
    %4870 = vdwg.mxu0
    %v4871 = vld [vmem:[%s14] sm:$0xff]
    %v4872 = vld [vmem:[%s14 + $0x8] sm:$0xff]
    %v4873 = vld [vmem:[%s14 + $0x10] sm:$0xff]
    %v4874 = vld [vmem:[%s14 + $0x18] sm:$0xff]
    %v4875 = vld [vmem:[%s14 + $0x20] sm:$0xff]
    %v4876 = vld [vmem:[%s14 + $0x28] sm:$0xff]
    %v4877 = vld [vmem:[%s14 + $0x30] sm:$0xff]
    %v4879 = vperm.slane %v4368, 0
    %vm4881 = vcmask 228352
    %v4883 = vsel %vm4881, %v4871, 0
    %v4886 = vsel %vm4881, %v4872, 0
    %v4889 = vsel %vm4881, %v4873, 0
    %v4892 = vsel %vm4881, %v4874, 0
    %v4895 = vsel %vm4881, %v4875, 0
    %v4898 = vsel %vm4881, %v4876, 0
    %v4901 = vsel %vm4881, %v4877, 0
    %v4904 = vsel %vm3802, %v4793, 0
    %4906 = vmatpush.msra.mxu0 0.0
    %4907 = vmatpush.msra.mxu0 0.0
    %4908 = vmatpush.msra.mxu0 0.0
    %4909 = vmatpush.msra.mxu0 0.0
    %4910 = vmatpush.msra.mxu0 0.0
    %4911 = vmatpush.msra.mxu0 0.0
    %4912 = vmatpush.msra.mxu0 0.0
    %4913 = vmatpush.msra.mxu0 0.0
    %4914 = vmatpush.msra.mxu0 0.0
    %4915 = vmatpush.msra.mxu0 0.0
    %4916 = vmatpush.msra.mxu0 0.0
    %4917 = vmatpush.msra.mxu0 0.0
    %4918 = vmatpush.msra.mxu0 %v4904
    %4919 = vmatpush.msra.mxu0 %v4791
    %4920 = vmatpush.msra.mxu0 %v4788
    %4921 = vmatpush.msra.mxu0 %v4786
    %4922 = vmatmul.f32.gmra.mxu0 %v4883
    %v4923 = vpop.f32.mrf.mxu0
    %v4924 = vadd.f32 %v4879, %v4923
    %4925 = vmatmul.f32.gmra.mxu0 %v4886
    %v4926 = vpop.f32.mrf.mxu0
    %v4927 = vadd.f32 %v4879, %v4926
    %4928 = vmatmul.f32.gmra.mxu0 %v4889
    %v4929 = vpop.f32.mrf.mxu0
    %v4930 = vadd.f32 %v4879, %v4929
    %4931 = vmatmul.f32.gmra.mxu0 %v4892
    %v4932 = vpop.f32.mrf.mxu0
    %v4933 = vadd.f32 %v4879, %v4932
    %4934 = vmatmul.f32.gmra.mxu0 %v4895
    %v4935 = vpop.f32.mrf.mxu0
    %v4936 = vadd.f32 %v4879, %v4935
    %4937 = vmatmul.f32.gmra.mxu0 %v4898
    %v4938 = vpop.f32.mrf.mxu0
    %v4939 = vadd.f32 %v4879, %v4938
    %4940 = vmatmul.f32.gmra.mxu0 %v4901
    %v4941 = vpop.f32.mrf.mxu0
    %v4942 = vadd.f32 %v4879, %v4941
    %4943 = vdwg.mxu0
    %s4944 = scalar_lea.vmem %s14, 56
    %v4945 = vld [vmem:[%s4944] sm:$0xff]
    %v4946 = vld [vmem:[%s4944 + $0x8] sm:$0xff]
    %v4947 = vld [vmem:[%s4944 + $0x10] sm:$0xff]
    %v4948 = vld [vmem:[%s4944 + $0x18] sm:$0xff]
    %v4949 = vld [vmem:[%s4944 + $0x20] sm:$0xff]
    %v4950 = vld [vmem:[%s4944 + $0x28] sm:$0xff]
    %v4951 = vld [vmem:[%s4944 + $0x30] sm:$0xff]
    %4955 = vrot.lane.b32.xlu0 %v4786, 72
    %v4956 = vpop.permute.xlu0 %4955
    %4957 = vrot.lane.b32.xlu0 %v4788, 72
    %v4958 = vpop.permute.xlu0 %4957
    %4959 = vrot.lane.b32.xlu0 %v4791, 72
    %v4960 = vpop.permute.xlu0 %4959
    %4961 = vrot.lane.b32.xlu0 %v4793, 72
    %v4962 = vpop.permute.xlu0 %4961
    %v4967 = vsel %vm4881, %v4945, 0
    %v4970 = vsel %vm4881, %v4946, 0
    %v4973 = vsel %vm4881, %v4947, 0
    %v4976 = vsel %vm4881, %v4948, 0
    %v4979 = vsel %vm4881, %v4949, 0
    %v4982 = vsel %vm4881, %v4950, 0
    %v4985 = vsel %vm4881, %v4951, 0
    %v4987 = vsel %vm3802, %v4962, 0
    %4989 = vmatpush.msra.mxu0 0.0
    %4990 = vmatpush.msra.mxu0 0.0
    %4991 = vmatpush.msra.mxu0 0.0
    %4992 = vmatpush.msra.mxu0 0.0
    %4993 = vmatpush.msra.mxu0 0.0
    %4994 = vmatpush.msra.mxu0 0.0
    %4995 = vmatpush.msra.mxu0 0.0
    %4996 = vmatpush.msra.mxu0 0.0
    %4997 = vmatpush.msra.mxu0 0.0
    %4998 = vmatpush.msra.mxu0 0.0
    %4999 = vmatpush.msra.mxu0 0.0
    %5000 = vmatpush.msra.mxu0 0.0
    %5001 = vmatpush.msra.mxu0 %v4987
    %5002 = vmatpush.msra.mxu0 %v4960
    %5003 = vmatpush.msra.mxu0 %v4958
    %5004 = vmatpush.msra.mxu0 %v4956
    %5005 = vmatmul.f32.gmra.mxu0 %v4967
    %v5006 = vpop.f32.mrf.mxu0
    %v5007 = vadd.f32 0.0, %v5006
    %5008 = vmatmul.f32.gmra.mxu0 %v4970
    %v5009 = vpop.f32.mrf.mxu0
    %v5010 = vadd.f32 0.0, %v5009
    %5011 = vmatmul.f32.gmra.mxu0 %v4973
    %v5012 = vpop.f32.mrf.mxu0
    %v5013 = vadd.f32 0.0, %v5012
    %5014 = vmatmul.f32.gmra.mxu0 %v4976
    %v5015 = vpop.f32.mrf.mxu0
    %v5016 = vadd.f32 0.0, %v5015
    %5017 = vmatmul.f32.gmra.mxu0 %v4979
    %v5018 = vpop.f32.mrf.mxu0
    %v5019 = vadd.f32 0.0, %v5018
    %5020 = vmatmul.f32.gmra.mxu0 %v4982
    %v5021 = vpop.f32.mrf.mxu0
    %v5022 = vadd.f32 0.0, %v5021
    %5023 = vmatmul.f32.gmra.mxu0 %v4985
    %v5024 = vpop.f32.mrf.mxu0
    %v5025 = vadd.f32 0.0, %v5024
    %5026 = vdwg.mxu0
    %v5027 = vadd.f32 %v4924, %v5007
    %v5028 = vadd.f32 %v4927, %v5010
    %v5029 = vadd.f32 %v4930, %v5013
    %v5030 = vadd.f32 %v4933, %v5016
    %v5031 = vadd.f32 %v4936, %v5019
    %v5032 = vadd.f32 %v4939, %v5022
    %v5033 = vadd.f32 %v4942, %v5025
    %s5034 = scalar_lea.vmem %s14, 112
    %v5035 = vld [vmem:[%s5034] sm:$0xff]
    %v5036 = vld [vmem:[%s5034 + $0x8] sm:$0xff]
    %v5037 = vld [vmem:[%s5034 + $0x10] sm:$0xff]
    %v5038 = vld [vmem:[%s5034 + $0x18] sm:$0xff]
    %v5039 = vld [vmem:[%s5034 + $0x20] sm:$0xff]
    %v5040 = vld [vmem:[%s5034 + $0x28] sm:$0xff]
    %v5041 = vld [vmem:[%s5034 + $0x30] sm:$0xff]
    %5046 = vrot.lane.b32.xlu0 %v4786, 16
    %v5047 = vpop.permute.xlu0 %5046
    %5048 = vrot.lane.b32.xlu0 %v4862, 16
    %v5049 = vpop.permute.xlu0 %5048
    %5050 = vrot.lane.b32.xlu0 %v4788, 16
    %v5051 = vpop.permute.xlu0 %5050
    %5052 = vrot.lane.b32.xlu0 %v4864, 16
    %v5053 = vpop.permute.xlu0 %5052
    %5054 = vrot.lane.b32.xlu0 %v4791, 16
    %v5055 = vpop.permute.xlu0 %5054
    %5056 = vrot.lane.b32.xlu0 %v4867, 16
    %v5057 = vpop.permute.xlu0 %5056
    %5058 = vrot.lane.b32.xlu0 %v4793, 16
    %v5059 = vpop.permute.xlu0 %5058
    %5060 = vrot.lane.b32.xlu0 %v4869, 16
    %v5061 = vpop.permute.xlu0 %5060
    %vm5062 = vcmask 130048
    %v5063 = vsel %vm5062, %v5047, %v5049
    %v5064 = vsel %vm5062, %v5051, %v5053
    %v5065 = vsel %vm5062, %v5055, %v5057
    %v5066 = vsel %vm5062, %v5059, %v5061
    %v5071 = vsel %vm4881, %v5035, 0
    %v5074 = vsel %vm4881, %v5036, 0
    %v5077 = vsel %vm4881, %v5037, 0
    %v5080 = vsel %vm4881, %v5038, 0
    %v5083 = vsel %vm4881, %v5039, 0
    %v5086 = vsel %vm4881, %v5040, 0
    %v5089 = vsel %vm4881, %v5041, 0
    %v5091 = vsel %vm3802, %v5066, 0
    %5093 = vmatpush.msra.mxu0 0.0
    %5094 = vmatpush.msra.mxu0 0.0
    %5095 = vmatpush.msra.mxu0 0.0
    %5096 = vmatpush.msra.mxu0 0.0
    %5097 = vmatpush.msra.mxu0 0.0
    %5098 = vmatpush.msra.mxu0 0.0
    %5099 = vmatpush.msra.mxu0 0.0
    %5100 = vmatpush.msra.mxu0 0.0
    %5101 = vmatpush.msra.mxu0 0.0
    %5102 = vmatpush.msra.mxu0 0.0
    %5103 = vmatpush.msra.mxu0 0.0
    %5104 = vmatpush.msra.mxu0 0.0
    %5105 = vmatpush.msra.mxu0 %v5091
    %5106 = vmatpush.msra.mxu0 %v5065
    %5107 = vmatpush.msra.mxu0 %v5064
    %5108 = vmatpush.msra.mxu0 %v5063
    %5109 = vmatmul.f32.gmra.mxu0 %v5071
    %v5110 = vpop.f32.mrf.mxu0
    %v5111 = vadd.f32 0.0, %v5110
    %5112 = vmatmul.f32.gmra.mxu0 %v5074
    %v5113 = vpop.f32.mrf.mxu0
    %v5114 = vadd.f32 0.0, %v5113
    %5115 = vmatmul.f32.gmra.mxu0 %v5077
    %v5116 = vpop.f32.mrf.mxu0
    %v5117 = vadd.f32 0.0, %v5116
    %5118 = vmatmul.f32.gmra.mxu0 %v5080
    %v5119 = vpop.f32.mrf.mxu0
    %v5120 = vadd.f32 0.0, %v5119
    %5121 = vmatmul.f32.gmra.mxu0 %v5083
    %v5122 = vpop.f32.mrf.mxu0
    %v5123 = vadd.f32 0.0, %v5122
    %5124 = vmatmul.f32.gmra.mxu0 %v5086
    %v5125 = vpop.f32.mrf.mxu0
    %v5126 = vadd.f32 0.0, %v5125
    %5127 = vmatmul.f32.gmra.mxu0 %v5089
    %v5128 = vpop.f32.mrf.mxu0
    %v5129 = vadd.f32 0.0, %v5128
    %5130 = vdwg.mxu0
    %v5131 = vadd.f32 %v5027, %v5111
    %v5132 = vadd.f32 %v5028, %v5114
    %v5133 = vadd.f32 %v5029, %v5117
    %v5134 = vadd.f32 %v5030, %v5120
    %v5135 = vadd.f32 %v5031, %v5123
    %v5136 = vadd.f32 %v5032, %v5126
    %v5137 = vadd.f32 %v5033, %v5129
    %s5138 = scalar_lea.vmem %s14, 168
    %v5139 = vld [vmem:[%s5138] sm:$0xff]
    %v5140 = vld [vmem:[%s5138 + $0x8] sm:$0xff]
    %v5141 = vld [vmem:[%s5138 + $0x10] sm:$0xff]
    %v5142 = vld [vmem:[%s5138 + $0x18] sm:$0xff]
    %v5143 = vld [vmem:[%s5138 + $0x20] sm:$0xff]
    %v5144 = vld [vmem:[%s5138 + $0x28] sm:$0xff]
    %v5145 = vld [vmem:[%s5138 + $0x30] sm:$0xff]
    %5146 = vrot.lane.b32.xlu0 %v4862, 88
    %v5147 = vpop.permute.xlu0 %5146
    %5148 = vrot.lane.b32.xlu0 %v4864, 88
    %v5149 = vpop.permute.xlu0 %5148
    %5150 = vrot.lane.b32.xlu0 %v4867, 88
    %v5151 = vpop.permute.xlu0 %5150
    %5152 = vrot.lane.b32.xlu0 %v4869, 88
    %v5153 = vpop.permute.xlu0 %5152
    %v5158 = vsel %vm4881, %v5139, 0
    %v5161 = vsel %vm4881, %v5140, 0
    %v5164 = vsel %vm4881, %v5141, 0
    %v5167 = vsel %vm4881, %v5142, 0
    %v5170 = vsel %vm4881, %v5143, 0
    %v5173 = vsel %vm4881, %v5144, 0
    %v5176 = vsel %vm4881, %v5145, 0
    %v5178 = vsel %vm3802, %v5153, 0
    %5180 = vmatpush.msra.mxu0 0.0
    %5181 = vmatpush.msra.mxu0 0.0
    %5182 = vmatpush.msra.mxu0 0.0
    %5183 = vmatpush.msra.mxu0 0.0
    %5184 = vmatpush.msra.mxu0 0.0
    %5185 = vmatpush.msra.mxu0 0.0
    %5186 = vmatpush.msra.mxu0 0.0
    %5187 = vmatpush.msra.mxu0 0.0
    %5188 = vmatpush.msra.mxu0 0.0
    %5189 = vmatpush.msra.mxu0 0.0
    %5190 = vmatpush.msra.mxu0 0.0
    %5191 = vmatpush.msra.mxu0 0.0
    %5192 = vmatpush.msra.mxu0 %v5178
    %5193 = vmatpush.msra.mxu0 %v5151
    %5194 = vmatpush.msra.mxu0 %v5149
    %5195 = vmatpush.msra.mxu0 %v5147
    %5196 = vmatmul.f32.gmra.mxu0 %v5158
    %v5197 = vpop.f32.mrf.mxu0
    %v5198 = vadd.f32 0.0, %v5197
    %5199 = vmatmul.f32.gmra.mxu0 %v5161
    %v5200 = vpop.f32.mrf.mxu0
    %v5201 = vadd.f32 0.0, %v5200
    %5202 = vmatmul.f32.gmra.mxu0 %v5164
    %v5203 = vpop.f32.mrf.mxu0
    %v5204 = vadd.f32 0.0, %v5203
    %5205 = vmatmul.f32.gmra.mxu0 %v5167
    %v5206 = vpop.f32.mrf.mxu0
    %v5207 = vadd.f32 0.0, %v5206
    %5208 = vmatmul.f32.gmra.mxu0 %v5170
    %v5209 = vpop.f32.mrf.mxu0
    %v5210 = vadd.f32 0.0, %v5209
    %5211 = vmatmul.f32.gmra.mxu0 %v5173
    %v5212 = vpop.f32.mrf.mxu0
    %v5213 = vadd.f32 0.0, %v5212
    %5214 = vmatmul.f32.gmra.mxu0 %v5176
    %v5215 = vpop.f32.mrf.mxu0
    %v5216 = vadd.f32 0.0, %v5215
    %5217 = vdwg.mxu0
    %v5218 = vadd.f32 %v5131, %v5198
    %v5219 = vadd.f32 %v5132, %v5201
    %v5220 = vadd.f32 %v5133, %v5204
    %v5221 = vadd.f32 %v5134, %v5207
    %v5222 = vadd.f32 %v5135, %v5210
    %v5223 = vadd.f32 %v5136, %v5213
    %v5224 = vadd.f32 %v5137, %v5216
    %v5225 = vld [vmem:[%s1] sm:$0xff]
    %v5226 = vld [vmem:[%s1 + $0x8] sm:$0xff]
    %v5227 = vld [vmem:[%s1 + $0x10] sm:$0xff]
    %v5228 = vld [vmem:[%s1 + $0x18] sm:$0xff]
    %v5229 = vld [vmem:[%s1 + $0x20] sm:$0xff]
    %v5230 = vld [vmem:[%s1 + $0x28] sm:$0xff]
    %v5231 = vld [vmem:[%s1 + $0x30] sm:$0xff]
    %v5232 = vmax.f32 %v5218, 0.0
    %v5233 = vmax.f32 %v5219, 0.0
    %v5234 = vmax.f32 %v5220, 0.0
    %v5235 = vmax.f32 %v5221, 0.0
    %v5236 = vmax.f32 %v5222, 0.0
    %v5237 = vmax.f32 %v5223, 0.0
    %v5238 = vmax.f32 %v5224, 0.0
    %v5239 = vmul.f32 %v5218, %v5225
    %v5240 = vmul.f32 %v5219, %v5226
    %v5241 = vmul.f32 %v5220, %v5227
    %v5242 = vmul.f32 %v5221, %v5228
    %v5243 = vmul.f32 %v5222, %v5229
    %v5244 = vmul.f32 %v5223, %v5230
    %v5245 = vmul.f32 %v5224, %v5231
    %v5246 = vsub.f32 %v5232, %v5239
    %v5247 = vsub.f32 %v5233, %v5240
    %v5248 = vsub.f32 %v5234, %v5241
    %v5249 = vsub.f32 %v5235, %v5242
    %v5250 = vsub.f32 %v5236, %v5243
    %v5251 = vsub.f32 %v5237, %v5244
    %v5252 = vsub.f32 %v5238, %v5245
    %v5253 = vand.u32 2147483647, %v5218
    %v5254 = vand.u32 2147483647, %v5219
    %v5255 = vand.u32 2147483647, %v5220
    %v5256 = vand.u32 2147483647, %v5221
    %v5257 = vand.u32 2147483647, %v5222
    %v5258 = vand.u32 2147483647, %v5223
    %v5259 = vand.u32 2147483647, %v5224
    %v5260 = vsub.f32 0.0, %v5253
    %v5261 = vsub.f32 0.0, %v5254
    %v5262 = vsub.f32 0.0, %v5255
    %v5263 = vsub.f32 0.0, %v5256
    %v5264 = vsub.f32 0.0, %v5257
    %v5265 = vsub.f32 0.0, %v5258
    %v5266 = vsub.f32 0.0, %v5259
    %v5267 = vmul.f32 %v5260, 1.442695
    %v5268 = vpow.pop %v5267
    %v5269 = vmul.f32 %v5261, 1.442695
    %v5270 = vpow.pop %v5269
    %v5271 = vmul.f32 %v5262, 1.442695
    %v5272 = vpow.pop %v5271
    %v5273 = vmul.f32 %v5263, 1.442695
    %v5274 = vpow.pop %v5273
    %v5275 = vmul.f32 %v5264, 1.442695
    %v5276 = vpow.pop %v5275
    %v5277 = vmul.f32 %v5265, 1.442695
    %v5278 = vpow.pop %v5277
    %v5279 = vmul.f32 %v5266, 1.442695
    %v5280 = vpow.pop %v5279
    %v5281 = vadd.f32 %v5268, 1.0
    %v5282 = vadd.f32 %v5270, 1.0
    %v5283 = vadd.f32 %v5272, 1.0
    %v5284 = vadd.f32 %v5274, 1.0
    %v5285 = vadd.f32 %v5276, 1.0
    %v5286 = vadd.f32 %v5278, 1.0
    %v5287 = vadd.f32 %v5280, 1.0
    %v5288 = vlog2.pop %v5281
    %v5289 = vmul.f32 %v5288, 0.6931472
    %v5290 = vlog2.pop %v5282
    %v5291 = vmul.f32 %v5290, 0.6931472
    %v5292 = vlog2.pop %v5283
    %v5293 = vmul.f32 %v5292, 0.6931472
    %v5294 = vlog2.pop %v5284
    %v5295 = vmul.f32 %v5294, 0.6931472
    %v5296 = vlog2.pop %v5285
    %v5297 = vmul.f32 %v5296, 0.6931472
    %v5298 = vlog2.pop %v5286
    %v5299 = vmul.f32 %v5298, 0.6931472
    %v5300 = vlog2.pop %v5287
    %v5301 = vmul.f32 %v5300, 0.6931472
    %v5302 = vadd.f32 %v5246, %v5289
    %v5303 = vadd.f32 %v5247, %v5291
    %v5304 = vadd.f32 %v5248, %v5293
    %v5305 = vadd.f32 %v5249, %v5295
    %v5306 = vadd.f32 %v5250, %v5297
    %v5307 = vadd.f32 %v5251, %v5299
    %v5308 = vadd.f32 %v5252, %v5301
    %vm5309 = vcmask 457728
    %v5310 = vsel %vm5309, %v5302, 0.0
    %5311 = vadd.xlane.f32.xlu0 %v5310
    %v5312 = vpop.xlane.xlu0 %5311
    %v5313 = vsel %vm5309, %v5303, 0.0
    %5314 = vadd.xlane.f32.xlu0 %v5313
    %v5315 = vpop.xlane.xlu0 %5314
    %v5316 = vsel %vm5309, %v5304, 0.0
    %5317 = vadd.xlane.f32.xlu0 %v5316
    %v5318 = vpop.xlane.xlu0 %5317
    %v5319 = vsel %vm5309, %v5305, 0.0
    %5320 = vadd.xlane.f32.xlu0 %v5319
    %v5321 = vpop.xlane.xlu0 %5320
    %v5322 = vsel %vm5309, %v5306, 0.0
    %5323 = vadd.xlane.f32.xlu0 %v5322
    %v5324 = vpop.xlane.xlu0 %5323
    %v5325 = vsel %vm5309, %v5307, 0.0
    %5326 = vadd.xlane.f32.xlu0 %v5325
    %v5327 = vpop.xlane.xlu0 %5326
    %v5328 = vsel %vm5309, %v5308, 0.0
    %5329 = vadd.xlane.f32.xlu0 %v5328
    %v5330 = vpop.xlane.xlu0 %5329
    %v5331 = vld [vmem:[%s17] sm:$0x3]
    %v5333 = vsel %vm5309, %v5331, 0
    %5335 = vmatpush.msra.mxu0 0.0
    %5336 = vmatpush.msra.mxu0 0.0
    %5337 = vmatpush.msra.mxu0 0.0
    %5338 = vmatpush.msra.mxu0 0.0
    %5339 = vmatpush.msra.mxu0 0.0
    %5340 = vmatpush.msra.mxu0 0.0
    %5341 = vmatpush.msra.mxu0 0.0
    %5342 = vmatpush.msra.mxu0 0.0
    %5343 = vmatpush.msra.mxu0 0.0
    %5344 = vmatpush.msra.mxu0 %v5330
    %5345 = vmatpush.msra.mxu0 %v5327
    %5346 = vmatpush.msra.mxu0 %v5324
    %5347 = vmatpush.msra.mxu0 %v5321
    %5348 = vmatpush.msra.mxu0 %v5318
    %5349 = vmatpush.msra.mxu0 %v5315
    %5350 = vmatpush.msra.mxu0 %v5312
    %5351 = vmatmul.f32.gmra.mxu0 %v5333
    %v5352 = vpop.f32.mrf.mxu0
    %v5353 = vadd.f32 0.0, %v5352
    %5354 = vdwg.mxu0
    %v5355 = vsub.f32 0.0, %v5353
    %vm5356 = vcmask 1024
    %5357 = vst.msk [vmem:[%s18] sm:$0x3] %vm5356, %v5355
    // Predicated region
    $region86: #{decoder_forward.1} parent=1 // pred_check
      _
    $region87: #{decoder_forward.1} parent=1 // pred_check_branch
      %5359 = sbr.rel (0) target = $region89
    $region88: #{decoder_forward.1} parent=1 // pred_region
      _
    $region89: #{decoder_forward.1} parent=1 // pred_fallthru
      _
    // Predicated region
    $region90: #{decoder_forward.1} parent=1 // pred_check
      _
    $region91: #{decoder_forward.1} parent=1 // pred_check_branch
      %5361 = sbr.rel (0) target = $region93
    $region92: #{decoder_forward.1} parent=1 // pred_region
      _
    $region93: #{decoder_forward.1} parent=1 // pred_fallthru
      _
    %5362 = vsyncpa [#allocation3], 1
    %5363 = vsyncpa [#allocation5], 1

</llo_original>
